<compile_context>
chip_gen: v7x
topology: tpu7x:2x2x1
jax: 0.10.0
libtpu: 0.0.40
codegen_flags: <defaults>
</compile_context>

<pallas_src>
import math

import jax
import jax.numpy as jnp
import numpy as np
from jax.experimental import pallas as pl
from jax.experimental.pallas import tpu as pltpu

HIDDEN = 400       # logical hidden width (matches nn.Linear(..., 400))
HIDDEN_PAD = 512   # zero-padded to 4*128: lane/MXU aligned on v5e/v6e/v7x


def _round_up(n, m):
    return ((n + m - 1) // m) * m


def _mine_kernel(x_ref, z_ref, zm_ref,
                 w1x_ref, w1z_ref, b1_ref,
                 w2_ref, b2_ref, w3_ref, b3_ref,
                 w4_ref, b4_ref,
                 osum_ref, om_ref, ol_ref,
                 sum_t_ref, m_ref, l_ref):
    step = pl.program_id(1)                 # inner (batch-reduction) axis

    @pl.when(step == 0)
    def _init():
        sum_t_ref[...] = jnp.zeros_like(sum_t_ref)
        m_ref[...] = jnp.full(m_ref.shape, -jnp.inf, dtype=jnp.float32)
        l_ref[...] = jnp.zeros_like(l_ref)

    tb = x_ref.shape[0]
    cdt = w2_ref.dtype                      # MXU compute dtype (bf16 fast path / f32)

    # ---- layer 1: shared x-part computed once, reused by both branches ------
    xa = jnp.dot(x_ref[...].astype(cdt), w1x_ref[...],
                 preferred_element_type=jnp.float32)

    def hidden(z_tile):
        h = jnp.maximum(
            xa + jnp.dot(z_tile.astype(cdt), w1z_ref[...],
                         preferred_element_type=jnp.float32) + b1_ref[...], 0.0)
        h = jnp.maximum(
            jnp.dot(h.astype(cdt), w2_ref[...],
                    preferred_element_type=jnp.float32) + b2_ref[...], 0.0)
        h = jnp.maximum(
            jnp.dot(h.astype(cdt), w3_ref[...],
                    preferred_element_type=jnp.float32) + b3_ref[...], 0.0)
        return h                            # (tb, HP) f32

    w4 = w4_ref[...]                        # (1, HP) f32
    b4 = b4_ref[...]                        # (1, 1)  f32

    # ---- joint branch: only sum(t) is needed -> reduce over rows BEFORE w4 --
    h_j = hidden(z_ref[...])
    col_sum = jnp.sum(h_j, axis=0, keepdims=True)            # (1, HP)
    sum_t_ref[...] += (jnp.sum(col_sum * w4, axis=-1, keepdims=True)
                       + float(tb) * b4)

    # ---- marginal branch: per-row scores for the online logsumexp -----------
    h_m = hidden(zm_ref[...])
    t_m = jnp.sum(h_m * w4, axis=-1, keepdims=True) + b4      # (tb, 1)

    tile_max = jnp.max(t_m, axis=(0, 1), keepdims=True)       # (1, 1)
    m_new = jnp.maximum(m_ref[...], tile_max)
    l_ref[...] = (l_ref[...] * jnp.exp(m_ref[...] - m_new)
                  + jnp.sum(jnp.exp(t_m - m_new), axis=(0, 1), keepdims=True))
    m_ref[...] = m_new

    @pl.when(step == pl.num_programs(1) - 1)
    def _finalize():
        osum_ref[...] = sum_t_ref[...].reshape(1, 1, 1)
        om_ref[...] = m_ref[...].reshape(1, 1, 1)
        ol_ref[...] = l_ref[...].reshape(1, 1, 1)


def _prepare_params(params, x_dim, z_dim, use_bf16):
    """Pad HIDDEN 400->512, split W1 into x/z parts, transpose W4 into a row."""
    w1, b1, w2, b2, w3, b3, w4, b4 = params
    hp = HIDDEN_PAD - w1.shape[1]
    xp = _round_up(x_dim, 8) - x_dim
    zp = _round_up(z_dim, 8) - z_dim

    w1p = jnp.pad(w1.astype(jnp.float32), ((0, 0), (0, hp)))
    w1x = jnp.pad(w1p[:x_dim], ((0, xp), (0, 0)))          # (x_dim_pad, 512)
    w1z = jnp.pad(w1p[x_dim:], ((0, zp), (0, 0)))          # (z_dim_pad, 512)
    b1p = jnp.pad(b1.astype(jnp.float32), ((0, 0), (0, hp)))
    w2p = jnp.pad(w2.astype(jnp.float32), ((0, hp), (0, hp)))
    b2p = jnp.pad(b2.astype(jnp.float32), ((0, 0), (0, hp)))
    w3p = jnp.pad(w3.astype(jnp.float32), ((0, hp), (0, hp)))
    b3p = jnp.pad(b3.astype(jnp.float32), ((0, 0), (0, hp)))
    w4row = jnp.pad(w4.astype(jnp.float32), ((0, hp), (0, 0))).T   # (1, 512)
    b4p = b4.astype(jnp.float32).reshape(1, 1)

    if use_bf16:
        # bf16 MXU operands everywhere (f32 accumulation in-kernel); halves
        # resident weight VMEM and weight DMA. w4/biases stay f32 (VPU path).
        w1x = w1x.astype(jnp.bfloat16)
        w1z = w1z.astype(jnp.bfloat16)
        w2p = w2p.astype(jnp.bfloat16)
        w3p = w3p.astype(jnp.bfloat16)
    return w1x, w1z, b1p, w2p, b2p, w3p, b3p, w4row, b4p


def mine_forward(x, z, z_marg, params, *, tile_b=None, use_bf16=True):
    """x: (B, x_dim), z / z_marg: (B, z_dim). Returns the scalar MINE loss."""
    B, x_dim = x.shape
    z_dim = z.shape[1]
    if tile_b is None:
        # Fits comfortably under a 32 MiB scoped VMEM budget on all generations
        # (bf16 weights + no staging scratch); can be raised on v5e/v6e.
        tile_b = min(B, 1024)
    assert B % tile_b == 0 and tile_b % 8 == 0, (B, tile_b)

    steps = B // tile_b
    ncores = 2 if steps % 2 == 0 else 1       # v7x: split batch across both TCs
    spc = steps // ncores                     # steps per core

    xp_dim = _round_up(x_dim, 8)
    zp_dim = _round_up(z_dim, 8)
    xf = jnp.pad(x.astype(jnp.float32), ((0, 0), (0, xp_dim - x_dim)))
    zf = jnp.pad(z.astype(jnp.float32), ((0, 0), (0, zp_dim - z_dim)))
    zmf = jnp.pad(z_marg.astype(jnp.float32), ((0, 0), (0, zp_dim - z_dim)))

    (w1x, w1z, b1p, w2p, b2p, w3p, b3p, w4row, b4p) = _prepare_params(
        params, x_dim, z_dim, use_bf16)

    HP = HIDDEN_PAD

    def batch_map(c, i):                      # per-core contiguous batch slices
        return (c * spc + i, 0)

    def const_map(c, i):                      # weights/biases stay VMEM-resident
        return (0, 0)

    in_specs = [
        pl.BlockSpec((tile_b, xp_dim), batch_map),   # x
        pl.BlockSpec((tile_b, zp_dim), batch_map),   # z
        pl.BlockSpec((tile_b, zp_dim), batch_map),   # z_marg
        pl.BlockSpec((xp_dim, HP), const_map),       # W1x
        pl.BlockSpec((zp_dim, HP), const_map),       # W1z
        pl.BlockSpec((1, HP), const_map),            # b1
        pl.BlockSpec((HP, HP), const_map),           # W2
        pl.BlockSpec((1, HP), const_map),            # b2
        pl.BlockSpec((HP, HP), const_map),           # W3
        pl.BlockSpec((1, HP), const_map),            # b3
        pl.BlockSpec((1, HP), const_map),            # W4 (row)
        pl.BlockSpec((1, 1), const_map),             # b4
    ]
    part_spec = pl.BlockSpec((1, 1, 1), lambda c, i: (c, 0, 0))
    part_shape = jax.ShapeDtypeStruct((ncores, 1, 1), jnp.float32)

    scratch = [
        pltpu.VMEM((1, 1), jnp.float32),   # per-core running sum of joint scores
        pltpu.VMEM((1, 1), jnp.float32),   # per-core running max of marginal scores
        pltpu.VMEM((1, 1), jnp.float32),   # per-core running sum(exp(. - max))
    ]

    osum, om, ol = pl.pallas_call(
        _mine_kernel,
        out_shape=(part_shape, part_shape, part_shape),
        grid_spec=pltpu.PrefetchScalarGridSpec(
            num_scalar_prefetch=0,
            grid=(ncores, spc),
            in_specs=in_specs,
            out_specs=(part_spec, part_spec, part_spec),
            scratch_shapes=scratch,
        ),
        compiler_params=pltpu.CompilerParams(
            dimension_semantics=("parallel", "arbitrary"),
            vmem_limit_bytes=32 * 1024 * 1024,
        ),
    )(xf, zf, zmf, w1x, w1z, b1p, w2p, b2p, w3p, b3p, w4row, b4p)

    # Exact combination of per-core partials: sum for t, merged stabilized
    # logsumexp for the marginal term (identical to log(mean(exp(t_marg)))).
    inv_b = 1.0 / float(B)
    t_mean = jnp.sum(osum) * inv_b
    m_p = om.reshape(-1)
    l_p = ol.reshape(-1)
    m = jnp.max(m_p)
    l = jnp.sum(l_p * jnp.exp(m_p - m))
    second = m + jnp.log(l * inv_b)
    return second - t_mean


def init_t_params(key, x_dim, z_dim):
    """Deterministic init mimicking PyTorch Linear default (U[-1/sqrt(fan_in), +]).

    Weights are stored transposed vs. PyTorch, i.e. (in, out); biases as (1, out).
    """
    dims = [(x_dim + z_dim, HIDDEN), (HIDDEN, HIDDEN), (HIDDEN, HIDDEN), (HIDDEN, 1)]
    params = []
    for fan_in, fan_out in dims:
        key, kw, kb = jax.random.split(key, 3)
        bound = 1.0 / math.sqrt(fan_in)
        w = jax.random.uniform(kw, (fan_in, fan_out), jnp.float32, -bound, bound)
        b = jax.random.uniform(kb, (1, fan_out), jnp.float32, -bound, bound)
        params += [w, b]
    return tuple(params)


def _reference_forward(x, z, z_marg, params):
    """Pure-JAX f32 reference matching the PyTorch module semantics."""
    w1, b1, w2, b2, w3, b3, w4, b4 = params

    def mlp(h):
        h = jnp.maximum(h @ w1 + b1, 0.0)
        h = jnp.maximum(h @ w2 + b2, 0.0)
        h = jnp.maximum(h @ w3 + b3, 0.0)
        return h @ w4 + b4

    xz = jnp.concatenate([x, z], axis=1)
    xzm = jnp.concatenate([x, z_marg], axis=1)
    t = jnp.mean(mlp(xz))
    second = jnp.log(jnp.mean(jnp.exp(mlp(xzm))))
    return -t + second


if __name__ == "__main__":
    B, X_DIM, Z_DIM = 16, 4, 4   # 2 batch tiles of 8 -> exercises grid + partial combine

    key = jax.random.PRNGKey(0)
    k_x, k_z, k_perm, k_params = jax.random.split(key, 4)

    x = jax.random.normal(k_x, (B, X_DIM), jnp.float32)
    z = jax.random.normal(k_z, (B, Z_DIM), jnp.float32)
    perm = jax.random.permutation(k_perm, B)   # z_marg = z[randperm(B)]
    z_marg = z[perm]

    params = init_t_params(k_params, X_DIM, Z_DIM)

    ref = jax.block_until_ready(_reference_forward(x, z, z_marg, params))

    # f32 MXU path (exact semantics), 2 tiles split across the parallel axis.
    loss_f32 = jax.block_until_ready(
        mine_forward(x, z, z_marg, params, tile_b=8, use_bf16=False))
    assert np.allclose(np.asarray(loss_f32), np.asarray(ref),
                       atol=1e-4, rtol=1e-4), (loss_f32, ref)

    # Default bf16-MXU fast path (layers 1-3 bf16, f32 accumulation/elementwise).
    loss_bf16 = jax.block_until_ready(
        mine_forward(x, z, z_marg, params, tile_b=8))
    assert np.allclose(np.asarray(loss_bf16), np.asarray(ref),
                       atol=2e-2, rtol=2e-2), (loss_bf16, ref)

    # Single-core-slice path (odd step count -> ncores=1).
    loss_one = jax.block_until_ready(
        mine_forward(x, z, z_marg, params, tile_b=16))
    assert np.allclose(np.asarray(loss_one), np.asarray(ref),
                       atol=2e-2, rtol=2e-2), (loss_one, ref)

    print("KERNEL_OK")
</pallas_src>

<mosaic_0001>
module attributes {stable_mosaic.version = 11 : i64} {
  func.func @_mine_kernel(%arg0: i32, %arg1: i32, %arg2: memref<8x8xf32, #tpu.memory_space<vmem>>, %arg3: memref<8x8xf32, #tpu.memory_space<vmem>>, %arg4: memref<8x8xf32, #tpu.memory_space<vmem>>, %arg5: memref<8x512xf32, #tpu.memory_space<vmem>>, %arg6: memref<8x512xf32, #tpu.memory_space<vmem>>, %arg7: memref<1x512xf32, #tpu.memory_space<vmem>>, %arg8: memref<512x512xf32, #tpu.memory_space<vmem>>, %arg9: memref<1x512xf32, #tpu.memory_space<vmem>>, %arg10: memref<512x512xf32, #tpu.memory_space<vmem>>, %arg11: memref<1x512xf32, #tpu.memory_space<vmem>>, %arg12: memref<1x512xf32, #tpu.memory_space<vmem>>, %arg13: memref<1x1xf32, #tpu.memory_space<vmem>>, %arg14: memref<1x1x1xf32, #tpu.memory_space<vmem>>, %arg15: memref<1x1x1xf32, #tpu.memory_space<vmem>>, %arg16: memref<1x1x1xf32, #tpu.memory_space<vmem>>, %arg17: memref<1x1xf32, #tpu.memory_space<vmem>>, %arg18: memref<1x1xf32, #tpu.memory_space<vmem>>, %arg19: memref<1x1xf32, #tpu.memory_space<vmem>>) attributes {dimension_semantics = [#tpu.dimension_semantics<parallel>, #tpu.dimension_semantics<arbitrary>], iteration_bounds = array<i64: 2, 1>, scalar_prefetch = 0 : i64, scratch_operands = 3 : i64, tpu.core_type = #tpu.core_type<tc>, window_params = [{transform_indices = @transform_0, window_bounds = array<i64: 8, 8>}, {transform_indices = @transform_1, window_bounds = array<i64: 8, 8>}, {transform_indices = @transform_2, window_bounds = array<i64: 8, 8>}, {pipeline_mode = #tpu.pipeline_mode<synchronous>, transform_indices = @transform_3, window_bounds = array<i64: 8, 512>}, {pipeline_mode = #tpu.pipeline_mode<synchronous>, transform_indices = @transform_4, window_bounds = array<i64: 8, 512>}, {pipeline_mode = #tpu.pipeline_mode<synchronous>, transform_indices = @transform_5, window_bounds = array<i64: 1, 512>}, {pipeline_mode = #tpu.pipeline_mode<synchronous>, transform_indices = @transform_6, window_bounds = array<i64: 512, 512>}, {pipeline_mode = #tpu.pipeline_mode<synchronous>, transform_indices = @transform_7, window_bounds = array<i64: 1, 512>}, {pipeline_mode = #tpu.pipeline_mode<synchronous>, transform_indices = @transform_8, window_bounds = array<i64: 512, 512>}, {pipeline_mode = #tpu.pipeline_mode<synchronous>, transform_indices = @transform_9, window_bounds = array<i64: 1, 512>}, {pipeline_mode = #tpu.pipeline_mode<synchronous>, transform_indices = @transform_10, window_bounds = array<i64: 1, 512>}, {pipeline_mode = #tpu.pipeline_mode<synchronous>, transform_indices = @transform_11, window_bounds = array<i64: 1, 1>}, {transform_indices = @transform_12, window_bounds = array<i64: 1, 1, 1>}, {transform_indices = @transform_13, window_bounds = array<i64: 1, 1, 1>}, {transform_indices = @transform_14, window_bounds = array<i64: 1, 1, 1>}]} {
    %c0_i32 = arith.constant 0 : i32
    %0 = arith.cmpi eq, %arg1, %c0_i32 : i32
    %1 = arith.extui %0 : i1 to i32
    %c0_i32_0 = arith.constant 0 : i32
    %2 = arith.cmpi ne, %1, %c0_i32_0 : i32
    scf.if %2 {
      %cst_70 = arith.constant 0.000000e+00 : f32
      %97 = vector.broadcast %cst_70 : f32 to vector<1x1xf32>
      %c0_71 = arith.constant 0 : index
      %c0_72 = arith.constant 0 : index
      %98 = vector.load %arg17[%c0_71, %c0_72] : memref<1x1xf32, #tpu.memory_space<vmem>>, vector<1x1xf32>
      tpu.vector_store %arg17[%c0_71, %c0_72], %97 {strides = array<i32>} : memref<1x1xf32, #tpu.memory_space<vmem>>, vector<1x1xf32>,
      %cst_73 = arith.constant 0xFF800000 : f32
      %99 = vector.broadcast %cst_73 : f32 to vector<1x1xf32>
      %c0_74 = arith.constant 0 : index
      %c0_75 = arith.constant 0 : index
      %100 = vector.load %arg18[%c0_74, %c0_75] : memref<1x1xf32, #tpu.memory_space<vmem>>, vector<1x1xf32>
      tpu.vector_store %arg18[%c0_74, %c0_75], %99 {strides = array<i32>} : memref<1x1xf32, #tpu.memory_space<vmem>>, vector<1x1xf32>,
      %cst_76 = arith.constant 0.000000e+00 : f32
      %101 = vector.broadcast %cst_76 : f32 to vector<1x1xf32>
      %c0_77 = arith.constant 0 : index
      %c0_78 = arith.constant 0 : index
      %102 = vector.load %arg19[%c0_77, %c0_78] : memref<1x1xf32, #tpu.memory_space<vmem>>, vector<1x1xf32>
      tpu.vector_store %arg19[%c0_77, %c0_78], %101 {strides = array<i32>} : memref<1x1xf32, #tpu.memory_space<vmem>>, vector<1x1xf32>,
    } else {
    }
    %c0 = arith.constant 0 : index
    %c0_1 = arith.constant 0 : index
    %3 = vector.load %arg2[%c0, %c0_1] : memref<8x8xf32, #tpu.memory_space<vmem>>, vector<8x8xf32>
    %c0_2 = arith.constant 0 : index
    %c0_3 = arith.constant 0 : index
    %4 = vector.load %arg5[%c0_2, %c0_3] : memref<8x512xf32, #tpu.memory_space<vmem>>, vector<8x512xf32>
    %cst = arith.constant dense<0.000000e+00> : vector<8x512xf32>
    %5 = tpu.matmul %3, %4, %cst {dimension_numbers = #tpu.dot_dimension_numbers<[1], [0], [0], [1], [0, 0, 1, 1], [], []>} : vector<8x8xf32>, vector<8x512xf32>, vector<8x512xf32> -> vector<8x512xf32>
    %c0_4 = arith.constant 0 : index
    %c0_5 = arith.constant 0 : index
    %6 = vector.load %arg12[%c0_4, %c0_5] : memref<1x512xf32, #tpu.memory_space<vmem>>, vector<1x512xf32>
    %c0_6 = arith.constant 0 : index
    %c0_7 = arith.constant 0 : index
    %7 = vector.load %arg13[%c0_6, %c0_7] : memref<1x1xf32, #tpu.memory_space<vmem>>, vector<1x1xf32>
    %c0_8 = arith.constant 0 : index
    %c0_9 = arith.constant 0 : index
    %8 = vector.load %arg3[%c0_8, %c0_9] : memref<8x8xf32, #tpu.memory_space<vmem>>, vector<8x8xf32>
    %c0_10 = arith.constant 0 : index
    %c0_11 = arith.constant 0 : index
    %9 = vector.load %arg6[%c0_10, %c0_11] : memref<8x512xf32, #tpu.memory_space<vmem>>, vector<8x512xf32>
    %cst_12 = arith.constant dense<0.000000e+00> : vector<8x512xf32>
    %10 = tpu.matmul %8, %9, %cst_12 {dimension_numbers = #tpu.dot_dimension_numbers<[1], [0], [0], [1], [0, 0, 1, 1], [], []>} : vector<8x8xf32>, vector<8x512xf32>, vector<8x512xf32> -> vector<8x512xf32>
    %11 = arith.addf %5, %10 : vector<8x512xf32>
    %c0_13 = arith.constant 0 : index
    %c0_14 = arith.constant 0 : index
    %12 = vector.load %arg7[%c0_13, %c0_14] : memref<1x512xf32, #tpu.memory_space<vmem>>, vector<1x512xf32>
    %13 = vector.broadcast %12 : vector<1x512xf32> to vector<8x512xf32>
    %14 = arith.addf %11, %13 : vector<8x512xf32>
    %cst_15 = arith.constant 0.000000e+00 : f32
    %15 = vector.broadcast %cst_15 : f32 to vector<8x512xf32>
    %16 = arith.maximumf %14, %15 : vector<8x512xf32>
    %c0_16 = arith.constant 0 : index
    %c0_17 = arith.constant 0 : index
    %17 = vector.load %arg8[%c0_16, %c0_17] : memref<512x512xf32, #tpu.memory_space<vmem>>, vector<512x512xf32>
    %cst_18 = arith.constant dense<0.000000e+00> : vector<8x512xf32>
    %18 = tpu.matmul %16, %17, %cst_18 {dimension_numbers = #tpu.dot_dimension_numbers<[1], [0], [0], [1], [0, 0, 1, 1], [], []>} : vector<8x512xf32>, vector<512x512xf32>, vector<8x512xf32> -> vector<8x512xf32>
    %c0_19 = arith.constant 0 : index
    %c0_20 = arith.constant 0 : index
    %19 = vector.load %arg9[%c0_19, %c0_20] : memref<1x512xf32, #tpu.memory_space<vmem>>, vector<1x512xf32>
    %20 = vector.broadcast %19 : vector<1x512xf32> to vector<8x512xf32>
    %21 = arith.addf %18, %20 : vector<8x512xf32>
    %cst_21 = arith.constant 0.000000e+00 : f32
    %22 = vector.broadcast %cst_21 : f32 to vector<8x512xf32>
    %23 = arith.maximumf %21, %22 : vector<8x512xf32>
    %c0_22 = arith.constant 0 : index
    %c0_23 = arith.constant 0 : index
    %24 = vector.load %arg10[%c0_22, %c0_23] : memref<512x512xf32, #tpu.memory_space<vmem>>, vector<512x512xf32>
    %cst_24 = arith.constant dense<0.000000e+00> : vector<8x512xf32>
    %25 = tpu.matmul %23, %24, %cst_24 {dimension_numbers = #tpu.dot_dimension_numbers<[1], [0], [0], [1], [0, 0, 1, 1], [], []>} : vector<8x512xf32>, vector<512x512xf32>, vector<8x512xf32> -> vector<8x512xf32>
    %c0_25 = arith.constant 0 : index
    %c0_26 = arith.constant 0 : index
    %26 = vector.load %arg11[%c0_25, %c0_26] : memref<1x512xf32, #tpu.memory_space<vmem>>, vector<1x512xf32>
    %27 = vector.broadcast %26 : vector<1x512xf32> to vector<8x512xf32>
    %28 = arith.addf %25, %27 : vector<8x512xf32>
    %cst_27 = arith.constant 0.000000e+00 : f32
    %29 = vector.broadcast %cst_27 : f32 to vector<8x512xf32>
    %30 = arith.maximumf %28, %29 : vector<8x512xf32>
    %cst_28 = arith.constant dense<0.000000e+00> : vector<512xf32>
    %31 = vector.multi_reduction <add>, %30, %cst_28 [0] : vector<8x512xf32> to vector<512xf32>
    %32 = vector.shape_cast %31 : vector<512xf32> to vector<1x512xf32>
    %c0_29 = arith.constant 0 : index
    %c0_30 = arith.constant 0 : index
    %33 = vector.load %arg17[%c0_29, %c0_30] : memref<1x1xf32, #tpu.memory_space<vmem>>, vector<1x1xf32>
    %34 = arith.mulf %32, %6 : vector<1x512xf32>
    %cst_31 = arith.constant dense<0.000000e+00> : vector<1xf32>
    %35 = vector.multi_reduction <add>, %34, %cst_31 [1] : vector<1x512xf32> to vector<1xf32>
    %36 = vector.shape_cast %35 : vector<1xf32> to vector<1x1xf32>
    %cst_32 = arith.constant 8.000000e+00 : f32
    %37 = vector.broadcast %cst_32 : f32 to vector<1x1xf32>
    %38 = arith.mulf %37, %7 : vector<1x1xf32>
    %39 = arith.addf %36, %38 : vector<1x1xf32>
    %40 = arith.addf %33, %39 : vector<1x1xf32>
    %c0_33 = arith.constant 0 : index
    %c0_34 = arith.constant 0 : index
    %41 = vector.load %arg17[%c0_33, %c0_34] : memref<1x1xf32, #tpu.memory_space<vmem>>, vector<1x1xf32>
    tpu.vector_store %arg17[%c0_33, %c0_34], %40 {strides = array<i32>} : memref<1x1xf32, #tpu.memory_space<vmem>>, vector<1x1xf32>,
    %c0_35 = arith.constant 0 : index
    %c0_36 = arith.constant 0 : index
    %42 = vector.load %arg4[%c0_35, %c0_36] : memref<8x8xf32, #tpu.memory_space<vmem>>, vector<8x8xf32>
    %c0_37 = arith.constant 0 : index
    %c0_38 = arith.constant 0 : index
    %43 = vector.load %arg6[%c0_37, %c0_38] : memref<8x512xf32, #tpu.memory_space<vmem>>, vector<8x512xf32>
    %cst_39 = arith.constant dense<0.000000e+00> : vector<8x512xf32>
    %44 = tpu.matmul %42, %43, %cst_39 {dimension_numbers = #tpu.dot_dimension_numbers<[1], [0], [0], [1], [0, 0, 1, 1], [], []>} : vector<8x8xf32>, vector<8x512xf32>, vector<8x512xf32> -> vector<8x512xf32>
    %45 = arith.addf %5, %44 : vector<8x512xf32>
    %c0_40 = arith.constant 0 : index
    %c0_41 = arith.constant 0 : index
    %46 = vector.load %arg7[%c0_40, %c0_41] : memref<1x512xf32, #tpu.memory_space<vmem>>, vector<1x512xf32>
    %47 = vector.broadcast %46 : vector<1x512xf32> to vector<8x512xf32>
    %48 = arith.addf %45, %47 : vector<8x512xf32>
    %cst_42 = arith.constant 0.000000e+00 : f32
    %49 = vector.broadcast %cst_42 : f32 to vector<8x512xf32>
    %50 = arith.maximumf %48, %49 : vector<8x512xf32>
    %c0_43 = arith.constant 0 : index
    %c0_44 = arith.constant 0 : index
    %51 = vector.load %arg8[%c0_43, %c0_44] : memref<512x512xf32, #tpu.memory_space<vmem>>, vector<512x512xf32>
    %cst_45 = arith.constant dense<0.000000e+00> : vector<8x512xf32>
    %52 = tpu.matmul %50, %51, %cst_45 {dimension_numbers = #tpu.dot_dimension_numbers<[1], [0], [0], [1], [0, 0, 1, 1], [], []>} : vector<8x512xf32>, vector<512x512xf32>, vector<8x512xf32> -> vector<8x512xf32>
    %c0_46 = arith.constant 0 : index
    %c0_47 = arith.constant 0 : index
    %53 = vector.load %arg9[%c0_46, %c0_47] : memref<1x512xf32, #tpu.memory_space<vmem>>, vector<1x512xf32>
    %54 = vector.broadcast %53 : vector<1x512xf32> to vector<8x512xf32>
    %55 = arith.addf %52, %54 : vector<8x512xf32>
    %cst_48 = arith.constant 0.000000e+00 : f32
    %56 = vector.broadcast %cst_48 : f32 to vector<8x512xf32>
    %57 = arith.maximumf %55, %56 : vector<8x512xf32>
    %c0_49 = arith.constant 0 : index
    %c0_50 = arith.constant 0 : index
    %58 = vector.load %arg10[%c0_49, %c0_50] : memref<512x512xf32, #tpu.memory_space<vmem>>, vector<512x512xf32>
    %cst_51 = arith.constant dense<0.000000e+00> : vector<8x512xf32>
    %59 = tpu.matmul %57, %58, %cst_51 {dimension_numbers = #tpu.dot_dimension_numbers<[1], [0], [0], [1], [0, 0, 1, 1], [], []>} : vector<8x512xf32>, vector<512x512xf32>, vector<8x512xf32> -> vector<8x512xf32>
    %c0_52 = arith.constant 0 : index
    %c0_53 = arith.constant 0 : index
    %60 = vector.load %arg11[%c0_52, %c0_53] : memref<1x512xf32, #tpu.memory_space<vmem>>, vector<1x512xf32>
    %61 = vector.broadcast %60 : vector<1x512xf32> to vector<8x512xf32>
    %62 = arith.addf %59, %61 : vector<8x512xf32>
    %cst_54 = arith.constant 0.000000e+00 : f32
    %63 = vector.broadcast %cst_54 : f32 to vector<8x512xf32>
    %64 = arith.maximumf %62, %63 : vector<8x512xf32>
    %65 = vector.broadcast %6 : vector<1x512xf32> to vector<8x512xf32>
    %66 = arith.mulf %64, %65 : vector<8x512xf32>
    %cst_55 = arith.constant dense<0.000000e+00> : vector<8xf32>
    %67 = vector.multi_reduction <add>, %66, %cst_55 [1] : vector<8x512xf32> to vector<8xf32>
    %68 = vector.shape_cast %67 : vector<8xf32> to vector<8x1xf32>
    %69 = vector.broadcast %7 : vector<1x1xf32> to vector<8x1xf32>
    %70 = arith.addf %68, %69 : vector<8x1xf32>
    %71 = vector.shape_cast %70 : vector<8x1xf32> to vector<1x8x1xf32>
    %cst_56 = arith.constant dense<0xFF800000> : vector<1xf32>
    %72 = vector.multi_reduction <maximumf>, %71, %cst_56 [1, 2] : vector<1x8x1xf32> to vector<1xf32>
    %73 = vector.shape_cast %72 : vector<1xf32> to vector<1x1x1xf32>
    %74 = vector.extract %73[0, 0, 0] : f32 from vector<1x1x1xf32>
    %75 = vector.broadcast %74 : f32 to vector<1x1xf32>
    %c0_57 = arith.constant 0 : index
    %c0_58 = arith.constant 0 : index
    %76 = vector.load %arg18[%c0_57, %c0_58] : memref<1x1xf32, #tpu.memory_space<vmem>>, vector<1x1xf32>
    %77 = arith.maximumf %76, %75 : vector<1x1xf32>
    %c0_59 = arith.constant 0 : index
    %c0_60 = arith.constant 0 : index
    %78 = vector.load %arg19[%c0_59, %c0_60] : memref<1x1xf32, #tpu.memory_space<vmem>>, vector<1x1xf32>
    %c0_61 = arith.constant 0 : index
    %c0_62 = arith.constant 0 : index
    %79 = vector.load %arg18[%c0_61, %c0_62] : memref<1x1xf32, #tpu.memory_space<vmem>>, vector<1x1xf32>
    %80 = arith.subf %79, %77 : vector<1x1xf32>
    %81 = math.exp %80 : vector<1x1xf32>
    %82 = arith.mulf %78, %81 : vector<1x1xf32>
    %83 = vector.broadcast %77 : vector<1x1xf32> to vector<8x1xf32>
    %84 = arith.subf %70, %83 : vector<8x1xf32>
    %85 = math.exp %84 : vector<8x1xf32>
    %86 = vector.shape_cast %85 : vector<8x1xf32> to vector<1x8x1xf32>
    %cst_63 = arith.constant dense<0.000000e+00> : vector<1xf32>
    %87 = vector.multi_reduction <add>, %86, %cst_63 [1, 2] : vector<1x8x1xf32> to vector<1xf32>
    %88 = vector.shape_cast %87 : vector<1xf32> to vector<1x1x1xf32>
    %89 = vector.extract %88[0, 0, 0] : f32 from vector<1x1x1xf32>
    %90 = vector.broadcast %89 : f32 to vector<1x1xf32>
    %91 = arith.addf %82, %90 : vector<1x1xf32>
    %c0_64 = arith.constant 0 : index
    %c0_65 = arith.constant 0 : index
    %92 = vector.load %arg19[%c0_64, %c0_65] : memref<1x1xf32, #tpu.memory_space<vmem>>, vector<1x1xf32>
    tpu.vector_store %arg19[%c0_64, %c0_65], %91 {strides = array<i32>} : memref<1x1xf32, #tpu.memory_space<vmem>>, vector<1x1xf32>,
    %c0_66 = arith.constant 0 : index
    %c0_67 = arith.constant 0 : index
    %93 = vector.load %arg18[%c0_66, %c0_67] : memref<1x1xf32, #tpu.memory_space<vmem>>, vector<1x1xf32>
    tpu.vector_store %arg18[%c0_66, %c0_67], %77 {strides = array<i32>} : memref<1x1xf32, #tpu.memory_space<vmem>>, vector<1x1xf32>,
    %c0_i32_68 = arith.constant 0 : i32
    %94 = arith.cmpi eq, %arg1, %c0_i32_68 : i32
    %95 = arith.extui %94 : i1 to i32
    %c0_i32_69 = arith.constant 0 : i32
    %96 = arith.cmpi ne, %95, %c0_i32_69 : i32
    scf.if %96 {
      %c0_70 = arith.constant 0 : index
      %c0_71 = arith.constant 0 : index
      %97 = vector.load %arg17[%c0_70, %c0_71] : memref<1x1xf32, #tpu.memory_space<vmem>>, vector<1x1xf32>
      %98 = vector.shape_cast %97 : vector<1x1xf32> to vector<1x1x1xf32>
      %c0_72 = arith.constant 0 : index
      %c0_73 = arith.constant 0 : index
      %c0_74 = arith.constant 0 : index
      %99 = vector.load %arg14[%c0_72, %c0_73, %c0_74] : memref<1x1x1xf32, #tpu.memory_space<vmem>>, vector<1x1x1xf32>
      tpu.vector_store %arg14[%c0_72, %c0_73, %c0_74], %98 {strides = array<i32>} : memref<1x1x1xf32, #tpu.memory_space<vmem>>, vector<1x1x1xf32>,
      %c0_75 = arith.constant 0 : index
      %c0_76 = arith.constant 0 : index
      %100 = vector.load %arg18[%c0_75, %c0_76] : memref<1x1xf32, #tpu.memory_space<vmem>>, vector<1x1xf32>
      %101 = vector.shape_cast %100 : vector<1x1xf32> to vector<1x1x1xf32>
      %c0_77 = arith.constant 0 : index
      %c0_78 = arith.constant 0 : index
      %c0_79 = arith.constant 0 : index
      %102 = vector.load %arg15[%c0_77, %c0_78, %c0_79] : memref<1x1x1xf32, #tpu.memory_space<vmem>>, vector<1x1x1xf32>
      tpu.vector_store %arg15[%c0_77, %c0_78, %c0_79], %101 {strides = array<i32>} : memref<1x1x1xf32, #tpu.memory_space<vmem>>, vector<1x1x1xf32>,
      %c0_80 = arith.constant 0 : index
      %c0_81 = arith.constant 0 : index
      %103 = vector.load %arg19[%c0_80, %c0_81] : memref<1x1xf32, #tpu.memory_space<vmem>>, vector<1x1xf32>
      %104 = vector.shape_cast %103 : vector<1x1xf32> to vector<1x1x1xf32>
      %c0_82 = arith.constant 0 : index
      %c0_83 = arith.constant 0 : index
      %c0_84 = arith.constant 0 : index
      %105 = vector.load %arg16[%c0_82, %c0_83, %c0_84] : memref<1x1x1xf32, #tpu.memory_space<vmem>>, vector<1x1x1xf32>
      tpu.vector_store %arg16[%c0_82, %c0_83, %c0_84], %104 {strides = array<i32>} : memref<1x1x1xf32, #tpu.memory_space<vmem>>, vector<1x1x1xf32>,
    } else {
    }
    return
  }
  func.func @transform_0(%arg0: i32, %arg1: i32) -> (i32, i32) {
    %c1_i32 = arith.constant 1 : i32
    %0 = arith.muli %arg0, %c1_i32 : i32
    %1 = arith.addi %0, %arg1 : i32
    %c0_i32 = arith.constant 0 : i32
    %c0_i32_0 = arith.constant 0 : i32
    return %1, %c0_i32 : i32, i32
  }
  func.func @transform_1(%arg0: i32, %arg1: i32) -> (i32, i32) {
    %c1_i32 = arith.constant 1 : i32
    %0 = arith.muli %arg0, %c1_i32 : i32
    %1 = arith.addi %0, %arg1 : i32
    %c0_i32 = arith.constant 0 : i32
    %c0_i32_0 = arith.constant 0 : i32
    return %1, %c0_i32 : i32, i32
  }
  func.func @transform_2(%arg0: i32, %arg1: i32) -> (i32, i32) {
    %c1_i32 = arith.constant 1 : i32
    %0 = arith.muli %arg0, %c1_i32 : i32
    %1 = arith.addi %0, %arg1 : i32
    %c0_i32 = arith.constant 0 : i32
    %c0_i32_0 = arith.constant 0 : i32
    return %1, %c0_i32 : i32, i32
  }
  func.func @transform_3(%arg0: i32, %arg1: i32) -> (i32, i32) {
    %c0_i32 = arith.constant 0 : i32
    %c0_i32_0 = arith.constant 0 : i32
    %c0_i32_1 = arith.constant 0 : i32
    return %c0_i32, %c0_i32_0 : i32, i32
  }
  func.func @transform_4(%arg0: i32, %arg1: i32) -> (i32, i32) {
    %c0_i32 = arith.constant 0 : i32
    %c0_i32_0 = arith.constant 0 : i32
    %c0_i32_1 = arith.constant 0 : i32
    return %c0_i32, %c0_i32_0 : i32, i32
  }
  func.func @transform_5(%arg0: i32, %arg1: i32) -> (i32, i32) {
    %c0_i32 = arith.constant 0 : i32
    %c0_i32_0 = arith.constant 0 : i32
    %c0_i32_1 = arith.constant 0 : i32
    return %c0_i32, %c0_i32_0 : i32, i32
  }
  func.func @transform_6(%arg0: i32, %arg1: i32) -> (i32, i32) {
    %c0_i32 = arith.constant 0 : i32
    %c0_i32_0 = arith.constant 0 : i32
    %c0_i32_1 = arith.constant 0 : i32
    return %c0_i32, %c0_i32_0 : i32, i32
  }
  func.func @transform_7(%arg0: i32, %arg1: i32) -> (i32, i32) {
    %c0_i32 = arith.constant 0 : i32
    %c0_i32_0 = arith.constant 0 : i32
    %c0_i32_1 = arith.constant 0 : i32
    return %c0_i32, %c0_i32_0 : i32, i32
  }
  func.func @transform_8(%arg0: i32, %arg1: i32) -> (i32, i32) {
    %c0_i32 = arith.constant 0 : i32
    %c0_i32_0 = arith.constant 0 : i32
    %c0_i32_1 = arith.constant 0 : i32
    return %c0_i32, %c0_i32_0 : i32, i32
  }
  func.func @transform_9(%arg0: i32, %arg1: i32) -> (i32, i32) {
    %c0_i32 = arith.constant 0 : i32
    %c0_i32_0 = arith.constant 0 : i32
    %c0_i32_1 = arith.constant 0 : i32
    return %c0_i32, %c0_i32_0 : i32, i32
  }
  func.func @transform_10(%arg0: i32, %arg1: i32) -> (i32, i32) {
    %c0_i32 = arith.constant 0 : i32
    %c0_i32_0 = arith.constant 0 : i32
    %c0_i32_1 = arith.constant 0 : i32
    return %c0_i32, %c0_i32_0 : i32, i32
  }
  func.func @transform_11(%arg0: i32, %arg1: i32) -> (i32, i32) {
    %c0_i32 = arith.constant 0 : i32
    %c0_i32_0 = arith.constant 0 : i32
    %c0_i32_1 = arith.constant 0 : i32
    return %c0_i32, %c0_i32_0 : i32, i32
  }
  func.func @transform_12(%arg0: i32, %arg1: i32) -> (i32, i32, i32) {
    %c0_i32 = arith.constant 0 : i32
    %c0_i32_0 = arith.constant 0 : i32
    %c0_i32_1 = arith.constant 0 : i32
    return %arg0, %c0_i32, %c0_i32_0 : i32, i32, i32
  }
  func.func @transform_13(%arg0: i32, %arg1: i32) -> (i32, i32, i32) {
    %c0_i32 = arith.constant 0 : i32
    %c0_i32_0 = arith.constant 0 : i32
    %c0_i32_1 = arith.constant 0 : i32
    return %arg0, %c0_i32, %c0_i32_0 : i32, i32, i32
  }
  func.func @transform_14(%arg0: i32, %arg1: i32) -> (i32, i32, i32) {
    %c0_i32 = arith.constant 0 : i32
    %c0_i32_0 = arith.constant 0 : i32
    %c0_i32_1 = arith.constant 0 : i32
    return %arg0, %c0_i32, %c0_i32_0 : i32, i32, i32
  }
}

</mosaic_0001>

<llo_original>
// kernel: tpu_custom_call.1
$region0: #{tpu_custom_call.1}
  #allocation0 [shape = 'u32[]', space=smem, size = 0x4, offset = 0x4, fixed_abs, tag = 'smem constant byte address 0x4 - core index']
  #allocation1 [shape = 'u32[144,128]{1,0:T(1,128)}', space=vmem, size = 0x12000, scoped, tag = 'internal scratch']
  #allocation2 [shape = 'f32[1,1]{1,0:T(1,128)}', space=vmem, size = 0x200, scoped, tag = 'scratch operand']
  #allocation3 [shape = 'f32[1,1]{1,0:T(1,128)}', space=vmem, size = 0x200, scoped, tag = 'scratch operand']
  #allocation4 [shape = 'f32[1,1]{1,0:T(1,128)}', space=vmem, size = 0x200, scoped, tag = 'scratch operand']
  #allocation5 [shape = 'f32[1,1]{1,0:T(1,128)S(1)}', space=vmem, size = 0x200, scoped, tag = 'scoped memory for tpu_custom_call.1']
  %s0 = inlined_call_operand.vmem [shape: f32[16,8], index: 0, kind: input, shape index: {}]
  %s1 = inlined_call_operand.vmem [shape: f32[16,8], index: 1, kind: input, shape index: {}]
  %s2 = inlined_call_operand.vmem [shape: f32[16,8], index: 2, kind: input, shape index: {}]
  %s3 = inlined_call_operand.vmem [shape: f32[8,512], index: 3, kind: input, shape index: {}]
  %s4 = inlined_call_operand.vmem [shape: f32[8,512], index: 4, kind: input, shape index: {}]
  %s5 = inlined_call_operand.vmem [shape: f32[1,512], index: 5, kind: input, shape index: {}]
  %s6 = inlined_call_operand.hbm [shape: f32[512,512], index: 6, kind: input, shape index: {}]
  %s7 = inlined_call_operand.vmem [shape: f32[1,512], index: 7, kind: input, shape index: {}]
  %s8 = inlined_call_operand.hbm [shape: f32[512,512], index: 8, kind: input, shape index: {}]
  %s9 = inlined_call_operand.vmem [shape: f32[1,512], index: 9, kind: input, shape index: {}]
  %s10 = inlined_call_operand.vmem [shape: f32[1,512], index: 10, kind: input, shape index: {}]
  %s11 = inlined_call_operand.<no memory space> [shape: f32[1,1], index: 11, kind: input, shape index: {}]
  %s12 = inlined_call_operand.vmem [shape: f32[2,1,1], index: 12, kind: output, shape index: {0}]
  %s13 = inlined_call_operand.vmem [shape: f32[2,1,1], index: 13, kind: output, shape index: {1}]
  %s14 = inlined_call_operand.vmem [shape: f32[2,1,1], index: 14, kind: output, shape index: {2}]
  %15 = xla_tuple %s12, %s13, %s14
  %s16 = sld [smem:[#allocation0]]
  $region113: #{tpu_custom_call.1} parent=0
    _
  %s18 = ssub.s32 1, %s16
  %s19 = scalar_select 0, %s18, %s16
  %v20 = vstv %s11
  %21 = vst [vmem:[#allocation5] sm:$0x1] %v20
  $region1: #{tpu_custom_call.1} parent=0
    #allocation6 [shape = 'u8[1048576]{0}', space=vmem, size = 0x100000, scoped, tag = 'input window, operand 6, single buffered']
    #allocation7 [shape = 's32[2]{0}', space=sflag, size = 0x8, scoped, tag = 'scoped memory for tpu_custom_call.1']
    #allocation8 [shape = 'u8[1048576]{0}', space=vmem, size = 0x100000, scoped, tag = 'input window, operand 8, single buffered']
    #allocation9 [shape = 's32[1]{0}', space=sflag, size = 0x4, scoped, tag = 'scoped memory for tpu_custom_call.1']
    %22 = vsyncpa [#allocation7], 0
    %23 = vsyncpa [#allocation9], 0
    loop: start=0, step=1, limit=4
    $region2: #{tpu_custom_call.1} parent=1 // loop_pre_header
      _
    $region3: #{tpu_custom_call.1} parent=1 // loop_header
      %s25 = sphi 0, %s29
      %p26 = scmp.ge.s32.totalorder %s25, 4
      %s32 = sphi 0, %s44
      %s33 = sphi 0, %s40
      %s34 = sphi 0, %s32
      %s35 = sphi 0, %s33
      %s36 = sphi 0, %s34
      %s37 = sphi 0, %s35
      %s49 = sphi 0, %s51
      %s52 = sphi 0, %s49
      %s53 = sphi 0, %s52
      %s69 = sphi 0, %s53
      %s77 = sphi 0, %s79
      %s80 = sphi 0, %s77
      %s81 = sphi 0, %s80
      %s97 = sphi 0, %s81
      %s105 = sphi 0, %s107
      %s108 = sphi 0, %s105
      %s109 = sphi 0, %s108
      %s125 = sphi 0, %s109
      %s129 = sphi 0, %s129
      %s131 = sphi 0, %s129
      %s132 = sphi 0, %s131
      %s146 = sphi 0, %s132
      %s150 = sphi 0, %s150
      %s152 = sphi 0, %s150
      %s153 = sphi 0, %s152
      %s167 = sphi 0, %s153
      %s171 = sphi 0, %s171
      %s173 = sphi 0, %s171
      %s174 = sphi 0, %s173
      %s188 = sphi 0, %s174
      %s192 = sphi 0, %s192
      %s194 = sphi 0, %s192
      %s195 = sphi 0, %s194
      %s209 = sphi 0, %s195
      %s213 = sphi 0, %s213
      %s215 = sphi 0, %s213
      %s216 = sphi 0, %s215
      %s230 = sphi 0, %s216
      %s234 = sphi 0, %s234
      %s236 = sphi 0, %s234
      %s237 = sphi 0, %s236
      %s251 = sphi 0, %s237
      %s255 = sphi 0, %s255
      %s257 = sphi 0, %s255
      %s258 = sphi 0, %s257
      %s272 = sphi 0, %s258
      %s276 = sphi 0, %s276
      %s278 = sphi 0, %s276
      %s279 = sphi 0, %s278
      %s293 = sphi 0, %s279
      %s297 = sphi 0, %s297
      %s299 = sphi 0, %s297
      %s300 = sphi 0, %s299
      %s314 = sphi 0, %s300
      %s320 = sphi 0, %s322
      %s323 = sphi 0, %s320
      %s324 = sphi 0, %s323
      %s340 = sphi 0, %s324
      %s346 = sphi 0, %s348
      %s349 = sphi 0, %s346
      %s350 = sphi 0, %s349
      %s366 = sphi 0, %s350
      %s372 = sphi 0, %s374
      %s375 = sphi 0, %s372
      %s376 = sphi 0, %s375
      %s392 = sphi 0, %s376
    $region4: #{tpu_custom_call.1} parent=1 // loop_header_branch
      %28 = sbr.rel (%p26) target = $region8
    $region5: #{tpu_custom_call.1} parent=1 // loop_body
      %s30 = ssub.s32 %s25, 1
      %s31 = ssub.s32 %s25, 2
      %s38 = sadd.s32 1, %s33
      %p39 = scmp.ge.s32.totalorder %s38, 1
      %s40 = scalar_select %p39, 0, %s38
      %s41 = sadd.s32 1, %s32
      %s42 = scalar_select %p39, %s41, %s32
      %p43 = scmp.ge.s32.totalorder %s42, 2
      %s44 = scalar_select %p43, 0, %s42
      %s45 = sadd.s32 %s32, %s33
      %s46 = sadd.s32 %s44, %s40
      %s47 = ssub.s32 %s45, %s46
      %p48 = scmp.eq.s32.totalorder %s47, 0
      %s50 = sadd.s32 %s49, 1
      %s51 = scalar_select %p48, %s49, %s50
      %p54 = pneg %p48
      %p55 = scmp.eq.s32.totalorder %s25, 1
      %p56 = por %p54, %p55
      %p57 = scmp.ne.s32.totalorder %s49, %s52
      %p58 = scmp.eq.s32.totalorder %s25, 0
      %p59 = por %p57, %p58
      %p60 = scmp.ne.s32.totalorder %s49, %s52
      %p61 = scmp.eq.s32.totalorder %s30, 1
      %p62 = por %p60, %p61
      %p63 = scmp.ne.s32.totalorder %s52, %s53
      %p64 = scmp.eq.s32.totalorder %s30, 0
      %p65 = por %p63, %p64
      %p66 = scmp.ne.s32.totalorder %s52, %s53
      %p67 = scmp.eq.s32.totalorder %s31, 1
      %p68 = por %p66, %p67
      %p70 = scmp.ne.s32.totalorder %s53, %s69
      %p71 = scmp.eq.s32.totalorder %s31, 0
      %p72 = por %p70, %p71
      %s73 = sadd.s32 %s32, %s33
      %s74 = sadd.s32 %s44, %s40
      %s75 = ssub.s32 %s73, %s74
      %p76 = scmp.eq.s32.totalorder %s75, 0
      %s78 = sadd.s32 %s77, 1
      %s79 = scalar_select %p76, %s77, %s78
      %p82 = pneg %p76
      %p83 = scmp.eq.s32.totalorder %s25, 1
      %p84 = por %p82, %p83
      %p85 = scmp.ne.s32.totalorder %s77, %s80
      %p86 = scmp.eq.s32.totalorder %s25, 0
      %p87 = por %p85, %p86
      %p88 = scmp.ne.s32.totalorder %s77, %s80
      %p89 = scmp.eq.s32.totalorder %s30, 1
      %p90 = por %p88, %p89
      %p91 = scmp.ne.s32.totalorder %s80, %s81
      %p92 = scmp.eq.s32.totalorder %s30, 0
      %p93 = por %p91, %p92
      %p94 = scmp.ne.s32.totalorder %s80, %s81
      %p95 = scmp.eq.s32.totalorder %s31, 1
      %p96 = por %p94, %p95
      %p98 = scmp.ne.s32.totalorder %s81, %s97
      %p99 = scmp.eq.s32.totalorder %s31, 0
      %p100 = por %p98, %p99
      %s101 = sadd.s32 %s32, %s33
      %s102 = sadd.s32 %s44, %s40
      %s103 = ssub.s32 %s101, %s102
      %p104 = scmp.eq.s32.totalorder %s103, 0
      %s106 = sadd.s32 %s105, 1
      %s107 = scalar_select %p104, %s105, %s106
      %p110 = pneg %p104
      %p111 = scmp.eq.s32.totalorder %s25, 1
      %p112 = por %p110, %p111
      %p113 = scmp.ne.s32.totalorder %s105, %s108
      %p114 = scmp.eq.s32.totalorder %s25, 0
      %p115 = por %p113, %p114
      %p116 = scmp.ne.s32.totalorder %s105, %s108
      %p117 = scmp.eq.s32.totalorder %s30, 1
      %p118 = por %p116, %p117
      %p119 = scmp.ne.s32.totalorder %s108, %s109
      %p120 = scmp.eq.s32.totalorder %s30, 0
      %p121 = por %p119, %p120
      %p122 = scmp.ne.s32.totalorder %s108, %s109
      %p123 = scmp.eq.s32.totalorder %s31, 1
      %p124 = por %p122, %p123
      %p126 = scmp.ne.s32.totalorder %s109, %s125
      %p127 = scmp.eq.s32.totalorder %s31, 0
      %p128 = por %p126, %p127
      %s130 = sadd.s32 %s129, 1
      %p133 = scmp.eq.s32.totalorder %s25, 1
      %p134 = scmp.ne.s32.totalorder %s129, %s131
      %p135 = scmp.eq.s32.totalorder %s25, 0
      %p136 = por %p134, %p135
      %p137 = scmp.ne.s32.totalorder %s129, %s131
      %p138 = scmp.eq.s32.totalorder %s30, 1
      %p139 = por %p137, %p138
      %p140 = scmp.ne.s32.totalorder %s131, %s132
      %p141 = scmp.eq.s32.totalorder %s30, 0
      %p142 = por %p140, %p141
      %p143 = scmp.ne.s32.totalorder %s131, %s132
      %p144 = scmp.eq.s32.totalorder %s31, 1
      %p145 = por %p143, %p144
      %p147 = scmp.ne.s32.totalorder %s132, %s146
      %p148 = scmp.eq.s32.totalorder %s31, 0
      %p149 = por %p147, %p148
      %s151 = sadd.s32 %s150, 1
      %p154 = scmp.eq.s32.totalorder %s25, 1
      %p155 = scmp.ne.s32.totalorder %s150, %s152
      %p156 = scmp.eq.s32.totalorder %s25, 0
      %p157 = por %p155, %p156
      %p158 = scmp.ne.s32.totalorder %s150, %s152
      %p159 = scmp.eq.s32.totalorder %s30, 1
      %p160 = por %p158, %p159
      %p161 = scmp.ne.s32.totalorder %s152, %s153
      %p162 = scmp.eq.s32.totalorder %s30, 0
      %p163 = por %p161, %p162
      %p164 = scmp.ne.s32.totalorder %s152, %s153
      %p165 = scmp.eq.s32.totalorder %s31, 1
      %p166 = por %p164, %p165
      %p168 = scmp.ne.s32.totalorder %s153, %s167
      %p169 = scmp.eq.s32.totalorder %s31, 0
      %p170 = por %p168, %p169
      %s172 = sadd.s32 %s171, 1
      %p175 = scmp.eq.s32.totalorder %s25, 1
      %p176 = scmp.ne.s32.totalorder %s171, %s173
      %p177 = scmp.eq.s32.totalorder %s25, 0
      %p178 = por %p176, %p177
      %p179 = scmp.ne.s32.totalorder %s171, %s173
      %p180 = scmp.eq.s32.totalorder %s30, 1
      %p181 = por %p179, %p180
      %p182 = scmp.ne.s32.totalorder %s173, %s174
      %p183 = scmp.eq.s32.totalorder %s30, 0
      %p184 = por %p182, %p183
      %p185 = scmp.ne.s32.totalorder %s173, %s174
      %p186 = scmp.eq.s32.totalorder %s31, 1
      %p187 = por %p185, %p186
      %p189 = scmp.ne.s32.totalorder %s174, %s188
      %p190 = scmp.eq.s32.totalorder %s31, 0
      %p191 = por %p189, %p190
      %s193 = sadd.s32 %s192, 1
      %p196 = scmp.eq.s32.totalorder %s25, 1
      %p197 = scmp.ne.s32.totalorder %s192, %s194
      %p198 = scmp.eq.s32.totalorder %s25, 0
      %p199 = por %p197, %p198
      %p200 = scmp.ne.s32.totalorder %s192, %s194
      %p201 = scmp.eq.s32.totalorder %s30, 1
      %p202 = por %p200, %p201
      %p203 = scmp.ne.s32.totalorder %s194, %s195
      %p204 = scmp.eq.s32.totalorder %s30, 0
      %p205 = por %p203, %p204
      %p206 = scmp.ne.s32.totalorder %s194, %s195
      %p207 = scmp.eq.s32.totalorder %s31, 1
      %p208 = por %p206, %p207
      %p210 = scmp.ne.s32.totalorder %s195, %s209
      %p211 = scmp.eq.s32.totalorder %s31, 0
      %p212 = por %p210, %p211
      %s214 = sadd.s32 %s213, 1
      %p217 = scmp.eq.s32.totalorder %s25, 1
      %p218 = scmp.ne.s32.totalorder %s213, %s215
      %p219 = scmp.eq.s32.totalorder %s25, 0
      %p220 = por %p218, %p219
      %p221 = scmp.ne.s32.totalorder %s213, %s215
      %p222 = scmp.eq.s32.totalorder %s30, 1
      %p223 = por %p221, %p222
      %p224 = scmp.ne.s32.totalorder %s215, %s216
      %p225 = scmp.eq.s32.totalorder %s30, 0
      %p226 = por %p224, %p225
      %p227 = scmp.ne.s32.totalorder %s215, %s216
      %p228 = scmp.eq.s32.totalorder %s31, 1
      %p229 = por %p227, %p228
      %p231 = scmp.ne.s32.totalorder %s216, %s230
      %p232 = scmp.eq.s32.totalorder %s31, 0
      %p233 = por %p231, %p232
      %s235 = sadd.s32 %s234, 1
      %p238 = scmp.eq.s32.totalorder %s25, 1
      %p239 = scmp.ne.s32.totalorder %s234, %s236
      %p240 = scmp.eq.s32.totalorder %s25, 0
      %p241 = por %p239, %p240
      %p242 = scmp.ne.s32.totalorder %s234, %s236
      %p243 = scmp.eq.s32.totalorder %s30, 1
      %p244 = por %p242, %p243
      %p245 = scmp.ne.s32.totalorder %s236, %s237
      %p246 = scmp.eq.s32.totalorder %s30, 0
      %p247 = por %p245, %p246
      %p248 = scmp.ne.s32.totalorder %s236, %s237
      %p249 = scmp.eq.s32.totalorder %s31, 1
      %p250 = por %p248, %p249
      %p252 = scmp.ne.s32.totalorder %s237, %s251
      %p253 = scmp.eq.s32.totalorder %s31, 0
      %p254 = por %p252, %p253
      %s256 = sadd.s32 %s255, 1
      %p259 = scmp.eq.s32.totalorder %s25, 1
      %p260 = scmp.ne.s32.totalorder %s255, %s257
      %p261 = scmp.eq.s32.totalorder %s25, 0
      %p262 = por %p260, %p261
      %p263 = scmp.ne.s32.totalorder %s255, %s257
      %p264 = scmp.eq.s32.totalorder %s30, 1
      %p265 = por %p263, %p264
      %p266 = scmp.ne.s32.totalorder %s257, %s258
      %p267 = scmp.eq.s32.totalorder %s30, 0
      %p268 = por %p266, %p267
      %p269 = scmp.ne.s32.totalorder %s257, %s258
      %p270 = scmp.eq.s32.totalorder %s31, 1
      %p271 = por %p269, %p270
      %p273 = scmp.ne.s32.totalorder %s258, %s272
      %p274 = scmp.eq.s32.totalorder %s31, 0
      %p275 = por %p273, %p274
      %s277 = sadd.s32 %s276, 1
      %p280 = scmp.eq.s32.totalorder %s25, 1
      %p281 = scmp.ne.s32.totalorder %s276, %s278
      %p282 = scmp.eq.s32.totalorder %s25, 0
      %p283 = por %p281, %p282
      %p284 = scmp.ne.s32.totalorder %s276, %s278
      %p285 = scmp.eq.s32.totalorder %s30, 1
      %p286 = por %p284, %p285
      %p287 = scmp.ne.s32.totalorder %s278, %s279
      %p288 = scmp.eq.s32.totalorder %s30, 0
      %p289 = por %p287, %p288
      %p290 = scmp.ne.s32.totalorder %s278, %s279
      %p291 = scmp.eq.s32.totalorder %s31, 1
      %p292 = por %p290, %p291
      %p294 = scmp.ne.s32.totalorder %s279, %s293
      %p295 = scmp.eq.s32.totalorder %s31, 0
      %p296 = por %p294, %p295
      %s298 = sadd.s32 %s297, 1
      %p301 = scmp.eq.s32.totalorder %s25, 1
      %p302 = scmp.ne.s32.totalorder %s297, %s299
      %p303 = scmp.eq.s32.totalorder %s25, 0
      %p304 = por %p302, %p303
      %p305 = scmp.ne.s32.totalorder %s297, %s299
      %p306 = scmp.eq.s32.totalorder %s30, 1
      %p307 = por %p305, %p306
      %p308 = scmp.ne.s32.totalorder %s299, %s300
      %p309 = scmp.eq.s32.totalorder %s30, 0
      %p310 = por %p308, %p309
      %p311 = scmp.ne.s32.totalorder %s299, %s300
      %p312 = scmp.eq.s32.totalorder %s31, 1
      %p313 = por %p311, %p312
      %p315 = scmp.ne.s32.totalorder %s300, %s314
      %p316 = scmp.eq.s32.totalorder %s31, 0
      %p317 = por %p315, %p316
      %s318 = ssub.s32 %s32, %s44
      %p319 = scmp.eq.s32.totalorder %s318, 0
      %s321 = sadd.s32 %s320, 1
      %s322 = scalar_select %p319, %s320, %s321
      %p325 = pneg %p319
      %p326 = scmp.eq.s32.totalorder %s25, 1
      %p327 = por %p325, %p326
      %p328 = scmp.ne.s32.totalorder %s320, %s323
      %p329 = scmp.eq.s32.totalorder %s25, 0
      %p330 = por %p328, %p329
      %p331 = scmp.ne.s32.totalorder %s320, %s323
      %p332 = scmp.eq.s32.totalorder %s30, 1
      %p333 = por %p331, %p332
      %p334 = scmp.ne.s32.totalorder %s323, %s324
      %p335 = scmp.eq.s32.totalorder %s30, 0
      %p336 = por %p334, %p335
      %p337 = scmp.ne.s32.totalorder %s323, %s324
      %p338 = scmp.eq.s32.totalorder %s31, 1
      %p339 = por %p337, %p338
      %p341 = scmp.ne.s32.totalorder %s324, %s340
      %p342 = scmp.eq.s32.totalorder %s31, 0
      %p343 = por %p341, %p342
      %s344 = ssub.s32 %s32, %s44
      %p345 = scmp.eq.s32.totalorder %s344, 0
      %s347 = sadd.s32 %s346, 1
      %s348 = scalar_select %p345, %s346, %s347
      %p351 = pneg %p345
      %p352 = scmp.eq.s32.totalorder %s25, 1
      %p353 = por %p351, %p352
      %p354 = scmp.ne.s32.totalorder %s346, %s349
      %p355 = scmp.eq.s32.totalorder %s25, 0
      %p356 = por %p354, %p355
      %p357 = scmp.ne.s32.totalorder %s346, %s349
      %p358 = scmp.eq.s32.totalorder %s30, 1
      %p359 = por %p357, %p358
      %p360 = scmp.ne.s32.totalorder %s349, %s350
      %p361 = scmp.eq.s32.totalorder %s30, 0
      %p362 = por %p360, %p361
      %p363 = scmp.ne.s32.totalorder %s349, %s350
      %p364 = scmp.eq.s32.totalorder %s31, 1
      %p365 = por %p363, %p364
      %p367 = scmp.ne.s32.totalorder %s350, %s366
      %p368 = scmp.eq.s32.totalorder %s31, 0
      %p369 = por %p367, %p368
      %s370 = ssub.s32 %s32, %s44
      %p371 = scmp.eq.s32.totalorder %s370, 0
      %s373 = sadd.s32 %s372, 1
      %s374 = scalar_select %p371, %s372, %s373
      %p377 = pneg %p371
      %p378 = scmp.eq.s32.totalorder %s25, 1
      %p379 = por %p377, %p378
      %p380 = scmp.ne.s32.totalorder %s372, %s375
      %p381 = scmp.eq.s32.totalorder %s25, 0
      %p382 = por %p380, %p381
      %p383 = scmp.ne.s32.totalorder %s372, %s375
      %p384 = scmp.eq.s32.totalorder %s30, 1
      %p385 = por %p383, %p384
      %p386 = scmp.ne.s32.totalorder %s375, %s376
      %p387 = scmp.eq.s32.totalorder %s30, 0
      %p388 = por %p386, %p387
      %p389 = scmp.ne.s32.totalorder %s375, %s376
      %p390 = scmp.eq.s32.totalorder %s31, 1
      %p391 = por %p389, %p390
      %p393 = scmp.ne.s32.totalorder %s376, %s392
      %p394 = scmp.eq.s32.totalorder %s31, 0
      %p395 = por %p393, %p394
      %p396 = scmp.le.s32.totalorder 1, %s25
      %p397 = scmp.lt.s32.totalorder %s25, 3
      %p398 = pnand %p396, %p397
      %p399 = pneg %p398
      // Predicated region
      $region9: #{tpu_custom_call.1} parent=5 // pred_check
        _
      $region10: #{tpu_custom_call.1} parent=5 // pred_check_branch
        %401 = sbr.rel (%p398) target = $region12
      $region11: #{tpu_custom_call.1} parent=5 // pred_region
        %s402 = ssub.s32 %s25, 1
        // Predicated region
        $region13: #{tpu_custom_call.1} parent=11 // pred_check
          %p403 = pneg %p142
        $region14: #{tpu_custom_call.1} parent=11 // pred_check_branch
          %405 = sbr.rel (%p403) target = $region16
        $region15: #{tpu_custom_call.1} parent=11 // pred_region
          _
        $region16: #{tpu_custom_call.1} parent=11 // pred_fallthru
          _
        // Predicated region
        $region17: #{tpu_custom_call.1} parent=11 // pred_check
          %p406 = pneg %p163
        $region18: #{tpu_custom_call.1} parent=11 // pred_check_branch
          %408 = sbr.rel (%p406) target = $region20
        $region19: #{tpu_custom_call.1} parent=11 // pred_region
          _
        $region20: #{tpu_custom_call.1} parent=11 // pred_fallthru
          _
        // Predicated region
        $region21: #{tpu_custom_call.1} parent=11 // pred_check
          %p409 = pneg %p184
        $region22: #{tpu_custom_call.1} parent=11 // pred_check_branch
          %411 = sbr.rel (%p409) target = $region24
        $region23: #{tpu_custom_call.1} parent=11 // pred_region
          _
        $region24: #{tpu_custom_call.1} parent=11 // pred_fallthru
          _
        // Predicated region
        $region25: #{tpu_custom_call.1} parent=11 // pred_check
          %p412 = pneg %p205
        $region26: #{tpu_custom_call.1} parent=11 // pred_check_branch
          %414 = sbr.rel (%p412) target = $region28
        $region27: #{tpu_custom_call.1} parent=11 // pred_region
          %s416 = ssub.s32 32768, 32768
          %417 = vsyncadd [#allocation7], %s416
          %s418 = sshll.u32 [#allocation6], 4
          %s419 = int_to_ptr.vmem [resolvable:$true] %s418
          %424 = dma.hbm_to_vmem [thread:$0]  %s6, 32768, %s419, [#allocation7], 512, 512, 32
        $region28: #{tpu_custom_call.1} parent=11 // pred_fallthru
          _
        // Predicated region
        $region29: #{tpu_custom_call.1} parent=11 // pred_check
          %p425 = pneg %p226
        $region30: #{tpu_custom_call.1} parent=11 // pred_check_branch
          %427 = sbr.rel (%p425) target = $region32
        $region31: #{tpu_custom_call.1} parent=11 // pred_region
          _
        $region32: #{tpu_custom_call.1} parent=11 // pred_fallthru
          _
        // Predicated region
        $region33: #{tpu_custom_call.1} parent=11 // pred_check
          %p428 = pneg %p247
        $region34: #{tpu_custom_call.1} parent=11 // pred_check_branch
          %430 = sbr.rel (%p428) target = $region36
        $region35: #{tpu_custom_call.1} parent=11 // pred_region
          %s432 = ssub.s32 32768, 32768
          %433 = vsyncadd [#allocation9], %s432
          %s434 = sshll.u32 [#allocation8], 4
          %s435 = int_to_ptr.vmem [resolvable:$true] %s434
          %440 = dma.hbm_to_vmem [thread:$0]  %s8, 32768, %s435, [#allocation9], 512, 512, 32
        $region36: #{tpu_custom_call.1} parent=11 // pred_fallthru
          _
        // Predicated region
        $region37: #{tpu_custom_call.1} parent=11 // pred_check
          %p441 = pneg %p268
        $region38: #{tpu_custom_call.1} parent=11 // pred_check_branch
          %443 = sbr.rel (%p441) target = $region40
        $region39: #{tpu_custom_call.1} parent=11 // pred_region
          _
        $region40: #{tpu_custom_call.1} parent=11 // pred_fallthru
          _
        // Predicated region
        $region41: #{tpu_custom_call.1} parent=11 // pred_check
          %p444 = pneg %p289
        $region42: #{tpu_custom_call.1} parent=11 // pred_check_branch
          %446 = sbr.rel (%p444) target = $region44
        $region43: #{tpu_custom_call.1} parent=11 // pred_region
          _
        $region44: #{tpu_custom_call.1} parent=11 // pred_fallthru
          _
        // Predicated region
        $region45: #{tpu_custom_call.1} parent=11 // pred_check
          %p447 = pneg %p310
        $region46: #{tpu_custom_call.1} parent=11 // pred_check_branch
          %449 = sbr.rel (%p447) target = $region48
        $region47: #{tpu_custom_call.1} parent=11 // pred_region
          _
        $region48: #{tpu_custom_call.1} parent=11 // pred_fallthru
          _
      $region12: #{tpu_custom_call.1} parent=5 // pred_fallthru
        _
      %p450 = scmp.lt.s32.totalorder %s25, 2
      // Predicated region
      $region49: #{tpu_custom_call.1} parent=5 // pred_check
        %p451 = pneg %p450
      $region50: #{tpu_custom_call.1} parent=5 // pred_check_branch
        %453 = sbr.rel (%p451) target = $region52
      $region51: #{tpu_custom_call.1} parent=5 // pred_region
        // Predicated region
        $region53: #{tpu_custom_call.1} parent=51 // pred_check
          %p454 = pneg %p59
        $region54: #{tpu_custom_call.1} parent=51 // pred_check_branch
          %456 = sbr.rel (%p454) target = $region56
        $region55: #{tpu_custom_call.1} parent=51 // pred_region
          %s457 = sadd.s32 %s32, %s33
          %p458 = scmp.lt.s32.totalorder %s457, 1
          %s459 = scalar_select %p458, %s457, 1
          %s460 = smul.addr %s459, 8
          %s461 = scalar_lea.vmem %s0, %s460
          %s462 = sadd.s32 %s32, %s33
        $region56: #{tpu_custom_call.1} parent=51 // pred_fallthru
          _
        // Predicated region
        $region57: #{tpu_custom_call.1} parent=51 // pred_check
          %p463 = pneg %p87
        $region58: #{tpu_custom_call.1} parent=51 // pred_check_branch
          %465 = sbr.rel (%p463) target = $region60
        $region59: #{tpu_custom_call.1} parent=51 // pred_region
          %s466 = sadd.s32 %s32, %s33
          %p467 = scmp.lt.s32.totalorder %s466, 1
          %s468 = scalar_select %p467, %s466, 1
          %s469 = smul.addr %s468, 8
          %s470 = scalar_lea.vmem %s1, %s469
          %s471 = sadd.s32 %s32, %s33
        $region60: #{tpu_custom_call.1} parent=51 // pred_fallthru
          _
        // Predicated region
        $region61: #{tpu_custom_call.1} parent=51 // pred_check
          %p472 = pneg %p115
        $region62: #{tpu_custom_call.1} parent=51 // pred_check_branch
          %474 = sbr.rel (%p472) target = $region64
        $region63: #{tpu_custom_call.1} parent=51 // pred_region
          %s475 = sadd.s32 %s32, %s33
          %p476 = scmp.lt.s32.totalorder %s475, 1
          %s477 = scalar_select %p476, %s475, 1
          %s478 = smul.addr %s477, 8
          %s479 = scalar_lea.vmem %s2, %s478
          %s480 = sadd.s32 %s32, %s33
        $region64: #{tpu_custom_call.1} parent=51 // pred_fallthru
          _
      $region52: #{tpu_custom_call.1} parent=5 // pred_fallthru
        _
      %p481 = scmp.le.s32.totalorder 1, %s25
      %p482 = scmp.lt.s32.totalorder %s25, 3
      %p483 = pnand %p481, %p482
      %p484 = pneg %p483
      // Predicated region
      $region65: #{tpu_custom_call.1} parent=5 // pred_check
        _
      $region66: #{tpu_custom_call.1} parent=5 // pred_check_branch
        %486 = sbr.rel (%p483) target = $region68
      $region67: #{tpu_custom_call.1} parent=5 // pred_region
        %s487 = ssub.s32 %s25, 1
        // Predicated region
        $region69: #{tpu_custom_call.1} parent=67 // pred_check
          %p488 = pneg %p205
        $region70: #{tpu_custom_call.1} parent=67 // pred_check_branch
          %490 = sbr.rel (%p488) target = $region72
        $region71: #{tpu_custom_call.1} parent=67 // pred_region
          %491 = dma.done [#allocation7], 32768
        $region72: #{tpu_custom_call.1} parent=67 // pred_fallthru
          _
        // Predicated region
        $region73: #{tpu_custom_call.1} parent=67 // pred_check
          %p492 = pneg %p247
        $region74: #{tpu_custom_call.1} parent=67 // pred_check_branch
          %494 = sbr.rel (%p492) target = $region76
        $region75: #{tpu_custom_call.1} parent=67 // pred_region
          %495 = dma.done [#allocation9], 32768
        $region76: #{tpu_custom_call.1} parent=67 // pred_fallthru
          _
        %s496 = sadd.s32 %s34, %s35
        %p497 = scmp.lt.s32.totalorder %s496, 1
        %s498 = scalar_select %p497, %s496, 1
        %s499 = smul.addr %s498, 8
        %s500 = scalar_lea.vmem %s0, %s499
        %p501 = pneg %p65
        %p502 = pneg %p62
        %s503 = sadd.s32 %s34, %s35
        %p504 = scmp.lt.s32.totalorder %s503, 1
        %s505 = scalar_select %p504, %s503, 1
        %s506 = smul.addr %s505, 8
        %s507 = scalar_lea.vmem %s1, %s506
        %p508 = pneg %p93
        %p509 = pneg %p90
        %s510 = sadd.s32 %s34, %s35
        %p511 = scmp.lt.s32.totalorder %s510, 1
        %s512 = scalar_select %p511, %s510, 1
        %s513 = smul.addr %s512, 8
        %s514 = scalar_lea.vmem %s2, %s513
        %p515 = pneg %p121
        %p516 = pneg %p118
        %p517 = pneg %p142
        %p518 = pneg %p139
        %p519 = pneg %p163
        %p520 = pneg %p160
        %p521 = pneg %p184
        %p522 = pneg %p181
        %p523 = pneg %p205
        %p524 = pneg %p202
        %p525 = pneg %p226
        %p526 = pneg %p223
        %p527 = pneg %p247
        %p528 = pneg %p244
        %p529 = pneg %p268
        %p530 = pneg %p265
        %p531 = pneg %p289
        %p532 = pneg %p286
        %p533 = pneg %p310
        %p534 = pneg %p307
        %p535 = pneg %p336
        %p536 = pneg %p333
        %p537 = scmp.lt.s32.totalorder %s34, 1
        %s538 = scalar_select %p537, %s34, 1
        %s539 = scalar_lea.vmem %s12, %s538
        %p540 = pneg %p362
        %p541 = pneg %p359
        %p542 = scmp.lt.s32.totalorder %s34, 1
        %s543 = scalar_select %p542, %s34, 1
        %s544 = scalar_lea.vmem %s13, %s543
        %p545 = pneg %p388
        %p546 = pneg %p385
        %p547 = scmp.lt.s32.totalorder %s34, 1
        %s548 = scalar_select %p547, %s34, 1
        %s549 = scalar_lea.vmem %s14, %s548
        %s550 = sadd.s32 %s34, %s35
        %p551 = scmp.lt.s32.totalorder %s550, 1
        %s552 = scalar_select %p551, %s550, 1
        %s553 = smul.addr %s552, 8
        %s554 = scalar_lea.vmem %s0, %s553
        %s555 = sadd.s32 %s34, %s35
        %s556 = sadd.s32 %s34, %s35
        %p557 = scmp.lt.s32.totalorder %s556, 1
        %s558 = scalar_select %p557, %s556, 1
        %s559 = smul.addr %s558, 8
        %s560 = scalar_lea.vmem %s1, %s559
        %s561 = sadd.s32 %s34, %s35
        %s562 = sadd.s32 %s34, %s35
        %p563 = scmp.lt.s32.totalorder %s562, 1
        %s564 = scalar_select %p563, %s562, 1
        %s565 = smul.addr %s564, 8
        %s566 = scalar_lea.vmem %s2, %s565
        %s567 = sadd.s32 %s34, %s35
        %p568 = scmp.lt.s32.totalorder %s34, 1
        %s569 = scalar_select %p568, %s34, 1
        %s570 = scalar_lea.vmem %s12, %s569
        %p571 = scmp.lt.s32.totalorder %s34, 1
        %s572 = scalar_select %p571, %s34, 1
        %s573 = scalar_lea.vmem %s13, %s572
        %p574 = scmp.lt.s32.totalorder %s34, 1
        %s575 = scalar_select %p574, %s34, 1
        %s576 = scalar_lea.vmem %s14, %s575
        %p577 = scmp.eq.s32.totalorder %s35, 0
        // Predicated region
        $region77: #{tpu_custom_call.1} parent=67 // pred_check
          %p578 = pneg %p577
        $region78: #{tpu_custom_call.1} parent=67 // pred_check_branch
          %580 = sbr.rel (%p578) target = $region80
        $region79: #{tpu_custom_call.1} parent=67 // pred_region
          %vm581 = vcmask 0
          %582 = vst.msk [vmem:[#allocation2] sm:$0x1] %vm581, 0.0
          %583 = vst.msk [vmem:[#allocation3] sm:$0x1] %vm581, -inf
          %584 = vst.msk [vmem:[#allocation4] sm:$0x1] %vm581, 0.0
        $region80: #{tpu_custom_call.1} parent=67 // pred_fallthru
          _
        %v585 = vld [vmem:[%s554] sm:$0xff]
        %v586 = vld [vmem:[%s3] sm:$0xff]
        %v587 = vld [vmem:[%s3 + $0x8] sm:$0xff]
        %v588 = vld [vmem:[%s3 + $0x10] sm:$0xff]
        %v589 = vld [vmem:[%s3 + $0x18] sm:$0xff]
        %vm590 = vcmask 64512
        %v592 = vsel %vm590, %v585, 0
        %594 = vmatprep.subr.mxu0 %v587
        %595 = vmatpush1.msra.mxu0 %v586
        %596 = vmatprep.subr.mxu0 0.0
        %597 = vmatpush1.msra.mxu0 0.0
        %598 = vmatprep.subr.mxu0 0.0
        %599 = vmatpush1.msra.mxu0 0.0
        %600 = vmatprep.subr.mxu0 0.0
        %601 = vmatpush1.msra.mxu0 0.0
        %602 = vmatprep.subr.mxu0 0.0
        %603 = vmatpush1.msra.mxu0 0.0
        %604 = vmatprep.subr.mxu0 0.0
        %605 = vmatpush1.msra.mxu0 0.0
        %606 = vmatprep.subr.mxu0 0.0
        %607 = vmatpush1.msra.mxu0 0.0
        %608 = vmatprep.subr.mxu0 0.0
        %609 = vmatpush1.msra.mxu0 0.0
        %610 = vmatprep.subr.mxu0 0.0
        %611 = vmatpush1.msra.mxu0 0.0
        %612 = vmatprep.subr.mxu0 0.0
        %613 = vmatpush1.msra.mxu0 0.0
        %614 = vmatprep.subr.mxu0 0.0
        %615 = vmatpush1.msra.mxu0 0.0
        %616 = vmatprep.subr.mxu0 0.0
        %617 = vmatpush1.msra.mxu0 0.0
        %618 = vmatprep.subr.mxu0 0.0
        %619 = vmatpush1.msra.mxu0 0.0
        %620 = vmatprep.subr.mxu0 0.0
        %621 = vmatpush1.msra.mxu0 0.0
        %622 = vmatprep.subr.mxu0 0.0
        %623 = vmatpush1.msra.mxu0 0.0
        %624 = vmatprep.subr.mxu0 0.0
        %625 = vmatpush1.msra.mxu0 0.0
        %626 = vmatprep.subr.mxu0 0.0
        %627 = vmatpush1.msra.mxu0 0.0
        %628 = vmatprep.subr.mxu0 0.0
        %629 = vmatpush1.msra.mxu0 0.0
        %630 = vmatprep.subr.mxu0 0.0
        %631 = vmatpush1.msra.mxu0 0.0
        %632 = vmatprep.subr.mxu0 0.0
        %633 = vmatpush1.msra.mxu0 0.0
        %634 = vmatprep.subr.mxu0 0.0
        %635 = vmatpush1.msra.mxu0 0.0
        %636 = vmatprep.subr.mxu0 0.0
        %637 = vmatpush1.msra.mxu0 0.0
        %638 = vmatprep.subr.mxu0 0.0
        %639 = vmatpush1.msra.mxu0 0.0
        %640 = vmatprep.subr.mxu0 0.0
        %641 = vmatpush1.msra.mxu0 0.0
        %642 = vmatprep.subr.mxu0 0.0
        %643 = vmatpush1.msra.mxu0 0.0
        %644 = vmatprep.subr.mxu0 0.0
        %645 = vmatpush1.msra.mxu0 0.0
        %646 = vmatprep.subr.mxu0 0.0
        %647 = vmatpush1.msra.mxu0 0.0
        %648 = vmatprep.subr.mxu0 0.0
        %649 = vmatpush1.msra.mxu0 0.0
        %650 = vmatprep.subr.mxu0 0.0
        %651 = vmatpush1.msra.mxu0 0.0
        %652 = vmatprep.subr.mxu0 0.0
        %653 = vmatpush1.msra.mxu0 0.0
        %654 = vmatprep.subr.mxu0 0.0
        %655 = vmatpush1.msra.mxu0 0.0
        %656 = vmatprep.subr.mxu0 0.0
        %657 = vmatpush1.msra.mxu0 0.0
        %658 = vmatprep.mubr.f32.mxu0 0.0
        %659 = vmatmul.mubr.f32.gmra.mrb[0].mxu0 %v592
        %v660 = vpop.f32.mrb[0].mxu0
        %v661 = vadd.f32 0.0, %v660
        %v662 = vpop.f32.mrb[0].mxu0
        %v663 = vadd.f32 0.0, %v662
        %664 = vdwg.mxu0
        %665 = vmatprep.subr.mxu0 %v589
        %666 = vmatpush1.msra.mxu0 %v588
        %667 = vmatprep.subr.mxu0 0.0
        %668 = vmatpush1.msra.mxu0 0.0
        %669 = vmatprep.subr.mxu0 0.0
        %670 = vmatpush1.msra.mxu0 0.0
        %671 = vmatprep.subr.mxu0 0.0
        %672 = vmatpush1.msra.mxu0 0.0
        %673 = vmatprep.subr.mxu0 0.0
        %674 = vmatpush1.msra.mxu0 0.0
        %675 = vmatprep.subr.mxu0 0.0
        %676 = vmatpush1.msra.mxu0 0.0
        %677 = vmatprep.subr.mxu0 0.0
        %678 = vmatpush1.msra.mxu0 0.0
        %679 = vmatprep.subr.mxu0 0.0
        %680 = vmatpush1.msra.mxu0 0.0
        %681 = vmatprep.subr.mxu0 0.0
        %682 = vmatpush1.msra.mxu0 0.0
        %683 = vmatprep.subr.mxu0 0.0
        %684 = vmatpush1.msra.mxu0 0.0
        %685 = vmatprep.subr.mxu0 0.0
        %686 = vmatpush1.msra.mxu0 0.0
        %687 = vmatprep.subr.mxu0 0.0
        %688 = vmatpush1.msra.mxu0 0.0
        %689 = vmatprep.subr.mxu0 0.0
        %690 = vmatpush1.msra.mxu0 0.0
        %691 = vmatprep.subr.mxu0 0.0
        %692 = vmatpush1.msra.mxu0 0.0
        %693 = vmatprep.subr.mxu0 0.0
        %694 = vmatpush1.msra.mxu0 0.0
        %695 = vmatprep.subr.mxu0 0.0
        %696 = vmatpush1.msra.mxu0 0.0
        %697 = vmatprep.subr.mxu0 0.0
        %698 = vmatpush1.msra.mxu0 0.0
        %699 = vmatprep.subr.mxu0 0.0
        %700 = vmatpush1.msra.mxu0 0.0
        %701 = vmatprep.subr.mxu0 0.0
        %702 = vmatpush1.msra.mxu0 0.0
        %703 = vmatprep.subr.mxu0 0.0
        %704 = vmatpush1.msra.mxu0 0.0
        %705 = vmatprep.subr.mxu0 0.0
        %706 = vmatpush1.msra.mxu0 0.0
        %707 = vmatprep.subr.mxu0 0.0
        %708 = vmatpush1.msra.mxu0 0.0
        %709 = vmatprep.subr.mxu0 0.0
        %710 = vmatpush1.msra.mxu0 0.0
        %711 = vmatprep.subr.mxu0 0.0
        %712 = vmatpush1.msra.mxu0 0.0
        %713 = vmatprep.subr.mxu0 0.0
        %714 = vmatpush1.msra.mxu0 0.0
        %715 = vmatprep.subr.mxu0 0.0
        %716 = vmatpush1.msra.mxu0 0.0
        %717 = vmatprep.subr.mxu0 0.0
        %718 = vmatpush1.msra.mxu0 0.0
        %719 = vmatprep.subr.mxu0 0.0
        %720 = vmatpush1.msra.mxu0 0.0
        %721 = vmatprep.subr.mxu0 0.0
        %722 = vmatpush1.msra.mxu0 0.0
        %723 = vmatprep.subr.mxu0 0.0
        %724 = vmatpush1.msra.mxu0 0.0
        %725 = vmatprep.subr.mxu0 0.0
        %726 = vmatpush1.msra.mxu0 0.0
        %727 = vmatprep.subr.mxu0 0.0
        %728 = vmatpush1.msra.mxu0 0.0
        %729 = vmatprep.mubr.f32.mxu0 0.0
        %730 = vmatmul.mubr.f32.gmra.mrb[0].mxu0 %v592
        %v731 = vpop.f32.mrb[0].mxu0
        %v732 = vadd.f32 0.0, %v731
        %v733 = vpop.f32.mrb[0].mxu0
        %v734 = vadd.f32 0.0, %v733
        %735 = vdwg.mxu0
        %v736 = vld [vmem:[%s10] sm:$0xf]
        %v737 = vld [vmem:[#allocation5] sm:$0x1]
        %v738 = vld [vmem:[%s560] sm:$0xff]
        %v739 = vld [vmem:[%s4] sm:$0xff]
        %v740 = vld [vmem:[%s4 + $0x8] sm:$0xff]
        %v741 = vld [vmem:[%s4 + $0x10] sm:$0xff]
        %v742 = vld [vmem:[%s4 + $0x18] sm:$0xff]
        %v744 = vsel %vm590, %v738, 0
        %746 = vmatprep.subr.mxu0 %v740
        %747 = vmatpush1.msra.mxu0 %v739
        %748 = vmatprep.subr.mxu0 0.0
        %749 = vmatpush1.msra.mxu0 0.0
        %750 = vmatprep.subr.mxu0 0.0
        %751 = vmatpush1.msra.mxu0 0.0
        %752 = vmatprep.subr.mxu0 0.0
        %753 = vmatpush1.msra.mxu0 0.0
        %754 = vmatprep.subr.mxu0 0.0
        %755 = vmatpush1.msra.mxu0 0.0
        %756 = vmatprep.subr.mxu0 0.0
        %757 = vmatpush1.msra.mxu0 0.0
        %758 = vmatprep.subr.mxu0 0.0
        %759 = vmatpush1.msra.mxu0 0.0
        %760 = vmatprep.subr.mxu0 0.0
        %761 = vmatpush1.msra.mxu0 0.0
        %762 = vmatprep.subr.mxu0 0.0
        %763 = vmatpush1.msra.mxu0 0.0
        %764 = vmatprep.subr.mxu0 0.0
        %765 = vmatpush1.msra.mxu0 0.0
        %766 = vmatprep.subr.mxu0 0.0
        %767 = vmatpush1.msra.mxu0 0.0
        %768 = vmatprep.subr.mxu0 0.0
        %769 = vmatpush1.msra.mxu0 0.0
        %770 = vmatprep.subr.mxu0 0.0
        %771 = vmatpush1.msra.mxu0 0.0
        %772 = vmatprep.subr.mxu0 0.0
        %773 = vmatpush1.msra.mxu0 0.0
        %774 = vmatprep.subr.mxu0 0.0
        %775 = vmatpush1.msra.mxu0 0.0
        %776 = vmatprep.subr.mxu0 0.0
        %777 = vmatpush1.msra.mxu0 0.0
        %778 = vmatprep.subr.mxu0 0.0
        %779 = vmatpush1.msra.mxu0 0.0
        %780 = vmatprep.subr.mxu0 0.0
        %781 = vmatpush1.msra.mxu0 0.0
        %782 = vmatprep.subr.mxu0 0.0
        %783 = vmatpush1.msra.mxu0 0.0
        %784 = vmatprep.subr.mxu0 0.0
        %785 = vmatpush1.msra.mxu0 0.0
        %786 = vmatprep.subr.mxu0 0.0
        %787 = vmatpush1.msra.mxu0 0.0
        %788 = vmatprep.subr.mxu0 0.0
        %789 = vmatpush1.msra.mxu0 0.0
        %790 = vmatprep.subr.mxu0 0.0
        %791 = vmatpush1.msra.mxu0 0.0
        %792 = vmatprep.subr.mxu0 0.0
        %793 = vmatpush1.msra.mxu0 0.0
        %794 = vmatprep.subr.mxu0 0.0
        %795 = vmatpush1.msra.mxu0 0.0
        %796 = vmatprep.subr.mxu0 0.0
        %797 = vmatpush1.msra.mxu0 0.0
        %798 = vmatprep.subr.mxu0 0.0
        %799 = vmatpush1.msra.mxu0 0.0
        %800 = vmatprep.subr.mxu0 0.0
        %801 = vmatpush1.msra.mxu0 0.0
        %802 = vmatprep.subr.mxu0 0.0
        %803 = vmatpush1.msra.mxu0 0.0
        %804 = vmatprep.subr.mxu0 0.0
        %805 = vmatpush1.msra.mxu0 0.0
        %806 = vmatprep.subr.mxu0 0.0
        %807 = vmatpush1.msra.mxu0 0.0
        %808 = vmatprep.subr.mxu0 0.0
        %809 = vmatpush1.msra.mxu0 0.0
        %810 = vmatprep.mubr.f32.mxu0 0.0
        %811 = vmatmul.mubr.f32.gmra.mrb[0].mxu0 %v744
        %v812 = vpop.f32.mrb[0].mxu0
        %v813 = vadd.f32 0.0, %v812
        %v814 = vpop.f32.mrb[0].mxu0
        %v815 = vadd.f32 0.0, %v814
        %816 = vdwg.mxu0
        %817 = vmatprep.subr.mxu0 %v742
        %818 = vmatpush1.msra.mxu0 %v741
        %819 = vmatprep.subr.mxu0 0.0
        %820 = vmatpush1.msra.mxu0 0.0
        %821 = vmatprep.subr.mxu0 0.0
        %822 = vmatpush1.msra.mxu0 0.0
        %823 = vmatprep.subr.mxu0 0.0
        %824 = vmatpush1.msra.mxu0 0.0
        %825 = vmatprep.subr.mxu0 0.0
        %826 = vmatpush1.msra.mxu0 0.0
        %827 = vmatprep.subr.mxu0 0.0
        %828 = vmatpush1.msra.mxu0 0.0
        %829 = vmatprep.subr.mxu0 0.0
        %830 = vmatpush1.msra.mxu0 0.0
        %831 = vmatprep.subr.mxu0 0.0
        %832 = vmatpush1.msra.mxu0 0.0
        %833 = vmatprep.subr.mxu0 0.0
        %834 = vmatpush1.msra.mxu0 0.0
        %835 = vmatprep.subr.mxu0 0.0
        %836 = vmatpush1.msra.mxu0 0.0
        %837 = vmatprep.subr.mxu0 0.0
        %838 = vmatpush1.msra.mxu0 0.0
        %839 = vmatprep.subr.mxu0 0.0
        %840 = vmatpush1.msra.mxu0 0.0
        %841 = vmatprep.subr.mxu0 0.0
        %842 = vmatpush1.msra.mxu0 0.0
        %843 = vmatprep.subr.mxu0 0.0
        %844 = vmatpush1.msra.mxu0 0.0
        %845 = vmatprep.subr.mxu0 0.0
        %846 = vmatpush1.msra.mxu0 0.0
        %847 = vmatprep.subr.mxu0 0.0
        %848 = vmatpush1.msra.mxu0 0.0
        %849 = vmatprep.subr.mxu0 0.0
        %850 = vmatpush1.msra.mxu0 0.0
        %851 = vmatprep.subr.mxu0 0.0
        %852 = vmatpush1.msra.mxu0 0.0
        %853 = vmatprep.subr.mxu0 0.0
        %854 = vmatpush1.msra.mxu0 0.0
        %855 = vmatprep.subr.mxu0 0.0
        %856 = vmatpush1.msra.mxu0 0.0
        %857 = vmatprep.subr.mxu0 0.0
        %858 = vmatpush1.msra.mxu0 0.0
        %859 = vmatprep.subr.mxu0 0.0
        %860 = vmatpush1.msra.mxu0 0.0
        %861 = vmatprep.subr.mxu0 0.0
        %862 = vmatpush1.msra.mxu0 0.0
        %863 = vmatprep.subr.mxu0 0.0
        %864 = vmatpush1.msra.mxu0 0.0
        %865 = vmatprep.subr.mxu0 0.0
        %866 = vmatpush1.msra.mxu0 0.0
        %867 = vmatprep.subr.mxu0 0.0
        %868 = vmatpush1.msra.mxu0 0.0
        %869 = vmatprep.subr.mxu0 0.0
        %870 = vmatpush1.msra.mxu0 0.0
        %871 = vmatprep.subr.mxu0 0.0
        %872 = vmatpush1.msra.mxu0 0.0
        %873 = vmatprep.subr.mxu0 0.0
        %874 = vmatpush1.msra.mxu0 0.0
        %875 = vmatprep.subr.mxu0 0.0
        %876 = vmatpush1.msra.mxu0 0.0
        %877 = vmatprep.subr.mxu0 0.0
        %878 = vmatpush1.msra.mxu0 0.0
        %879 = vmatprep.subr.mxu0 0.0
        %880 = vmatpush1.msra.mxu0 0.0
        %881 = vmatprep.mubr.f32.mxu0 0.0
        %882 = vmatmul.mubr.f32.gmra.mrb[0].mxu0 %v744
        %v883 = vpop.f32.mrb[0].mxu0
        %v884 = vadd.f32 0.0, %v883
        %v885 = vpop.f32.mrb[0].mxu0
        %v886 = vadd.f32 0.0, %v885
        %887 = vdwg.mxu0
        %v888 = vadd.f32 %v661, %v813
        %v889 = vadd.f32 %v663, %v815
        %v890 = vadd.f32 %v732, %v884
        %v891 = vadd.f32 %v734, %v886
        %v892 = vld [vmem:[%s5] sm:$0xf]
        %v894 = vlaneseq
        %v895 = vshrl.u32 %v894, 7
        %v896 = vsub.s32 0, %v895
        %v897 = vrot.slane %v892, %v896
        %v898 = vlaneseq
        %v899 = vshrl.u32 %v898, 7
        %v900 = vsub.s32 1, %v899
        %v901 = vrot.slane %v892, %v900
        %v902 = vlaneseq
        %v903 = vshrl.u32 %v902, 7
        %v904 = vsub.s32 2, %v903
        %v905 = vrot.slane %v892, %v904
        %v906 = vlaneseq
        %v907 = vshrl.u32 %v906, 7
        %v908 = vsub.s32 3, %v907
        %v909 = vrot.slane %v892, %v908
        %v914 = vadd.f32 %v888, %v897
        %v915 = vadd.f32 %v889, %v901
        %v916 = vadd.f32 %v890, %v905
        %v917 = vadd.f32 %v891, %v909
        %v918 = vmax.f32 %v914, 0.0
        %v919 = vmax.f32 %v915, 0.0
        %v920 = vmax.f32 %v916, 0.0
        %v921 = vmax.f32 %v917, 0.0
        %v922 = vld [vmem:[#allocation6] sm:$0xff]
        %v923 = vld [vmem:[#allocation6 + $0x8] sm:$0xff]
        %v924 = vld [vmem:[#allocation6 + $0x10] sm:$0xff]
        %v925 = vld [vmem:[#allocation6 + $0x18] sm:$0xff]
        %v926 = vld [vmem:[#allocation6 + $0x20] sm:$0xff]
        %v927 = vld [vmem:[#allocation6 + $0x28] sm:$0xff]
        %v928 = vld [vmem:[#allocation6 + $0x30] sm:$0xff]
        %v929 = vld [vmem:[#allocation6 + $0x38] sm:$0xff]
        %v930 = vld [vmem:[#allocation6 + $0x40] sm:$0xff]
        %v931 = vld [vmem:[#allocation6 + $0x48] sm:$0xff]
        %v932 = vld [vmem:[#allocation6 + $0x50] sm:$0xff]
        %v933 = vld [vmem:[#allocation6 + $0x58] sm:$0xff]
        %v934 = vld [vmem:[#allocation6 + $0x60] sm:$0xff]
        %v935 = vld [vmem:[#allocation6 + $0x68] sm:$0xff]
        %v936 = vld [vmem:[#allocation6 + $0x70] sm:$0xff]
        %v937 = vld [vmem:[#allocation6 + $0x78] sm:$0xff]
        %v938 = vld [vmem:[#allocation6 + $0x80] sm:$0xff]
        %v939 = vld [vmem:[#allocation6 + $0x88] sm:$0xff]
        %v940 = vld [vmem:[#allocation6 + $0x90] sm:$0xff]
        %v941 = vld [vmem:[#allocation6 + $0x98] sm:$0xff]
        %v942 = vld [vmem:[#allocation6 + $0xa0] sm:$0xff]
        %v943 = vld [vmem:[#allocation6 + $0xa8] sm:$0xff]
        %v944 = vld [vmem:[#allocation6 + $0xb0] sm:$0xff]
        %v945 = vld [vmem:[#allocation6 + $0xb8] sm:$0xff]
        %v946 = vld [vmem:[#allocation6 + $0xc0] sm:$0xff]
        %v947 = vld [vmem:[#allocation6 + $0xc8] sm:$0xff]
        %v948 = vld [vmem:[#allocation6 + $0xd0] sm:$0xff]
        %v949 = vld [vmem:[#allocation6 + $0xd8] sm:$0xff]
        %v950 = vld [vmem:[#allocation6 + $0xe0] sm:$0xff]
        %v951 = vld [vmem:[#allocation6 + $0xe8] sm:$0xff]
        %v952 = vld [vmem:[#allocation6 + $0xf0] sm:$0xff]
        %v953 = vld [vmem:[#allocation6 + $0xf8] sm:$0xff]
        %v954 = vld [vmem:[#allocation6 + $0x100] sm:$0xff]
        %v955 = vld [vmem:[#allocation6 + $0x108] sm:$0xff]
        %v956 = vld [vmem:[#allocation6 + $0x110] sm:$0xff]
        %v957 = vld [vmem:[#allocation6 + $0x118] sm:$0xff]
        %v958 = vld [vmem:[#allocation6 + $0x120] sm:$0xff]
        %v959 = vld [vmem:[#allocation6 + $0x128] sm:$0xff]
        %v960 = vld [vmem:[#allocation6 + $0x130] sm:$0xff]
        %v961 = vld [vmem:[#allocation6 + $0x138] sm:$0xff]
        %v962 = vld [vmem:[#allocation6 + $0x140] sm:$0xff]
        %v963 = vld [vmem:[#allocation6 + $0x148] sm:$0xff]
        %v964 = vld [vmem:[#allocation6 + $0x150] sm:$0xff]
        %v965 = vld [vmem:[#allocation6 + $0x158] sm:$0xff]
        %v966 = vld [vmem:[#allocation6 + $0x160] sm:$0xff]
        %v967 = vld [vmem:[#allocation6 + $0x168] sm:$0xff]
        %v968 = vld [vmem:[#allocation6 + $0x170] sm:$0xff]
        %v969 = vld [vmem:[#allocation6 + $0x178] sm:$0xff]
        %v970 = vld [vmem:[#allocation6 + $0x180] sm:$0xff]
        %v971 = vld [vmem:[#allocation6 + $0x188] sm:$0xff]
        %v972 = vld [vmem:[#allocation6 + $0x190] sm:$0xff]
        %v973 = vld [vmem:[#allocation6 + $0x198] sm:$0xff]
        %v974 = vld [vmem:[#allocation6 + $0x1a0] sm:$0xff]
        %v975 = vld [vmem:[#allocation6 + $0x1a8] sm:$0xff]
        %v976 = vld [vmem:[#allocation6 + $0x1b0] sm:$0xff]
        %v977 = vld [vmem:[#allocation6 + $0x1b8] sm:$0xff]
        %v978 = vld [vmem:[#allocation6 + $0x1c0] sm:$0xff]
        %v979 = vld [vmem:[#allocation6 + $0x1c8] sm:$0xff]
        %v980 = vld [vmem:[#allocation6 + $0x1d0] sm:$0xff]
        %v981 = vld [vmem:[#allocation6 + $0x1d8] sm:$0xff]
        %v982 = vld [vmem:[#allocation6 + $0x1e0] sm:$0xff]
        %v983 = vld [vmem:[#allocation6 + $0x1e8] sm:$0xff]
        %v984 = vld [vmem:[#allocation6 + $0x1f0] sm:$0xff]
        %v985 = vld [vmem:[#allocation6 + $0x1f8] sm:$0xff]
        %v986 = vld [vmem:[#allocation6 + $0x200] sm:$0xff]
        %v987 = vld [vmem:[#allocation6 + $0x208] sm:$0xff]
        %v988 = vld [vmem:[#allocation6 + $0x210] sm:$0xff]
        %v989 = vld [vmem:[#allocation6 + $0x218] sm:$0xff]
        %v990 = vld [vmem:[#allocation6 + $0x220] sm:$0xff]
        %v991 = vld [vmem:[#allocation6 + $0x228] sm:$0xff]
        %v992 = vld [vmem:[#allocation6 + $0x230] sm:$0xff]
        %v993 = vld [vmem:[#allocation6 + $0x238] sm:$0xff]
        %v994 = vld [vmem:[#allocation6 + $0x240] sm:$0xff]
        %v995 = vld [vmem:[#allocation6 + $0x248] sm:$0xff]
        %v996 = vld [vmem:[#allocation6 + $0x250] sm:$0xff]
        %v997 = vld [vmem:[#allocation6 + $0x258] sm:$0xff]
        %v998 = vld [vmem:[#allocation6 + $0x260] sm:$0xff]
        %v999 = vld [vmem:[#allocation6 + $0x268] sm:$0xff]
        %v1000 = vld [vmem:[#allocation6 + $0x270] sm:$0xff]
        %v1001 = vld [vmem:[#allocation6 + $0x278] sm:$0xff]
        %v1002 = vld [vmem:[#allocation6 + $0x280] sm:$0xff]
        %v1003 = vld [vmem:[#allocation6 + $0x288] sm:$0xff]
        %v1004 = vld [vmem:[#allocation6 + $0x290] sm:$0xff]
        %v1005 = vld [vmem:[#allocation6 + $0x298] sm:$0xff]
        %v1006 = vld [vmem:[#allocation6 + $0x2a0] sm:$0xff]
        %v1007 = vld [vmem:[#allocation6 + $0x2a8] sm:$0xff]
        %v1008 = vld [vmem:[#allocation6 + $0x2b0] sm:$0xff]
        %v1009 = vld [vmem:[#allocation6 + $0x2b8] sm:$0xff]
        %v1010 = vld [vmem:[#allocation6 + $0x2c0] sm:$0xff]
        %v1011 = vld [vmem:[#allocation6 + $0x2c8] sm:$0xff]
        %v1012 = vld [vmem:[#allocation6 + $0x2d0] sm:$0xff]
        %v1013 = vld [vmem:[#allocation6 + $0x2d8] sm:$0xff]
        %v1014 = vld [vmem:[#allocation6 + $0x2e0] sm:$0xff]
        %v1015 = vld [vmem:[#allocation6 + $0x2e8] sm:$0xff]
        %v1016 = vld [vmem:[#allocation6 + $0x2f0] sm:$0xff]
        %v1017 = vld [vmem:[#allocation6 + $0x2f8] sm:$0xff]
        %v1018 = vld [vmem:[#allocation6 + $0x300] sm:$0xff]
        %v1019 = vld [vmem:[#allocation6 + $0x308] sm:$0xff]
        %v1020 = vld [vmem:[#allocation6 + $0x310] sm:$0xff]
        %v1021 = vld [vmem:[#allocation6 + $0x318] sm:$0xff]
        %v1022 = vld [vmem:[#allocation6 + $0x320] sm:$0xff]
        %v1023 = vld [vmem:[#allocation6 + $0x328] sm:$0xff]
        %v1024 = vld [vmem:[#allocation6 + $0x330] sm:$0xff]
        %v1025 = vld [vmem:[#allocation6 + $0x338] sm:$0xff]
        %v1026 = vld [vmem:[#allocation6 + $0x340] sm:$0xff]
        %v1027 = vld [vmem:[#allocation6 + $0x348] sm:$0xff]
        %v1028 = vld [vmem:[#allocation6 + $0x350] sm:$0xff]
        %v1029 = vld [vmem:[#allocation6 + $0x358] sm:$0xff]
        %v1030 = vld [vmem:[#allocation6 + $0x360] sm:$0xff]
        %v1031 = vld [vmem:[#allocation6 + $0x368] sm:$0xff]
        %v1032 = vld [vmem:[#allocation6 + $0x370] sm:$0xff]
        %v1033 = vld [vmem:[#allocation6 + $0x378] sm:$0xff]
        %v1034 = vld [vmem:[#allocation6 + $0x380] sm:$0xff]
        %v1035 = vld [vmem:[#allocation6 + $0x388] sm:$0xff]
        %v1036 = vld [vmem:[#allocation6 + $0x390] sm:$0xff]
        %v1037 = vld [vmem:[#allocation6 + $0x398] sm:$0xff]
        %v1038 = vld [vmem:[#allocation6 + $0x3a0] sm:$0xff]
        %v1039 = vld [vmem:[#allocation6 + $0x3a8] sm:$0xff]
        %v1040 = vld [vmem:[#allocation6 + $0x3b0] sm:$0xff]
        %v1041 = vld [vmem:[#allocation6 + $0x3b8] sm:$0xff]
        %v1042 = vld [vmem:[#allocation6 + $0x3c0] sm:$0xff]
        %v1043 = vld [vmem:[#allocation6 + $0x3c8] sm:$0xff]
        %v1044 = vld [vmem:[#allocation6 + $0x3d0] sm:$0xff]
        %v1045 = vld [vmem:[#allocation6 + $0x3d8] sm:$0xff]
        %v1046 = vld [vmem:[#allocation6 + $0x3e0] sm:$0xff]
        %v1047 = vld [vmem:[#allocation6 + $0x3e8] sm:$0xff]
        %v1048 = vld [vmem:[#allocation6 + $0x3f0] sm:$0xff]
        %v1049 = vld [vmem:[#allocation6 + $0x3f8] sm:$0xff]
        %v1050 = vld [vmem:[#allocation6 + $0x400] sm:$0xff]
        %v1051 = vld [vmem:[#allocation6 + $0x408] sm:$0xff]
        %v1052 = vld [vmem:[#allocation6 + $0x410] sm:$0xff]
        %v1053 = vld [vmem:[#allocation6 + $0x418] sm:$0xff]
        %v1054 = vld [vmem:[#allocation6 + $0x420] sm:$0xff]
        %v1055 = vld [vmem:[#allocation6 + $0x428] sm:$0xff]
        %v1056 = vld [vmem:[#allocation6 + $0x430] sm:$0xff]
        %v1057 = vld [vmem:[#allocation6 + $0x438] sm:$0xff]
        %v1058 = vld [vmem:[#allocation6 + $0x440] sm:$0xff]
        %v1059 = vld [vmem:[#allocation6 + $0x448] sm:$0xff]
        %v1060 = vld [vmem:[#allocation6 + $0x450] sm:$0xff]
        %v1061 = vld [vmem:[#allocation6 + $0x458] sm:$0xff]
        %v1062 = vld [vmem:[#allocation6 + $0x460] sm:$0xff]
        %v1063 = vld [vmem:[#allocation6 + $0x468] sm:$0xff]
        %v1064 = vld [vmem:[#allocation6 + $0x470] sm:$0xff]
        %v1065 = vld [vmem:[#allocation6 + $0x478] sm:$0xff]
        %v1066 = vld [vmem:[#allocation6 + $0x480] sm:$0xff]
        %v1067 = vld [vmem:[#allocation6 + $0x488] sm:$0xff]
        %v1068 = vld [vmem:[#allocation6 + $0x490] sm:$0xff]
        %v1069 = vld [vmem:[#allocation6 + $0x498] sm:$0xff]
        %v1070 = vld [vmem:[#allocation6 + $0x4a0] sm:$0xff]
        %v1071 = vld [vmem:[#allocation6 + $0x4a8] sm:$0xff]
        %v1072 = vld [vmem:[#allocation6 + $0x4b0] sm:$0xff]
        %v1073 = vld [vmem:[#allocation6 + $0x4b8] sm:$0xff]
        %v1074 = vld [vmem:[#allocation6 + $0x4c0] sm:$0xff]
        %v1075 = vld [vmem:[#allocation6 + $0x4c8] sm:$0xff]
        %v1076 = vld [vmem:[#allocation6 + $0x4d0] sm:$0xff]
        %v1077 = vld [vmem:[#allocation6 + $0x4d8] sm:$0xff]
        %v1078 = vld [vmem:[#allocation6 + $0x4e0] sm:$0xff]
        %v1079 = vld [vmem:[#allocation6 + $0x4e8] sm:$0xff]
        %v1080 = vld [vmem:[#allocation6 + $0x4f0] sm:$0xff]
        %v1081 = vld [vmem:[#allocation6 + $0x4f8] sm:$0xff]
        %v1082 = vld [vmem:[#allocation6 + $0x500] sm:$0xff]
        %v1083 = vld [vmem:[#allocation6 + $0x508] sm:$0xff]
        %v1084 = vld [vmem:[#allocation6 + $0x510] sm:$0xff]
        %v1085 = vld [vmem:[#allocation6 + $0x518] sm:$0xff]
        %v1086 = vld [vmem:[#allocation6 + $0x520] sm:$0xff]
        %v1087 = vld [vmem:[#allocation6 + $0x528] sm:$0xff]
        %v1088 = vld [vmem:[#allocation6 + $0x530] sm:$0xff]
        %v1089 = vld [vmem:[#allocation6 + $0x538] sm:$0xff]
        %v1090 = vld [vmem:[#allocation6 + $0x540] sm:$0xff]
        %v1091 = vld [vmem:[#allocation6 + $0x548] sm:$0xff]
        %v1092 = vld [vmem:[#allocation6 + $0x550] sm:$0xff]
        %v1093 = vld [vmem:[#allocation6 + $0x558] sm:$0xff]
        %v1094 = vld [vmem:[#allocation6 + $0x560] sm:$0xff]
        %v1095 = vld [vmem:[#allocation6 + $0x568] sm:$0xff]
        %v1096 = vld [vmem:[#allocation6 + $0x570] sm:$0xff]
        %v1097 = vld [vmem:[#allocation6 + $0x578] sm:$0xff]
        %v1098 = vld [vmem:[#allocation6 + $0x580] sm:$0xff]
        %v1099 = vld [vmem:[#allocation6 + $0x588] sm:$0xff]
        %v1100 = vld [vmem:[#allocation6 + $0x590] sm:$0xff]
        %v1101 = vld [vmem:[#allocation6 + $0x598] sm:$0xff]
        %v1102 = vld [vmem:[#allocation6 + $0x5a0] sm:$0xff]
        %v1103 = vld [vmem:[#allocation6 + $0x5a8] sm:$0xff]
        %v1104 = vld [vmem:[#allocation6 + $0x5b0] sm:$0xff]
        %v1105 = vld [vmem:[#allocation6 + $0x5b8] sm:$0xff]
        %v1106 = vld [vmem:[#allocation6 + $0x5c0] sm:$0xff]
        %v1107 = vld [vmem:[#allocation6 + $0x5c8] sm:$0xff]
        %v1108 = vld [vmem:[#allocation6 + $0x5d0] sm:$0xff]
        %v1109 = vld [vmem:[#allocation6 + $0x5d8] sm:$0xff]
        %v1110 = vld [vmem:[#allocation6 + $0x5e0] sm:$0xff]
        %v1111 = vld [vmem:[#allocation6 + $0x5e8] sm:$0xff]
        %v1112 = vld [vmem:[#allocation6 + $0x5f0] sm:$0xff]
        %v1113 = vld [vmem:[#allocation6 + $0x5f8] sm:$0xff]
        %v1114 = vld [vmem:[#allocation6 + $0x600] sm:$0xff]
        %v1115 = vld [vmem:[#allocation6 + $0x608] sm:$0xff]
        %v1116 = vld [vmem:[#allocation6 + $0x610] sm:$0xff]
        %v1117 = vld [vmem:[#allocation6 + $0x618] sm:$0xff]
        %v1118 = vld [vmem:[#allocation6 + $0x620] sm:$0xff]
        %v1119 = vld [vmem:[#allocation6 + $0x628] sm:$0xff]
        %v1120 = vld [vmem:[#allocation6 + $0x630] sm:$0xff]
        %v1121 = vld [vmem:[#allocation6 + $0x638] sm:$0xff]
        %v1122 = vld [vmem:[#allocation6 + $0x640] sm:$0xff]
        %v1123 = vld [vmem:[#allocation6 + $0x648] sm:$0xff]
        %v1124 = vld [vmem:[#allocation6 + $0x650] sm:$0xff]
        %v1125 = vld [vmem:[#allocation6 + $0x658] sm:$0xff]
        %v1126 = vld [vmem:[#allocation6 + $0x660] sm:$0xff]
        %v1127 = vld [vmem:[#allocation6 + $0x668] sm:$0xff]
        %v1128 = vld [vmem:[#allocation6 + $0x670] sm:$0xff]
        %v1129 = vld [vmem:[#allocation6 + $0x678] sm:$0xff]
        %v1130 = vld [vmem:[#allocation6 + $0x680] sm:$0xff]
        %v1131 = vld [vmem:[#allocation6 + $0x688] sm:$0xff]
        %v1132 = vld [vmem:[#allocation6 + $0x690] sm:$0xff]
        %v1133 = vld [vmem:[#allocation6 + $0x698] sm:$0xff]
        %v1134 = vld [vmem:[#allocation6 + $0x6a0] sm:$0xff]
        %v1135 = vld [vmem:[#allocation6 + $0x6a8] sm:$0xff]
        %v1136 = vld [vmem:[#allocation6 + $0x6b0] sm:$0xff]
        %v1137 = vld [vmem:[#allocation6 + $0x6b8] sm:$0xff]
        %v1138 = vld [vmem:[#allocation6 + $0x6c0] sm:$0xff]
        %v1139 = vld [vmem:[#allocation6 + $0x6c8] sm:$0xff]
        %v1140 = vld [vmem:[#allocation6 + $0x6d0] sm:$0xff]
        %v1141 = vld [vmem:[#allocation6 + $0x6d8] sm:$0xff]
        %v1142 = vld [vmem:[#allocation6 + $0x6e0] sm:$0xff]
        %v1143 = vld [vmem:[#allocation6 + $0x6e8] sm:$0xff]
        %v1144 = vld [vmem:[#allocation6 + $0x6f0] sm:$0xff]
        %v1145 = vld [vmem:[#allocation6 + $0x6f8] sm:$0xff]
        %v1146 = vld [vmem:[#allocation6 + $0x700] sm:$0xff]
        %v1147 = vld [vmem:[#allocation6 + $0x708] sm:$0xff]
        %v1148 = vld [vmem:[#allocation6 + $0x710] sm:$0xff]
        %v1149 = vld [vmem:[#allocation6 + $0x718] sm:$0xff]
        %v1150 = vld [vmem:[#allocation6 + $0x720] sm:$0xff]
        %v1151 = vld [vmem:[#allocation6 + $0x728] sm:$0xff]
        %v1152 = vld [vmem:[#allocation6 + $0x730] sm:$0xff]
        %v1153 = vld [vmem:[#allocation6 + $0x738] sm:$0xff]
        %v1154 = vld [vmem:[#allocation6 + $0x740] sm:$0xff]
        %v1155 = vld [vmem:[#allocation6 + $0x748] sm:$0xff]
        %v1156 = vld [vmem:[#allocation6 + $0x750] sm:$0xff]
        %v1157 = vld [vmem:[#allocation6 + $0x758] sm:$0xff]
        %v1158 = vld [vmem:[#allocation6 + $0x760] sm:$0xff]
        %v1159 = vld [vmem:[#allocation6 + $0x768] sm:$0xff]
        %v1160 = vld [vmem:[#allocation6 + $0x770] sm:$0xff]
        %v1161 = vld [vmem:[#allocation6 + $0x778] sm:$0xff]
        %v1162 = vld [vmem:[#allocation6 + $0x780] sm:$0xff]
        %v1163 = vld [vmem:[#allocation6 + $0x788] sm:$0xff]
        %v1164 = vld [vmem:[#allocation6 + $0x790] sm:$0xff]
        %v1165 = vld [vmem:[#allocation6 + $0x798] sm:$0xff]
        %v1166 = vld [vmem:[#allocation6 + $0x7a0] sm:$0xff]
        %v1167 = vld [vmem:[#allocation6 + $0x7a8] sm:$0xff]
        %v1168 = vld [vmem:[#allocation6 + $0x7b0] sm:$0xff]
        %v1169 = vld [vmem:[#allocation6 + $0x7b8] sm:$0xff]
        %v1170 = vld [vmem:[#allocation6 + $0x7c0] sm:$0xff]
        %v1171 = vld [vmem:[#allocation6 + $0x7c8] sm:$0xff]
        %v1172 = vld [vmem:[#allocation6 + $0x7d0] sm:$0xff]
        %v1173 = vld [vmem:[#allocation6 + $0x7d8] sm:$0xff]
        %v1174 = vld [vmem:[#allocation6 + $0x7e0] sm:$0xff]
        %v1175 = vld [vmem:[#allocation6 + $0x7e8] sm:$0xff]
        %v1176 = vld [vmem:[#allocation6 + $0x7f0] sm:$0xff]
        %v1177 = vld [vmem:[#allocation6 + $0x7f8] sm:$0xff]
        %v1178 = vld [vmem:[%s7] sm:$0xf]
        %v1180 = vlaneseq
        %v1181 = vshrl.u32 %v1180, 7
        %v1182 = vsub.s32 0, %v1181
        %v1183 = vrot.slane %v1178, %v1182
        %v1184 = vlaneseq
        %v1185 = vshrl.u32 %v1184, 7
        %v1186 = vsub.s32 1, %v1185
        %v1187 = vrot.slane %v1178, %v1186
        %v1188 = vlaneseq
        %v1189 = vshrl.u32 %v1188, 7
        %v1190 = vsub.s32 2, %v1189
        %v1191 = vrot.slane %v1178, %v1190
        %v1192 = vlaneseq
        %v1193 = vshrl.u32 %v1192, 7
        %v1194 = vsub.s32 3, %v1193
        %v1195 = vrot.slane %v1178, %v1194
        %1200 = vmatprep.subr.mxu0 %v923
        %1201 = vmatpush1.msra.mxu0 %v922
        %1202 = vmatprep.subr.mxu0 %v927
        %1203 = vmatpush1.msra.mxu0 %v926
        %1204 = vmatprep.subr.mxu0 %v931
        %1205 = vmatpush1.msra.mxu0 %v930
        %1206 = vmatprep.subr.mxu0 %v935
        %1207 = vmatpush1.msra.mxu0 %v934
        %1208 = vmatprep.subr.mxu0 %v939
        %1209 = vmatpush1.msra.mxu0 %v938
        %1210 = vmatprep.subr.mxu0 %v943
        %1211 = vmatpush1.msra.mxu0 %v942
        %1212 = vmatprep.subr.mxu0 %v947
        %1213 = vmatpush1.msra.mxu0 %v946
        %1214 = vmatprep.subr.mxu0 %v951
        %1215 = vmatpush1.msra.mxu0 %v950
        %1216 = vmatprep.subr.mxu0 %v955
        %1217 = vmatpush1.msra.mxu0 %v954
        %1218 = vmatprep.subr.mxu0 %v959
        %1219 = vmatpush1.msra.mxu0 %v958
        %1220 = vmatprep.subr.mxu0 %v963
        %1221 = vmatpush1.msra.mxu0 %v962
        %1222 = vmatprep.subr.mxu0 %v967
        %1223 = vmatpush1.msra.mxu0 %v966
        %1224 = vmatprep.subr.mxu0 %v971
        %1225 = vmatpush1.msra.mxu0 %v970
        %1226 = vmatprep.subr.mxu0 %v975
        %1227 = vmatpush1.msra.mxu0 %v974
        %1228 = vmatprep.subr.mxu0 %v979
        %1229 = vmatpush1.msra.mxu0 %v978
        %1230 = vmatprep.subr.mxu0 %v983
        %1231 = vmatpush1.msra.mxu0 %v982
        %1232 = vmatprep.subr.mxu0 %v987
        %1233 = vmatpush1.msra.mxu0 %v986
        %1234 = vmatprep.subr.mxu0 %v991
        %1235 = vmatpush1.msra.mxu0 %v990
        %1236 = vmatprep.subr.mxu0 %v995
        %1237 = vmatpush1.msra.mxu0 %v994
        %1238 = vmatprep.subr.mxu0 %v999
        %1239 = vmatpush1.msra.mxu0 %v998
        %1240 = vmatprep.subr.mxu0 %v1003
        %1241 = vmatpush1.msra.mxu0 %v1002
        %1242 = vmatprep.subr.mxu0 %v1007
        %1243 = vmatpush1.msra.mxu0 %v1006
        %1244 = vmatprep.subr.mxu0 %v1011
        %1245 = vmatpush1.msra.mxu0 %v1010
        %1246 = vmatprep.subr.mxu0 %v1015
        %1247 = vmatpush1.msra.mxu0 %v1014
        %1248 = vmatprep.subr.mxu0 %v1019
        %1249 = vmatpush1.msra.mxu0 %v1018
        %1250 = vmatprep.subr.mxu0 %v1023
        %1251 = vmatpush1.msra.mxu0 %v1022
        %1252 = vmatprep.subr.mxu0 %v1027
        %1253 = vmatpush1.msra.mxu0 %v1026
        %1254 = vmatprep.subr.mxu0 %v1031
        %1255 = vmatpush1.msra.mxu0 %v1030
        %1256 = vmatprep.subr.mxu0 %v1035
        %1257 = vmatpush1.msra.mxu0 %v1034
        %1258 = vmatprep.subr.mxu0 %v1039
        %1259 = vmatpush1.msra.mxu0 %v1038
        %1260 = vmatprep.subr.mxu0 %v1043
        %1261 = vmatpush1.msra.mxu0 %v1042
        %1262 = vmatprep.subr.mxu0 %v1047
        %1263 = vmatpush1.msra.mxu0 %v1046
        %1264 = vmatprep.mubr.f32.mxu0 %v919
        %1265 = vmatmul.mubr.f32.gmra.mrb[0].mxu0 %v918
        %v1266 = vpop.f32.mrb[0].mxu0
        %v1267 = vadd.f32 %v1183, %v1266
        %v1268 = vpop.f32.mrb[0].mxu0
        %v1269 = vadd.f32 %v1187, %v1268
        %1270 = vdwg.mxu0
        %1271 = vmatprep.subr.mxu0 %v1051
        %1272 = vmatpush1.msra.mxu0 %v1050
        %1273 = vmatprep.subr.mxu0 %v1055
        %1274 = vmatpush1.msra.mxu0 %v1054
        %1275 = vmatprep.subr.mxu0 %v1059
        %1276 = vmatpush1.msra.mxu0 %v1058
        %1277 = vmatprep.subr.mxu0 %v1063
        %1278 = vmatpush1.msra.mxu0 %v1062
        %1279 = vmatprep.subr.mxu0 %v1067
        %1280 = vmatpush1.msra.mxu0 %v1066
        %1281 = vmatprep.subr.mxu0 %v1071
        %1282 = vmatpush1.msra.mxu0 %v1070
        %1283 = vmatprep.subr.mxu0 %v1075
        %1284 = vmatpush1.msra.mxu0 %v1074
        %1285 = vmatprep.subr.mxu0 %v1079
        %1286 = vmatpush1.msra.mxu0 %v1078
        %1287 = vmatprep.subr.mxu0 %v1083
        %1288 = vmatpush1.msra.mxu0 %v1082
        %1289 = vmatprep.subr.mxu0 %v1087
        %1290 = vmatpush1.msra.mxu0 %v1086
        %1291 = vmatprep.subr.mxu0 %v1091
        %1292 = vmatpush1.msra.mxu0 %v1090
        %1293 = vmatprep.subr.mxu0 %v1095
        %1294 = vmatpush1.msra.mxu0 %v1094
        %1295 = vmatprep.subr.mxu0 %v1099
        %1296 = vmatpush1.msra.mxu0 %v1098
        %1297 = vmatprep.subr.mxu0 %v1103
        %1298 = vmatpush1.msra.mxu0 %v1102
        %1299 = vmatprep.subr.mxu0 %v1107
        %1300 = vmatpush1.msra.mxu0 %v1106
        %1301 = vmatprep.subr.mxu0 %v1111
        %1302 = vmatpush1.msra.mxu0 %v1110
        %1303 = vmatprep.subr.mxu0 %v1115
        %1304 = vmatpush1.msra.mxu0 %v1114
        %1305 = vmatprep.subr.mxu0 %v1119
        %1306 = vmatpush1.msra.mxu0 %v1118
        %1307 = vmatprep.subr.mxu0 %v1123
        %1308 = vmatpush1.msra.mxu0 %v1122
        %1309 = vmatprep.subr.mxu0 %v1127
        %1310 = vmatpush1.msra.mxu0 %v1126
        %1311 = vmatprep.subr.mxu0 %v1131
        %1312 = vmatpush1.msra.mxu0 %v1130
        %1313 = vmatprep.subr.mxu0 %v1135
        %1314 = vmatpush1.msra.mxu0 %v1134
        %1315 = vmatprep.subr.mxu0 %v1139
        %1316 = vmatpush1.msra.mxu0 %v1138
        %1317 = vmatprep.subr.mxu0 %v1143
        %1318 = vmatpush1.msra.mxu0 %v1142
        %1319 = vmatprep.subr.mxu0 %v1147
        %1320 = vmatpush1.msra.mxu0 %v1146
        %1321 = vmatprep.subr.mxu0 %v1151
        %1322 = vmatpush1.msra.mxu0 %v1150
        %1323 = vmatprep.subr.mxu0 %v1155
        %1324 = vmatpush1.msra.mxu0 %v1154
        %1325 = vmatprep.subr.mxu0 %v1159
        %1326 = vmatpush1.msra.mxu0 %v1158
        %1327 = vmatprep.subr.mxu0 %v1163
        %1328 = vmatpush1.msra.mxu0 %v1162
        %1329 = vmatprep.subr.mxu0 %v1167
        %1330 = vmatpush1.msra.mxu0 %v1166
        %1331 = vmatprep.subr.mxu0 %v1171
        %1332 = vmatpush1.msra.mxu0 %v1170
        %1333 = vmatprep.subr.mxu0 %v1175
        %1334 = vmatpush1.msra.mxu0 %v1174
        %1335 = vmatprep.mubr.f32.mxu0 %v921
        %1336 = vmatmul.mubr.f32.gmra.mrb[0].mxu0 %v920
        %v1337 = vpop.f32.mrb[0].mxu0
        %v1338 = vadd.f32 %v1267, %v1337
        %v1339 = vpop.f32.mrb[0].mxu0
        %v1340 = vadd.f32 %v1269, %v1339
        %1341 = vdwg.mxu0
        %1342 = vmatprep.subr.mxu0 %v925
        %1343 = vmatpush1.msra.mxu0 %v924
        %1344 = vmatprep.subr.mxu0 %v929
        %1345 = vmatpush1.msra.mxu0 %v928
        %1346 = vmatprep.subr.mxu0 %v933
        %1347 = vmatpush1.msra.mxu0 %v932
        %1348 = vmatprep.subr.mxu0 %v937
        %1349 = vmatpush1.msra.mxu0 %v936
        %1350 = vmatprep.subr.mxu0 %v941
        %1351 = vmatpush1.msra.mxu0 %v940
        %1352 = vmatprep.subr.mxu0 %v945
        %1353 = vmatpush1.msra.mxu0 %v944
        %1354 = vmatprep.subr.mxu0 %v949
        %1355 = vmatpush1.msra.mxu0 %v948
        %1356 = vmatprep.subr.mxu0 %v953
        %1357 = vmatpush1.msra.mxu0 %v952
        %1358 = vmatprep.subr.mxu0 %v957
        %1359 = vmatpush1.msra.mxu0 %v956
        %1360 = vmatprep.subr.mxu0 %v961
        %1361 = vmatpush1.msra.mxu0 %v960
        %1362 = vmatprep.subr.mxu0 %v965
        %1363 = vmatpush1.msra.mxu0 %v964
        %1364 = vmatprep.subr.mxu0 %v969
        %1365 = vmatpush1.msra.mxu0 %v968
        %1366 = vmatprep.subr.mxu0 %v973
        %1367 = vmatpush1.msra.mxu0 %v972
        %1368 = vmatprep.subr.mxu0 %v977
        %1369 = vmatpush1.msra.mxu0 %v976
        %1370 = vmatprep.subr.mxu0 %v981
        %1371 = vmatpush1.msra.mxu0 %v980
        %1372 = vmatprep.subr.mxu0 %v985
        %1373 = vmatpush1.msra.mxu0 %v984
        %1374 = vmatprep.subr.mxu0 %v989
        %1375 = vmatpush1.msra.mxu0 %v988
        %1376 = vmatprep.subr.mxu0 %v993
        %1377 = vmatpush1.msra.mxu0 %v992
        %1378 = vmatprep.subr.mxu0 %v997
        %1379 = vmatpush1.msra.mxu0 %v996
        %1380 = vmatprep.subr.mxu0 %v1001
        %1381 = vmatpush1.msra.mxu0 %v1000
        %1382 = vmatprep.subr.mxu0 %v1005
        %1383 = vmatpush1.msra.mxu0 %v1004
        %1384 = vmatprep.subr.mxu0 %v1009
        %1385 = vmatpush1.msra.mxu0 %v1008
        %1386 = vmatprep.subr.mxu0 %v1013
        %1387 = vmatpush1.msra.mxu0 %v1012
        %1388 = vmatprep.subr.mxu0 %v1017
        %1389 = vmatpush1.msra.mxu0 %v1016
        %1390 = vmatprep.subr.mxu0 %v1021
        %1391 = vmatpush1.msra.mxu0 %v1020
        %1392 = vmatprep.subr.mxu0 %v1025
        %1393 = vmatpush1.msra.mxu0 %v1024
        %1394 = vmatprep.subr.mxu0 %v1029
        %1395 = vmatpush1.msra.mxu0 %v1028
        %1396 = vmatprep.subr.mxu0 %v1033
        %1397 = vmatpush1.msra.mxu0 %v1032
        %1398 = vmatprep.subr.mxu0 %v1037
        %1399 = vmatpush1.msra.mxu0 %v1036
        %1400 = vmatprep.subr.mxu0 %v1041
        %1401 = vmatpush1.msra.mxu0 %v1040
        %1402 = vmatprep.subr.mxu0 %v1045
        %1403 = vmatpush1.msra.mxu0 %v1044
        %1404 = vmatprep.subr.mxu0 %v1049
        %1405 = vmatpush1.msra.mxu0 %v1048
        %1406 = vmatprep.mubr.f32.mxu0 %v919
        %1407 = vmatmul.mubr.f32.gmra.mrb[0].mxu0 %v918
        %v1408 = vpop.f32.mrb[0].mxu0
        %v1409 = vadd.f32 %v1191, %v1408
        %v1410 = vpop.f32.mrb[0].mxu0
        %v1411 = vadd.f32 %v1195, %v1410
        %1412 = vdwg.mxu0
        %1413 = vmatprep.subr.mxu0 %v1053
        %1414 = vmatpush1.msra.mxu0 %v1052
        %1415 = vmatprep.subr.mxu0 %v1057
        %1416 = vmatpush1.msra.mxu0 %v1056
        %1417 = vmatprep.subr.mxu0 %v1061
        %1418 = vmatpush1.msra.mxu0 %v1060
        %1419 = vmatprep.subr.mxu0 %v1065
        %1420 = vmatpush1.msra.mxu0 %v1064
        %1421 = vmatprep.subr.mxu0 %v1069
        %1422 = vmatpush1.msra.mxu0 %v1068
        %1423 = vmatprep.subr.mxu0 %v1073
        %1424 = vmatpush1.msra.mxu0 %v1072
        %1425 = vmatprep.subr.mxu0 %v1077
        %1426 = vmatpush1.msra.mxu0 %v1076
        %1427 = vmatprep.subr.mxu0 %v1081
        %1428 = vmatpush1.msra.mxu0 %v1080
        %1429 = vmatprep.subr.mxu0 %v1085
        %1430 = vmatpush1.msra.mxu0 %v1084
        %1431 = vmatprep.subr.mxu0 %v1089
        %1432 = vmatpush1.msra.mxu0 %v1088
        %1433 = vmatprep.subr.mxu0 %v1093
        %1434 = vmatpush1.msra.mxu0 %v1092
        %1435 = vmatprep.subr.mxu0 %v1097
        %1436 = vmatpush1.msra.mxu0 %v1096
        %1437 = vmatprep.subr.mxu0 %v1101
        %1438 = vmatpush1.msra.mxu0 %v1100
        %1439 = vmatprep.subr.mxu0 %v1105
        %1440 = vmatpush1.msra.mxu0 %v1104
        %1441 = vmatprep.subr.mxu0 %v1109
        %1442 = vmatpush1.msra.mxu0 %v1108
        %1443 = vmatprep.subr.mxu0 %v1113
        %1444 = vmatpush1.msra.mxu0 %v1112
        %1445 = vmatprep.subr.mxu0 %v1117
        %1446 = vmatpush1.msra.mxu0 %v1116
        %1447 = vmatprep.subr.mxu0 %v1121
        %1448 = vmatpush1.msra.mxu0 %v1120
        %1449 = vmatprep.subr.mxu0 %v1125
        %1450 = vmatpush1.msra.mxu0 %v1124
        %1451 = vmatprep.subr.mxu0 %v1129
        %1452 = vmatpush1.msra.mxu0 %v1128
        %1453 = vmatprep.subr.mxu0 %v1133
        %1454 = vmatpush1.msra.mxu0 %v1132
        %1455 = vmatprep.subr.mxu0 %v1137
        %1456 = vmatpush1.msra.mxu0 %v1136
        %1457 = vmatprep.subr.mxu0 %v1141
        %1458 = vmatpush1.msra.mxu0 %v1140
        %1459 = vmatprep.subr.mxu0 %v1145
        %1460 = vmatpush1.msra.mxu0 %v1144
        %1461 = vmatprep.subr.mxu0 %v1149
        %1462 = vmatpush1.msra.mxu0 %v1148
        %1463 = vmatprep.subr.mxu0 %v1153
        %1464 = vmatpush1.msra.mxu0 %v1152
        %1465 = vmatprep.subr.mxu0 %v1157
        %1466 = vmatpush1.msra.mxu0 %v1156
        %1467 = vmatprep.subr.mxu0 %v1161
        %1468 = vmatpush1.msra.mxu0 %v1160
        %1469 = vmatprep.subr.mxu0 %v1165
        %1470 = vmatpush1.msra.mxu0 %v1164
        %1471 = vmatprep.subr.mxu0 %v1169
        %1472 = vmatpush1.msra.mxu0 %v1168
        %1473 = vmatprep.subr.mxu0 %v1173
        %1474 = vmatpush1.msra.mxu0 %v1172
        %1475 = vmatprep.subr.mxu0 %v1177
        %1476 = vmatpush1.msra.mxu0 %v1176
        %1477 = vmatprep.mubr.f32.mxu0 %v921
        %1478 = vmatmul.mubr.f32.gmra.mrb[0].mxu0 %v920
        %v1479 = vpop.f32.mrb[0].mxu0
        %v1480 = vadd.f32 %v1409, %v1479
        %v1481 = vpop.f32.mrb[0].mxu0
        %v1482 = vadd.f32 %v1411, %v1481
        %1483 = vdwg.mxu0
        %v1484 = vmax.f32 %v1338, 0.0
        %v1485 = vmax.f32 %v1340, 0.0
        %v1486 = vmax.f32 %v1480, 0.0
        %v1487 = vmax.f32 %v1482, 0.0
        %v1488 = vld [vmem:[#allocation8] sm:$0xff]
        %v1489 = vld [vmem:[#allocation8 + $0x8] sm:$0xff]
        %v1490 = vld [vmem:[#allocation8 + $0x10] sm:$0xff]
        %v1491 = vld [vmem:[#allocation8 + $0x18] sm:$0xff]
        %v1492 = vld [vmem:[#allocation8 + $0x20] sm:$0xff]
        %v1493 = vld [vmem:[#allocation8 + $0x28] sm:$0xff]
        %v1494 = vld [vmem:[#allocation8 + $0x30] sm:$0xff]
        %v1495 = vld [vmem:[#allocation8 + $0x38] sm:$0xff]
        %v1496 = vld [vmem:[#allocation8 + $0x40] sm:$0xff]
        %v1497 = vld [vmem:[#allocation8 + $0x48] sm:$0xff]
        %v1498 = vld [vmem:[#allocation8 + $0x50] sm:$0xff]
        %v1499 = vld [vmem:[#allocation8 + $0x58] sm:$0xff]
        %v1500 = vld [vmem:[#allocation8 + $0x60] sm:$0xff]
        %v1501 = vld [vmem:[#allocation8 + $0x68] sm:$0xff]
        %v1502 = vld [vmem:[#allocation8 + $0x70] sm:$0xff]
        %v1503 = vld [vmem:[#allocation8 + $0x78] sm:$0xff]
        %v1504 = vld [vmem:[#allocation8 + $0x80] sm:$0xff]
        %v1505 = vld [vmem:[#allocation8 + $0x88] sm:$0xff]
        %v1506 = vld [vmem:[#allocation8 + $0x90] sm:$0xff]
        %v1507 = vld [vmem:[#allocation8 + $0x98] sm:$0xff]
        %v1508 = vld [vmem:[#allocation8 + $0xa0] sm:$0xff]
        %v1509 = vld [vmem:[#allocation8 + $0xa8] sm:$0xff]
        %v1510 = vld [vmem:[#allocation8 + $0xb0] sm:$0xff]
        %v1511 = vld [vmem:[#allocation8 + $0xb8] sm:$0xff]
        %v1512 = vld [vmem:[#allocation8 + $0xc0] sm:$0xff]
        %v1513 = vld [vmem:[#allocation8 + $0xc8] sm:$0xff]
        %v1514 = vld [vmem:[#allocation8 + $0xd0] sm:$0xff]
        %v1515 = vld [vmem:[#allocation8 + $0xd8] sm:$0xff]
        %v1516 = vld [vmem:[#allocation8 + $0xe0] sm:$0xff]
        %v1517 = vld [vmem:[#allocation8 + $0xe8] sm:$0xff]
        %v1518 = vld [vmem:[#allocation8 + $0xf0] sm:$0xff]
        %v1519 = vld [vmem:[#allocation8 + $0xf8] sm:$0xff]
        %v1520 = vld [vmem:[#allocation8 + $0x100] sm:$0xff]
        %v1521 = vld [vmem:[#allocation8 + $0x108] sm:$0xff]
        %v1522 = vld [vmem:[#allocation8 + $0x110] sm:$0xff]
        %v1523 = vld [vmem:[#allocation8 + $0x118] sm:$0xff]
        %v1524 = vld [vmem:[#allocation8 + $0x120] sm:$0xff]
        %v1525 = vld [vmem:[#allocation8 + $0x128] sm:$0xff]
        %v1526 = vld [vmem:[#allocation8 + $0x130] sm:$0xff]
        %v1527 = vld [vmem:[#allocation8 + $0x138] sm:$0xff]
        %v1528 = vld [vmem:[#allocation8 + $0x140] sm:$0xff]
        %v1529 = vld [vmem:[#allocation8 + $0x148] sm:$0xff]
        %v1530 = vld [vmem:[#allocation8 + $0x150] sm:$0xff]
        %v1531 = vld [vmem:[#allocation8 + $0x158] sm:$0xff]
        %v1532 = vld [vmem:[#allocation8 + $0x160] sm:$0xff]
        %v1533 = vld [vmem:[#allocation8 + $0x168] sm:$0xff]
        %v1534 = vld [vmem:[#allocation8 + $0x170] sm:$0xff]
        %v1535 = vld [vmem:[#allocation8 + $0x178] sm:$0xff]
        %v1536 = vld [vmem:[#allocation8 + $0x180] sm:$0xff]
        %v1537 = vld [vmem:[#allocation8 + $0x188] sm:$0xff]
        %v1538 = vld [vmem:[#allocation8 + $0x190] sm:$0xff]
        %v1539 = vld [vmem:[#allocation8 + $0x198] sm:$0xff]
        %v1540 = vld [vmem:[#allocation8 + $0x1a0] sm:$0xff]
        %v1541 = vld [vmem:[#allocation8 + $0x1a8] sm:$0xff]
        %v1542 = vld [vmem:[#allocation8 + $0x1b0] sm:$0xff]
        %v1543 = vld [vmem:[#allocation8 + $0x1b8] sm:$0xff]
        %v1544 = vld [vmem:[#allocation8 + $0x1c0] sm:$0xff]
        %v1545 = vld [vmem:[#allocation8 + $0x1c8] sm:$0xff]
        %v1546 = vld [vmem:[#allocation8 + $0x1d0] sm:$0xff]
        %v1547 = vld [vmem:[#allocation8 + $0x1d8] sm:$0xff]
        %v1548 = vld [vmem:[#allocation8 + $0x1e0] sm:$0xff]
        %v1549 = vld [vmem:[#allocation8 + $0x1e8] sm:$0xff]
        %v1550 = vld [vmem:[#allocation8 + $0x1f0] sm:$0xff]
        %v1551 = vld [vmem:[#allocation8 + $0x1f8] sm:$0xff]
        %v1552 = vld [vmem:[#allocation8 + $0x200] sm:$0xff]
        %v1553 = vld [vmem:[#allocation8 + $0x208] sm:$0xff]
        %v1554 = vld [vmem:[#allocation8 + $0x210] sm:$0xff]
        %v1555 = vld [vmem:[#allocation8 + $0x218] sm:$0xff]
        %v1556 = vld [vmem:[#allocation8 + $0x220] sm:$0xff]
        %v1557 = vld [vmem:[#allocation8 + $0x228] sm:$0xff]
        %v1558 = vld [vmem:[#allocation8 + $0x230] sm:$0xff]
        %v1559 = vld [vmem:[#allocation8 + $0x238] sm:$0xff]
        %v1560 = vld [vmem:[#allocation8 + $0x240] sm:$0xff]
        %v1561 = vld [vmem:[#allocation8 + $0x248] sm:$0xff]
        %v1562 = vld [vmem:[#allocation8 + $0x250] sm:$0xff]
        %v1563 = vld [vmem:[#allocation8 + $0x258] sm:$0xff]
        %v1564 = vld [vmem:[#allocation8 + $0x260] sm:$0xff]
        %v1565 = vld [vmem:[#allocation8 + $0x268] sm:$0xff]
        %v1566 = vld [vmem:[#allocation8 + $0x270] sm:$0xff]
        %v1567 = vld [vmem:[#allocation8 + $0x278] sm:$0xff]
        %v1568 = vld [vmem:[#allocation8 + $0x280] sm:$0xff]
        %v1569 = vld [vmem:[#allocation8 + $0x288] sm:$0xff]
        %v1570 = vld [vmem:[#allocation8 + $0x290] sm:$0xff]
        %v1571 = vld [vmem:[#allocation8 + $0x298] sm:$0xff]
        %v1572 = vld [vmem:[#allocation8 + $0x2a0] sm:$0xff]
        %v1573 = vld [vmem:[#allocation8 + $0x2a8] sm:$0xff]
        %v1574 = vld [vmem:[#allocation8 + $0x2b0] sm:$0xff]
        %v1575 = vld [vmem:[#allocation8 + $0x2b8] sm:$0xff]
        %v1576 = vld [vmem:[#allocation8 + $0x2c0] sm:$0xff]
        %v1577 = vld [vmem:[#allocation8 + $0x2c8] sm:$0xff]
        %v1578 = vld [vmem:[#allocation8 + $0x2d0] sm:$0xff]
        %v1579 = vld [vmem:[#allocation8 + $0x2d8] sm:$0xff]
        %v1580 = vld [vmem:[#allocation8 + $0x2e0] sm:$0xff]
        %v1581 = vld [vmem:[#allocation8 + $0x2e8] sm:$0xff]
        %v1582 = vld [vmem:[#allocation8 + $0x2f0] sm:$0xff]
        %v1583 = vld [vmem:[#allocation8 + $0x2f8] sm:$0xff]
        %v1584 = vld [vmem:[#allocation8 + $0x300] sm:$0xff]
        %v1585 = vld [vmem:[#allocation8 + $0x308] sm:$0xff]
        %v1586 = vld [vmem:[#allocation8 + $0x310] sm:$0xff]
        %v1587 = vld [vmem:[#allocation8 + $0x318] sm:$0xff]
        %v1588 = vld [vmem:[#allocation8 + $0x320] sm:$0xff]
        %v1589 = vld [vmem:[#allocation8 + $0x328] sm:$0xff]
        %v1590 = vld [vmem:[#allocation8 + $0x330] sm:$0xff]
        %v1591 = vld [vmem:[#allocation8 + $0x338] sm:$0xff]
        %v1592 = vld [vmem:[#allocation8 + $0x340] sm:$0xff]
        %v1593 = vld [vmem:[#allocation8 + $0x348] sm:$0xff]
        %v1594 = vld [vmem:[#allocation8 + $0x350] sm:$0xff]
        %v1595 = vld [vmem:[#allocation8 + $0x358] sm:$0xff]
        %v1596 = vld [vmem:[#allocation8 + $0x360] sm:$0xff]
        %v1597 = vld [vmem:[#allocation8 + $0x368] sm:$0xff]
        %v1598 = vld [vmem:[#allocation8 + $0x370] sm:$0xff]
        %v1599 = vld [vmem:[#allocation8 + $0x378] sm:$0xff]
        %v1600 = vld [vmem:[#allocation8 + $0x380] sm:$0xff]
        %v1601 = vld [vmem:[#allocation8 + $0x388] sm:$0xff]
        %v1602 = vld [vmem:[#allocation8 + $0x390] sm:$0xff]
        %v1603 = vld [vmem:[#allocation8 + $0x398] sm:$0xff]
        %v1604 = vld [vmem:[#allocation8 + $0x3a0] sm:$0xff]
        %v1605 = vld [vmem:[#allocation8 + $0x3a8] sm:$0xff]
        %v1606 = vld [vmem:[#allocation8 + $0x3b0] sm:$0xff]
        %v1607 = vld [vmem:[#allocation8 + $0x3b8] sm:$0xff]
        %v1608 = vld [vmem:[#allocation8 + $0x3c0] sm:$0xff]
        %v1609 = vld [vmem:[#allocation8 + $0x3c8] sm:$0xff]
        %v1610 = vld [vmem:[#allocation8 + $0x3d0] sm:$0xff]
        %v1611 = vld [vmem:[#allocation8 + $0x3d8] sm:$0xff]
        %v1612 = vld [vmem:[#allocation8 + $0x3e0] sm:$0xff]
        %v1613 = vld [vmem:[#allocation8 + $0x3e8] sm:$0xff]
        %v1614 = vld [vmem:[#allocation8 + $0x3f0] sm:$0xff]
        %v1615 = vld [vmem:[#allocation8 + $0x3f8] sm:$0xff]
        %v1616 = vld [vmem:[#allocation8 + $0x400] sm:$0xff]
        %v1617 = vld [vmem:[#allocation8 + $0x408] sm:$0xff]
        %v1618 = vld [vmem:[#allocation8 + $0x410] sm:$0xff]
        %v1619 = vld [vmem:[#allocation8 + $0x418] sm:$0xff]
        %v1620 = vld [vmem:[#allocation8 + $0x420] sm:$0xff]
        %v1621 = vld [vmem:[#allocation8 + $0x428] sm:$0xff]
        %v1622 = vld [vmem:[#allocation8 + $0x430] sm:$0xff]
        %v1623 = vld [vmem:[#allocation8 + $0x438] sm:$0xff]
        %v1624 = vld [vmem:[#allocation8 + $0x440] sm:$0xff]
        %v1625 = vld [vmem:[#allocation8 + $0x448] sm:$0xff]
        %v1626 = vld [vmem:[#allocation8 + $0x450] sm:$0xff]
        %v1627 = vld [vmem:[#allocation8 + $0x458] sm:$0xff]
        %v1628 = vld [vmem:[#allocation8 + $0x460] sm:$0xff]
        %v1629 = vld [vmem:[#allocation8 + $0x468] sm:$0xff]
        %v1630 = vld [vmem:[#allocation8 + $0x470] sm:$0xff]
        %v1631 = vld [vmem:[#allocation8 + $0x478] sm:$0xff]
        %v1632 = vld [vmem:[#allocation8 + $0x480] sm:$0xff]
        %v1633 = vld [vmem:[#allocation8 + $0x488] sm:$0xff]
        %v1634 = vld [vmem:[#allocation8 + $0x490] sm:$0xff]
        %v1635 = vld [vmem:[#allocation8 + $0x498] sm:$0xff]
        %v1636 = vld [vmem:[#allocation8 + $0x4a0] sm:$0xff]
        %v1637 = vld [vmem:[#allocation8 + $0x4a8] sm:$0xff]
        %v1638 = vld [vmem:[#allocation8 + $0x4b0] sm:$0xff]
        %v1639 = vld [vmem:[#allocation8 + $0x4b8] sm:$0xff]
        %v1640 = vld [vmem:[#allocation8 + $0x4c0] sm:$0xff]
        %v1641 = vld [vmem:[#allocation8 + $0x4c8] sm:$0xff]
        %v1642 = vld [vmem:[#allocation8 + $0x4d0] sm:$0xff]
        %v1643 = vld [vmem:[#allocation8 + $0x4d8] sm:$0xff]
        %v1644 = vld [vmem:[#allocation8 + $0x4e0] sm:$0xff]
        %v1645 = vld [vmem:[#allocation8 + $0x4e8] sm:$0xff]
        %v1646 = vld [vmem:[#allocation8 + $0x4f0] sm:$0xff]
        %v1647 = vld [vmem:[#allocation8 + $0x4f8] sm:$0xff]
        %v1648 = vld [vmem:[#allocation8 + $0x500] sm:$0xff]
        %v1649 = vld [vmem:[#allocation8 + $0x508] sm:$0xff]
        %v1650 = vld [vmem:[#allocation8 + $0x510] sm:$0xff]
        %v1651 = vld [vmem:[#allocation8 + $0x518] sm:$0xff]
        %v1652 = vld [vmem:[#allocation8 + $0x520] sm:$0xff]
        %v1653 = vld [vmem:[#allocation8 + $0x528] sm:$0xff]
        %v1654 = vld [vmem:[#allocation8 + $0x530] sm:$0xff]
        %v1655 = vld [vmem:[#allocation8 + $0x538] sm:$0xff]
        %v1656 = vld [vmem:[#allocation8 + $0x540] sm:$0xff]
        %v1657 = vld [vmem:[#allocation8 + $0x548] sm:$0xff]
        %v1658 = vld [vmem:[#allocation8 + $0x550] sm:$0xff]
        %v1659 = vld [vmem:[#allocation8 + $0x558] sm:$0xff]
        %v1660 = vld [vmem:[#allocation8 + $0x560] sm:$0xff]
        %v1661 = vld [vmem:[#allocation8 + $0x568] sm:$0xff]
        %v1662 = vld [vmem:[#allocation8 + $0x570] sm:$0xff]
        %v1663 = vld [vmem:[#allocation8 + $0x578] sm:$0xff]
        %v1664 = vld [vmem:[#allocation8 + $0x580] sm:$0xff]
        %v1665 = vld [vmem:[#allocation8 + $0x588] sm:$0xff]
        %v1666 = vld [vmem:[#allocation8 + $0x590] sm:$0xff]
        %v1667 = vld [vmem:[#allocation8 + $0x598] sm:$0xff]
        %v1668 = vld [vmem:[#allocation8 + $0x5a0] sm:$0xff]
        %v1669 = vld [vmem:[#allocation8 + $0x5a8] sm:$0xff]
        %v1670 = vld [vmem:[#allocation8 + $0x5b0] sm:$0xff]
        %v1671 = vld [vmem:[#allocation8 + $0x5b8] sm:$0xff]
        %v1672 = vld [vmem:[#allocation8 + $0x5c0] sm:$0xff]
        %v1673 = vld [vmem:[#allocation8 + $0x5c8] sm:$0xff]
        %v1674 = vld [vmem:[#allocation8 + $0x5d0] sm:$0xff]
        %v1675 = vld [vmem:[#allocation8 + $0x5d8] sm:$0xff]
        %v1676 = vld [vmem:[#allocation8 + $0x5e0] sm:$0xff]
        %v1677 = vld [vmem:[#allocation8 + $0x5e8] sm:$0xff]
        %v1678 = vld [vmem:[#allocation8 + $0x5f0] sm:$0xff]
        %v1679 = vld [vmem:[#allocation8 + $0x5f8] sm:$0xff]
        %v1680 = vld [vmem:[#allocation8 + $0x600] sm:$0xff]
        %v1681 = vld [vmem:[#allocation8 + $0x608] sm:$0xff]
        %v1682 = vld [vmem:[#allocation8 + $0x610] sm:$0xff]
        %v1683 = vld [vmem:[#allocation8 + $0x618] sm:$0xff]
        %v1684 = vld [vmem:[#allocation8 + $0x620] sm:$0xff]
        %v1685 = vld [vmem:[#allocation8 + $0x628] sm:$0xff]
        %v1686 = vld [vmem:[#allocation8 + $0x630] sm:$0xff]
        %v1687 = vld [vmem:[#allocation8 + $0x638] sm:$0xff]
        %v1688 = vld [vmem:[#allocation8 + $0x640] sm:$0xff]
        %v1689 = vld [vmem:[#allocation8 + $0x648] sm:$0xff]
        %v1690 = vld [vmem:[#allocation8 + $0x650] sm:$0xff]
        %v1691 = vld [vmem:[#allocation8 + $0x658] sm:$0xff]
        %v1692 = vld [vmem:[#allocation8 + $0x660] sm:$0xff]
        %v1693 = vld [vmem:[#allocation8 + $0x668] sm:$0xff]
        %v1694 = vld [vmem:[#allocation8 + $0x670] sm:$0xff]
        %v1695 = vld [vmem:[#allocation8 + $0x678] sm:$0xff]
        %v1696 = vld [vmem:[#allocation8 + $0x680] sm:$0xff]
        %v1697 = vld [vmem:[#allocation8 + $0x688] sm:$0xff]
        %v1698 = vld [vmem:[#allocation8 + $0x690] sm:$0xff]
        %v1699 = vld [vmem:[#allocation8 + $0x698] sm:$0xff]
        %v1700 = vld [vmem:[#allocation8 + $0x6a0] sm:$0xff]
        %v1701 = vld [vmem:[#allocation8 + $0x6a8] sm:$0xff]
        %v1702 = vld [vmem:[#allocation8 + $0x6b0] sm:$0xff]
        %v1703 = vld [vmem:[#allocation8 + $0x6b8] sm:$0xff]
        %v1704 = vld [vmem:[#allocation8 + $0x6c0] sm:$0xff]
        %v1705 = vld [vmem:[#allocation8 + $0x6c8] sm:$0xff]
        %v1706 = vld [vmem:[#allocation8 + $0x6d0] sm:$0xff]
        %v1707 = vld [vmem:[#allocation8 + $0x6d8] sm:$0xff]
        %v1708 = vld [vmem:[#allocation8 + $0x6e0] sm:$0xff]
        %v1709 = vld [vmem:[#allocation8 + $0x6e8] sm:$0xff]
        %v1710 = vld [vmem:[#allocation8 + $0x6f0] sm:$0xff]
        %v1711 = vld [vmem:[#allocation8 + $0x6f8] sm:$0xff]
        %v1712 = vld [vmem:[#allocation8 + $0x700] sm:$0xff]
        %v1713 = vld [vmem:[#allocation8 + $0x708] sm:$0xff]
        %v1714 = vld [vmem:[#allocation8 + $0x710] sm:$0xff]
        %v1715 = vld [vmem:[#allocation8 + $0x718] sm:$0xff]
        %v1716 = vld [vmem:[#allocation8 + $0x720] sm:$0xff]
        %v1717 = vld [vmem:[#allocation8 + $0x728] sm:$0xff]
        %v1718 = vld [vmem:[#allocation8 + $0x730] sm:$0xff]
        %v1719 = vld [vmem:[#allocation8 + $0x738] sm:$0xff]
        %v1720 = vld [vmem:[#allocation8 + $0x740] sm:$0xff]
        %v1721 = vld [vmem:[#allocation8 + $0x748] sm:$0xff]
        %v1722 = vld [vmem:[#allocation8 + $0x750] sm:$0xff]
        %v1723 = vld [vmem:[#allocation8 + $0x758] sm:$0xff]
        %v1724 = vld [vmem:[#allocation8 + $0x760] sm:$0xff]
        %v1725 = vld [vmem:[#allocation8 + $0x768] sm:$0xff]
        %v1726 = vld [vmem:[#allocation8 + $0x770] sm:$0xff]
        %v1727 = vld [vmem:[#allocation8 + $0x778] sm:$0xff]
        %v1728 = vld [vmem:[#allocation8 + $0x780] sm:$0xff]
        %v1729 = vld [vmem:[#allocation8 + $0x788] sm:$0xff]
        %v1730 = vld [vmem:[#allocation8 + $0x790] sm:$0xff]
        %v1731 = vld [vmem:[#allocation8 + $0x798] sm:$0xff]
        %v1732 = vld [vmem:[#allocation8 + $0x7a0] sm:$0xff]
        %v1733 = vld [vmem:[#allocation8 + $0x7a8] sm:$0xff]
        %v1734 = vld [vmem:[#allocation8 + $0x7b0] sm:$0xff]
        %v1735 = vld [vmem:[#allocation8 + $0x7b8] sm:$0xff]
        %v1736 = vld [vmem:[#allocation8 + $0x7c0] sm:$0xff]
        %v1737 = vld [vmem:[#allocation8 + $0x7c8] sm:$0xff]
        %v1738 = vld [vmem:[#allocation8 + $0x7d0] sm:$0xff]
        %v1739 = vld [vmem:[#allocation8 + $0x7d8] sm:$0xff]
        %v1740 = vld [vmem:[#allocation8 + $0x7e0] sm:$0xff]
        %v1741 = vld [vmem:[#allocation8 + $0x7e8] sm:$0xff]
        %v1742 = vld [vmem:[#allocation8 + $0x7f0] sm:$0xff]
        %v1743 = vld [vmem:[#allocation8 + $0x7f8] sm:$0xff]
        %v1744 = vld [vmem:[%s9] sm:$0xf]
        %v1746 = vlaneseq
        %v1747 = vshrl.u32 %v1746, 7
        %v1748 = vsub.s32 0, %v1747
        %v1749 = vrot.slane %v1744, %v1748
        %v1750 = vlaneseq
        %v1751 = vshrl.u32 %v1750, 7
        %v1752 = vsub.s32 1, %v1751
        %v1753 = vrot.slane %v1744, %v1752
        %v1754 = vlaneseq
        %v1755 = vshrl.u32 %v1754, 7
        %v1756 = vsub.s32 2, %v1755
        %v1757 = vrot.slane %v1744, %v1756
        %v1758 = vlaneseq
        %v1759 = vshrl.u32 %v1758, 7
        %v1760 = vsub.s32 3, %v1759
        %v1761 = vrot.slane %v1744, %v1760
        %1766 = vmatprep.subr.mxu0 %v1489
        %1767 = vmatpush1.msra.mxu0 %v1488
        %1768 = vmatprep.subr.mxu0 %v1493
        %1769 = vmatpush1.msra.mxu0 %v1492
        %1770 = vmatprep.subr.mxu0 %v1497
        %1771 = vmatpush1.msra.mxu0 %v1496
        %1772 = vmatprep.subr.mxu0 %v1501
        %1773 = vmatpush1.msra.mxu0 %v1500
        %1774 = vmatprep.subr.mxu0 %v1505
        %1775 = vmatpush1.msra.mxu0 %v1504
        %1776 = vmatprep.subr.mxu0 %v1509
        %1777 = vmatpush1.msra.mxu0 %v1508
        %1778 = vmatprep.subr.mxu0 %v1513
        %1779 = vmatpush1.msra.mxu0 %v1512
        %1780 = vmatprep.subr.mxu0 %v1517
        %1781 = vmatpush1.msra.mxu0 %v1516
        %1782 = vmatprep.subr.mxu0 %v1521
        %1783 = vmatpush1.msra.mxu0 %v1520
        %1784 = vmatprep.subr.mxu0 %v1525
        %1785 = vmatpush1.msra.mxu0 %v1524
        %1786 = vmatprep.subr.mxu0 %v1529
        %1787 = vmatpush1.msra.mxu0 %v1528
        %1788 = vmatprep.subr.mxu0 %v1533
        %1789 = vmatpush1.msra.mxu0 %v1532
        %1790 = vmatprep.subr.mxu0 %v1537
        %1791 = vmatpush1.msra.mxu0 %v1536
        %1792 = vmatprep.subr.mxu0 %v1541
        %1793 = vmatpush1.msra.mxu0 %v1540
        %1794 = vmatprep.subr.mxu0 %v1545
        %1795 = vmatpush1.msra.mxu0 %v1544
        %1796 = vmatprep.subr.mxu0 %v1549
        %1797 = vmatpush1.msra.mxu0 %v1548
        %1798 = vmatprep.subr.mxu0 %v1553
        %1799 = vmatpush1.msra.mxu0 %v1552
        %1800 = vmatprep.subr.mxu0 %v1557
        %1801 = vmatpush1.msra.mxu0 %v1556
        %1802 = vmatprep.subr.mxu0 %v1561
        %1803 = vmatpush1.msra.mxu0 %v1560
        %1804 = vmatprep.subr.mxu0 %v1565
        %1805 = vmatpush1.msra.mxu0 %v1564
        %1806 = vmatprep.subr.mxu0 %v1569
        %1807 = vmatpush1.msra.mxu0 %v1568
        %1808 = vmatprep.subr.mxu0 %v1573
        %1809 = vmatpush1.msra.mxu0 %v1572
        %1810 = vmatprep.subr.mxu0 %v1577
        %1811 = vmatpush1.msra.mxu0 %v1576
        %1812 = vmatprep.subr.mxu0 %v1581
        %1813 = vmatpush1.msra.mxu0 %v1580
        %1814 = vmatprep.subr.mxu0 %v1585
        %1815 = vmatpush1.msra.mxu0 %v1584
        %1816 = vmatprep.subr.mxu0 %v1589
        %1817 = vmatpush1.msra.mxu0 %v1588
        %1818 = vmatprep.subr.mxu0 %v1593
        %1819 = vmatpush1.msra.mxu0 %v1592
        %1820 = vmatprep.subr.mxu0 %v1597
        %1821 = vmatpush1.msra.mxu0 %v1596
        %1822 = vmatprep.subr.mxu0 %v1601
        %1823 = vmatpush1.msra.mxu0 %v1600
        %1824 = vmatprep.subr.mxu0 %v1605
        %1825 = vmatpush1.msra.mxu0 %v1604
        %1826 = vmatprep.subr.mxu0 %v1609
        %1827 = vmatpush1.msra.mxu0 %v1608
        %1828 = vmatprep.subr.mxu0 %v1613
        %1829 = vmatpush1.msra.mxu0 %v1612
        %1830 = vmatprep.mubr.f32.mxu0 %v1485
        %1831 = vmatmul.mubr.f32.gmra.mrb[0].mxu0 %v1484
        %v1832 = vpop.f32.mrb[0].mxu0
        %v1833 = vadd.f32 %v1749, %v1832
        %v1834 = vpop.f32.mrb[0].mxu0
        %v1835 = vadd.f32 %v1753, %v1834
        %1836 = vdwg.mxu0
        %1837 = vmatprep.subr.mxu0 %v1617
        %1838 = vmatpush1.msra.mxu0 %v1616
        %1839 = vmatprep.subr.mxu0 %v1621
        %1840 = vmatpush1.msra.mxu0 %v1620
        %1841 = vmatprep.subr.mxu0 %v1625
        %1842 = vmatpush1.msra.mxu0 %v1624
        %1843 = vmatprep.subr.mxu0 %v1629
        %1844 = vmatpush1.msra.mxu0 %v1628
        %1845 = vmatprep.subr.mxu0 %v1633
        %1846 = vmatpush1.msra.mxu0 %v1632
        %1847 = vmatprep.subr.mxu0 %v1637
        %1848 = vmatpush1.msra.mxu0 %v1636
        %1849 = vmatprep.subr.mxu0 %v1641
        %1850 = vmatpush1.msra.mxu0 %v1640
        %1851 = vmatprep.subr.mxu0 %v1645
        %1852 = vmatpush1.msra.mxu0 %v1644
        %1853 = vmatprep.subr.mxu0 %v1649
        %1854 = vmatpush1.msra.mxu0 %v1648
        %1855 = vmatprep.subr.mxu0 %v1653
        %1856 = vmatpush1.msra.mxu0 %v1652
        %1857 = vmatprep.subr.mxu0 %v1657
        %1858 = vmatpush1.msra.mxu0 %v1656
        %1859 = vmatprep.subr.mxu0 %v1661
        %1860 = vmatpush1.msra.mxu0 %v1660
        %1861 = vmatprep.subr.mxu0 %v1665
        %1862 = vmatpush1.msra.mxu0 %v1664
        %1863 = vmatprep.subr.mxu0 %v1669
        %1864 = vmatpush1.msra.mxu0 %v1668
        %1865 = vmatprep.subr.mxu0 %v1673
        %1866 = vmatpush1.msra.mxu0 %v1672
        %1867 = vmatprep.subr.mxu0 %v1677
        %1868 = vmatpush1.msra.mxu0 %v1676
        %1869 = vmatprep.subr.mxu0 %v1681
        %1870 = vmatpush1.msra.mxu0 %v1680
        %1871 = vmatprep.subr.mxu0 %v1685
        %1872 = vmatpush1.msra.mxu0 %v1684
        %1873 = vmatprep.subr.mxu0 %v1689
        %1874 = vmatpush1.msra.mxu0 %v1688
        %1875 = vmatprep.subr.mxu0 %v1693
        %1876 = vmatpush1.msra.mxu0 %v1692
        %1877 = vmatprep.subr.mxu0 %v1697
        %1878 = vmatpush1.msra.mxu0 %v1696
        %1879 = vmatprep.subr.mxu0 %v1701
        %1880 = vmatpush1.msra.mxu0 %v1700
        %1881 = vmatprep.subr.mxu0 %v1705
        %1882 = vmatpush1.msra.mxu0 %v1704
        %1883 = vmatprep.subr.mxu0 %v1709
        %1884 = vmatpush1.msra.mxu0 %v1708
        %1885 = vmatprep.subr.mxu0 %v1713
        %1886 = vmatpush1.msra.mxu0 %v1712
        %1887 = vmatprep.subr.mxu0 %v1717
        %1888 = vmatpush1.msra.mxu0 %v1716
        %1889 = vmatprep.subr.mxu0 %v1721
        %1890 = vmatpush1.msra.mxu0 %v1720
        %1891 = vmatprep.subr.mxu0 %v1725
        %1892 = vmatpush1.msra.mxu0 %v1724
        %1893 = vmatprep.subr.mxu0 %v1729
        %1894 = vmatpush1.msra.mxu0 %v1728
        %1895 = vmatprep.subr.mxu0 %v1733
        %1896 = vmatpush1.msra.mxu0 %v1732
        %1897 = vmatprep.subr.mxu0 %v1737
        %1898 = vmatpush1.msra.mxu0 %v1736
        %1899 = vmatprep.subr.mxu0 %v1741
        %1900 = vmatpush1.msra.mxu0 %v1740
        %1901 = vmatprep.mubr.f32.mxu0 %v1487
        %1902 = vmatmul.mubr.f32.gmra.mrb[0].mxu0 %v1486
        %v1903 = vpop.f32.mrb[0].mxu0
        %v1904 = vadd.f32 %v1833, %v1903
        %v1905 = vpop.f32.mrb[0].mxu0
        %v1906 = vadd.f32 %v1835, %v1905
        %1907 = vdwg.mxu0
        %1908 = vmatprep.subr.mxu0 %v1491
        %1909 = vmatpush1.msra.mxu0 %v1490
        %1910 = vmatprep.subr.mxu0 %v1495
        %1911 = vmatpush1.msra.mxu0 %v1494
        %1912 = vmatprep.subr.mxu0 %v1499
        %1913 = vmatpush1.msra.mxu0 %v1498
        %1914 = vmatprep.subr.mxu0 %v1503
        %1915 = vmatpush1.msra.mxu0 %v1502
        %1916 = vmatprep.subr.mxu0 %v1507
        %1917 = vmatpush1.msra.mxu0 %v1506
        %1918 = vmatprep.subr.mxu0 %v1511
        %1919 = vmatpush1.msra.mxu0 %v1510
        %1920 = vmatprep.subr.mxu0 %v1515
        %1921 = vmatpush1.msra.mxu0 %v1514
        %1922 = vmatprep.subr.mxu0 %v1519
        %1923 = vmatpush1.msra.mxu0 %v1518
        %1924 = vmatprep.subr.mxu0 %v1523
        %1925 = vmatpush1.msra.mxu0 %v1522
        %1926 = vmatprep.subr.mxu0 %v1527
        %1927 = vmatpush1.msra.mxu0 %v1526
        %1928 = vmatprep.subr.mxu0 %v1531
        %1929 = vmatpush1.msra.mxu0 %v1530
        %1930 = vmatprep.subr.mxu0 %v1535
        %1931 = vmatpush1.msra.mxu0 %v1534
        %1932 = vmatprep.subr.mxu0 %v1539
        %1933 = vmatpush1.msra.mxu0 %v1538
        %1934 = vmatprep.subr.mxu0 %v1543
        %1935 = vmatpush1.msra.mxu0 %v1542
        %1936 = vmatprep.subr.mxu0 %v1547
        %1937 = vmatpush1.msra.mxu0 %v1546
        %1938 = vmatprep.subr.mxu0 %v1551
        %1939 = vmatpush1.msra.mxu0 %v1550
        %1940 = vmatprep.subr.mxu0 %v1555
        %1941 = vmatpush1.msra.mxu0 %v1554
        %1942 = vmatprep.subr.mxu0 %v1559
        %1943 = vmatpush1.msra.mxu0 %v1558
        %1944 = vmatprep.subr.mxu0 %v1563
        %1945 = vmatpush1.msra.mxu0 %v1562
        %1946 = vmatprep.subr.mxu0 %v1567
        %1947 = vmatpush1.msra.mxu0 %v1566
        %1948 = vmatprep.subr.mxu0 %v1571
        %1949 = vmatpush1.msra.mxu0 %v1570
        %1950 = vmatprep.subr.mxu0 %v1575
        %1951 = vmatpush1.msra.mxu0 %v1574
        %1952 = vmatprep.subr.mxu0 %v1579
        %1953 = vmatpush1.msra.mxu0 %v1578
        %1954 = vmatprep.subr.mxu0 %v1583
        %1955 = vmatpush1.msra.mxu0 %v1582
        %1956 = vmatprep.subr.mxu0 %v1587
        %1957 = vmatpush1.msra.mxu0 %v1586
        %1958 = vmatprep.subr.mxu0 %v1591
        %1959 = vmatpush1.msra.mxu0 %v1590
        %1960 = vmatprep.subr.mxu0 %v1595
        %1961 = vmatpush1.msra.mxu0 %v1594
        %1962 = vmatprep.subr.mxu0 %v1599
        %1963 = vmatpush1.msra.mxu0 %v1598
        %1964 = vmatprep.subr.mxu0 %v1603
        %1965 = vmatpush1.msra.mxu0 %v1602
        %1966 = vmatprep.subr.mxu0 %v1607
        %1967 = vmatpush1.msra.mxu0 %v1606
        %1968 = vmatprep.subr.mxu0 %v1611
        %1969 = vmatpush1.msra.mxu0 %v1610
        %1970 = vmatprep.subr.mxu0 %v1615
        %1971 = vmatpush1.msra.mxu0 %v1614
        %1972 = vmatprep.mubr.f32.mxu0 %v1485
        %1973 = vmatmul.mubr.f32.gmra.mrb[0].mxu0 %v1484
        %v1974 = vpop.f32.mrb[0].mxu0
        %v1975 = vadd.f32 %v1757, %v1974
        %v1976 = vpop.f32.mrb[0].mxu0
        %v1977 = vadd.f32 %v1761, %v1976
        %1978 = vdwg.mxu0
        %1979 = vmatprep.subr.mxu0 %v1619
        %1980 = vmatpush1.msra.mxu0 %v1618
        %1981 = vmatprep.subr.mxu0 %v1623
        %1982 = vmatpush1.msra.mxu0 %v1622
        %1983 = vmatprep.subr.mxu0 %v1627
        %1984 = vmatpush1.msra.mxu0 %v1626
        %1985 = vmatprep.subr.mxu0 %v1631
        %1986 = vmatpush1.msra.mxu0 %v1630
        %1987 = vmatprep.subr.mxu0 %v1635
        %1988 = vmatpush1.msra.mxu0 %v1634
        %1989 = vmatprep.subr.mxu0 %v1639
        %1990 = vmatpush1.msra.mxu0 %v1638
        %1991 = vmatprep.subr.mxu0 %v1643
        %1992 = vmatpush1.msra.mxu0 %v1642
        %1993 = vmatprep.subr.mxu0 %v1647
        %1994 = vmatpush1.msra.mxu0 %v1646
        %1995 = vmatprep.subr.mxu0 %v1651
        %1996 = vmatpush1.msra.mxu0 %v1650
        %1997 = vmatprep.subr.mxu0 %v1655
        %1998 = vmatpush1.msra.mxu0 %v1654
        %1999 = vmatprep.subr.mxu0 %v1659
        %2000 = vmatpush1.msra.mxu0 %v1658
        %2001 = vmatprep.subr.mxu0 %v1663
        %2002 = vmatpush1.msra.mxu0 %v1662
        %2003 = vmatprep.subr.mxu0 %v1667
        %2004 = vmatpush1.msra.mxu0 %v1666
        %2005 = vmatprep.subr.mxu0 %v1671
        %2006 = vmatpush1.msra.mxu0 %v1670
        %2007 = vmatprep.subr.mxu0 %v1675
        %2008 = vmatpush1.msra.mxu0 %v1674
        %2009 = vmatprep.subr.mxu0 %v1679
        %2010 = vmatpush1.msra.mxu0 %v1678
        %2011 = vmatprep.subr.mxu0 %v1683
        %2012 = vmatpush1.msra.mxu0 %v1682
        %2013 = vmatprep.subr.mxu0 %v1687
        %2014 = vmatpush1.msra.mxu0 %v1686
        %2015 = vmatprep.subr.mxu0 %v1691
        %2016 = vmatpush1.msra.mxu0 %v1690
        %2017 = vmatprep.subr.mxu0 %v1695
        %2018 = vmatpush1.msra.mxu0 %v1694
        %2019 = vmatprep.subr.mxu0 %v1699
        %2020 = vmatpush1.msra.mxu0 %v1698
        %2021 = vmatprep.subr.mxu0 %v1703
        %2022 = vmatpush1.msra.mxu0 %v1702
        %2023 = vmatprep.subr.mxu0 %v1707
        %2024 = vmatpush1.msra.mxu0 %v1706
        %2025 = vmatprep.subr.mxu0 %v1711
        %2026 = vmatpush1.msra.mxu0 %v1710
        %2027 = vmatprep.subr.mxu0 %v1715
        %2028 = vmatpush1.msra.mxu0 %v1714
        %2029 = vmatprep.subr.mxu0 %v1719
        %2030 = vmatpush1.msra.mxu0 %v1718
        %2031 = vmatprep.subr.mxu0 %v1723
        %2032 = vmatpush1.msra.mxu0 %v1722
        %2033 = vmatprep.subr.mxu0 %v1727
        %2034 = vmatpush1.msra.mxu0 %v1726
        %2035 = vmatprep.subr.mxu0 %v1731
        %2036 = vmatpush1.msra.mxu0 %v1730
        %2037 = vmatprep.subr.mxu0 %v1735
        %2038 = vmatpush1.msra.mxu0 %v1734
        %2039 = vmatprep.subr.mxu0 %v1739
        %2040 = vmatpush1.msra.mxu0 %v1738
        %2041 = vmatprep.subr.mxu0 %v1743
        %2042 = vmatpush1.msra.mxu0 %v1742
        %2043 = vmatprep.mubr.f32.mxu0 %v1487
        %2044 = vmatmul.mubr.f32.gmra.mrb[0].mxu0 %v1486
        %v2045 = vpop.f32.mrb[0].mxu0
        %v2046 = vadd.f32 %v1975, %v2045
        %v2047 = vpop.f32.mrb[0].mxu0
        %v2048 = vadd.f32 %v1977, %v2047
        %2049 = vdwg.mxu0
        %v2050 = vmax.f32 %v1904, 0.0
        %v2051 = vmax.f32 %v1906, 0.0
        %v2052 = vmax.f32 %v2046, 0.0
        %v2053 = vmax.f32 %v2048, 0.0
        %v2054 = vrot.slane %v2050, 4
        %v2055 = vadd.f32 %v2050, %v2054
        %v2056 = vrot.slane %v2055, 2
        %v2057 = vadd.f32 %v2055, %v2056
        %v2058 = vrot.slane %v2057, 1
        %v2059 = vadd.f32 %v2057, %v2058
        %v2060 = vrot.slane %v2051, 4
        %v2061 = vadd.f32 %v2051, %v2060
        %v2062 = vrot.slane %v2061, 2
        %v2063 = vadd.f32 %v2061, %v2062
        %v2064 = vrot.slane %v2063, 1
        %v2065 = vadd.f32 %v2063, %v2064
        %v2066 = vrot.slane %v2052, 4
        %v2067 = vadd.f32 %v2052, %v2066
        %v2068 = vrot.slane %v2067, 2
        %v2069 = vadd.f32 %v2067, %v2068
        %v2070 = vrot.slane %v2069, 1
        %v2071 = vadd.f32 %v2069, %v2070
        %v2072 = vrot.slane %v2053, 4
        %v2073 = vadd.f32 %v2053, %v2072
        %v2074 = vrot.slane %v2073, 2
        %v2075 = vadd.f32 %v2073, %v2074
        %v2076 = vrot.slane %v2075, 1
        %v2077 = vadd.f32 %v2075, %v2076
        %v2078 = vld [vmem:[#allocation2] sm:$0x1]
        %v2080 = vlaneseq
        %v2081 = vshrl.u32 %v2080, 7
        %v2082 = vsub.s32 0, %v2081
        %v2083 = vrot.slane %v736, %v2082
        %v2084 = vlaneseq
        %v2085 = vshrl.u32 %v2084, 7
        %v2086 = vsub.s32 1, %v2085
        %v2087 = vrot.slane %v736, %v2086
        %v2088 = vlaneseq
        %v2089 = vshrl.u32 %v2088, 7
        %v2090 = vsub.s32 2, %v2089
        %v2091 = vrot.slane %v736, %v2090
        %v2092 = vlaneseq
        %v2093 = vshrl.u32 %v2092, 7
        %v2094 = vsub.s32 3, %v2093
        %v2095 = vrot.slane %v736, %v2094
        %v2100 = vmul.f32 %v2059, %v2083
        %v2101 = vmul.f32 %v2065, %v2087
        %v2102 = vmul.f32 %v2071, %v2091
        %v2103 = vmul.f32 %v2077, %v2095
        %vm2104 = vcmask 1040384
        %v2105 = vsel %vm2104, %v2100, 0.0
        %v2106 = vsel %vm2104, %v2101, 0.0
        %v2107 = vadd.f32 %v2105, %v2106
        %v2108 = vsel %vm2104, %v2102, 0.0
        %v2109 = vadd.f32 %v2107, %v2108
        %v2110 = vsel %vm2104, %v2103, 0.0
        %v2111 = vadd.f32 %v2109, %v2110
        %2112 = vadd.xlane.f32.xlu0 %v2111
        %v2113 = vpop.xlane.xlu0 %2112
        %v2114 = vmul.f32 %v737, 8.0
        %v2115 = vadd.f32 %v2113, %v2114
        %v2116 = vadd.f32 %v2078, %v2115
        %vm2117 = vcmask 0
        %2118 = vst.msk [vmem:[#allocation2] sm:$0x1] %vm2117, %v2116
        %v2119 = vld [vmem:[%s566] sm:$0xff]
        %v2120 = vld [vmem:[%s4] sm:$0xff]
        %v2121 = vld [vmem:[%s4 + $0x8] sm:$0xff]
        %v2122 = vld [vmem:[%s4 + $0x10] sm:$0xff]
        %v2123 = vld [vmem:[%s4 + $0x18] sm:$0xff]
        %v2125 = vsel %vm590, %v2119, 0
        %2127 = vmatprep.subr.mxu0 %v2121
        %2128 = vmatpush1.msra.mxu0 %v2120
        %2129 = vmatprep.subr.mxu0 0.0
        %2130 = vmatpush1.msra.mxu0 0.0
        %2131 = vmatprep.subr.mxu0 0.0
        %2132 = vmatpush1.msra.mxu0 0.0
        %2133 = vmatprep.subr.mxu0 0.0
        %2134 = vmatpush1.msra.mxu0 0.0
        %2135 = vmatprep.subr.mxu0 0.0
        %2136 = vmatpush1.msra.mxu0 0.0
        %2137 = vmatprep.subr.mxu0 0.0
        %2138 = vmatpush1.msra.mxu0 0.0
        %2139 = vmatprep.subr.mxu0 0.0
        %2140 = vmatpush1.msra.mxu0 0.0
        %2141 = vmatprep.subr.mxu0 0.0
        %2142 = vmatpush1.msra.mxu0 0.0
        %2143 = vmatprep.subr.mxu0 0.0
        %2144 = vmatpush1.msra.mxu0 0.0
        %2145 = vmatprep.subr.mxu0 0.0
        %2146 = vmatpush1.msra.mxu0 0.0
        %2147 = vmatprep.subr.mxu0 0.0
        %2148 = vmatpush1.msra.mxu0 0.0
        %2149 = vmatprep.subr.mxu0 0.0
        %2150 = vmatpush1.msra.mxu0 0.0
        %2151 = vmatprep.subr.mxu0 0.0
        %2152 = vmatpush1.msra.mxu0 0.0
        %2153 = vmatprep.subr.mxu0 0.0
        %2154 = vmatpush1.msra.mxu0 0.0
        %2155 = vmatprep.subr.mxu0 0.0
        %2156 = vmatpush1.msra.mxu0 0.0
        %2157 = vmatprep.subr.mxu0 0.0
        %2158 = vmatpush1.msra.mxu0 0.0
        %2159 = vmatprep.subr.mxu0 0.0
        %2160 = vmatpush1.msra.mxu0 0.0
        %2161 = vmatprep.subr.mxu0 0.0
        %2162 = vmatpush1.msra.mxu0 0.0
        %2163 = vmatprep.subr.mxu0 0.0
        %2164 = vmatpush1.msra.mxu0 0.0
        %2165 = vmatprep.subr.mxu0 0.0
        %2166 = vmatpush1.msra.mxu0 0.0
        %2167 = vmatprep.subr.mxu0 0.0
        %2168 = vmatpush1.msra.mxu0 0.0
        %2169 = vmatprep.subr.mxu0 0.0
        %2170 = vmatpush1.msra.mxu0 0.0
        %2171 = vmatprep.subr.mxu0 0.0
        %2172 = vmatpush1.msra.mxu0 0.0
        %2173 = vmatprep.subr.mxu0 0.0
        %2174 = vmatpush1.msra.mxu0 0.0
        %2175 = vmatprep.subr.mxu0 0.0
        %2176 = vmatpush1.msra.mxu0 0.0
        %2177 = vmatprep.subr.mxu0 0.0
        %2178 = vmatpush1.msra.mxu0 0.0
        %2179 = vmatprep.subr.mxu0 0.0
        %2180 = vmatpush1.msra.mxu0 0.0
        %2181 = vmatprep.subr.mxu0 0.0
        %2182 = vmatpush1.msra.mxu0 0.0
        %2183 = vmatprep.subr.mxu0 0.0
        %2184 = vmatpush1.msra.mxu0 0.0
        %2185 = vmatprep.subr.mxu0 0.0
        %2186 = vmatpush1.msra.mxu0 0.0
        %2187 = vmatprep.subr.mxu0 0.0
        %2188 = vmatpush1.msra.mxu0 0.0
        %2189 = vmatprep.subr.mxu0 0.0
        %2190 = vmatpush1.msra.mxu0 0.0
        %2191 = vmatprep.mubr.f32.mxu0 0.0
        %2192 = vmatmul.mubr.f32.gmra.mrb[0].mxu0 %v2125
        %v2193 = vpop.f32.mrb[0].mxu0
        %v2194 = vadd.f32 0.0, %v2193
        %v2195 = vpop.f32.mrb[0].mxu0
        %v2196 = vadd.f32 0.0, %v2195
        %2197 = vdwg.mxu0
        %2198 = vmatprep.subr.mxu0 %v2123
        %2199 = vmatpush1.msra.mxu0 %v2122
        %2200 = vmatprep.subr.mxu0 0.0
        %2201 = vmatpush1.msra.mxu0 0.0
        %2202 = vmatprep.subr.mxu0 0.0
        %2203 = vmatpush1.msra.mxu0 0.0
        %2204 = vmatprep.subr.mxu0 0.0
        %2205 = vmatpush1.msra.mxu0 0.0
        %2206 = vmatprep.subr.mxu0 0.0
        %2207 = vmatpush1.msra.mxu0 0.0
        %2208 = vmatprep.subr.mxu0 0.0
        %2209 = vmatpush1.msra.mxu0 0.0
        %2210 = vmatprep.subr.mxu0 0.0
        %2211 = vmatpush1.msra.mxu0 0.0
        %2212 = vmatprep.subr.mxu0 0.0
        %2213 = vmatpush1.msra.mxu0 0.0
        %2214 = vmatprep.subr.mxu0 0.0
        %2215 = vmatpush1.msra.mxu0 0.0
        %2216 = vmatprep.subr.mxu0 0.0
        %2217 = vmatpush1.msra.mxu0 0.0
        %2218 = vmatprep.subr.mxu0 0.0
        %2219 = vmatpush1.msra.mxu0 0.0
        %2220 = vmatprep.subr.mxu0 0.0
        %2221 = vmatpush1.msra.mxu0 0.0
        %2222 = vmatprep.subr.mxu0 0.0
        %2223 = vmatpush1.msra.mxu0 0.0
        %2224 = vmatprep.subr.mxu0 0.0
        %2225 = vmatpush1.msra.mxu0 0.0
        %2226 = vmatprep.subr.mxu0 0.0
        %2227 = vmatpush1.msra.mxu0 0.0
        %2228 = vmatprep.subr.mxu0 0.0
        %2229 = vmatpush1.msra.mxu0 0.0
        %2230 = vmatprep.subr.mxu0 0.0
        %2231 = vmatpush1.msra.mxu0 0.0
        %2232 = vmatprep.subr.mxu0 0.0
        %2233 = vmatpush1.msra.mxu0 0.0
        %2234 = vmatprep.subr.mxu0 0.0
        %2235 = vmatpush1.msra.mxu0 0.0
        %2236 = vmatprep.subr.mxu0 0.0
        %2237 = vmatpush1.msra.mxu0 0.0
        %2238 = vmatprep.subr.mxu0 0.0
        %2239 = vmatpush1.msra.mxu0 0.0
        %2240 = vmatprep.subr.mxu0 0.0
        %2241 = vmatpush1.msra.mxu0 0.0
        %2242 = vmatprep.subr.mxu0 0.0
        %2243 = vmatpush1.msra.mxu0 0.0
        %2244 = vmatprep.subr.mxu0 0.0
        %2245 = vmatpush1.msra.mxu0 0.0
        %2246 = vmatprep.subr.mxu0 0.0
        %2247 = vmatpush1.msra.mxu0 0.0
        %2248 = vmatprep.subr.mxu0 0.0
        %2249 = vmatpush1.msra.mxu0 0.0
        %2250 = vmatprep.subr.mxu0 0.0
        %2251 = vmatpush1.msra.mxu0 0.0
        %2252 = vmatprep.subr.mxu0 0.0
        %2253 = vmatpush1.msra.mxu0 0.0
        %2254 = vmatprep.subr.mxu0 0.0
        %2255 = vmatpush1.msra.mxu0 0.0
        %2256 = vmatprep.subr.mxu0 0.0
        %2257 = vmatpush1.msra.mxu0 0.0
        %2258 = vmatprep.subr.mxu0 0.0
        %2259 = vmatpush1.msra.mxu0 0.0
        %2260 = vmatprep.subr.mxu0 0.0
        %2261 = vmatpush1.msra.mxu0 0.0
        %2262 = vmatprep.mubr.f32.mxu0 0.0
        %2263 = vmatmul.mubr.f32.gmra.mrb[0].mxu0 %v2125
        %v2264 = vpop.f32.mrb[0].mxu0
        %v2265 = vadd.f32 0.0, %v2264
        %v2266 = vpop.f32.mrb[0].mxu0
        %v2267 = vadd.f32 0.0, %v2266
        %2268 = vdwg.mxu0
        %v2269 = vadd.f32 %v661, %v2194
        %v2270 = vadd.f32 %v663, %v2196
        %v2271 = vadd.f32 %v732, %v2265
        %v2272 = vadd.f32 %v734, %v2267
        %v2273 = vld [vmem:[%s5] sm:$0xf]
        %v2275 = vlaneseq
        %v2276 = vshrl.u32 %v2275, 7
        %v2277 = vsub.s32 0, %v2276
        %v2278 = vrot.slane %v2273, %v2277
        %v2279 = vlaneseq
        %v2280 = vshrl.u32 %v2279, 7
        %v2281 = vsub.s32 1, %v2280
        %v2282 = vrot.slane %v2273, %v2281
        %v2283 = vlaneseq
        %v2284 = vshrl.u32 %v2283, 7
        %v2285 = vsub.s32 2, %v2284
        %v2286 = vrot.slane %v2273, %v2285
        %v2287 = vlaneseq
        %v2288 = vshrl.u32 %v2287, 7
        %v2289 = vsub.s32 3, %v2288
        %v2290 = vrot.slane %v2273, %v2289
        %v2295 = vadd.f32 %v2269, %v2278
        %v2296 = vadd.f32 %v2270, %v2282
        %v2297 = vadd.f32 %v2271, %v2286
        %v2298 = vadd.f32 %v2272, %v2290
        %v2299 = vmax.f32 %v2295, 0.0
        %v2300 = vmax.f32 %v2296, 0.0
        %v2301 = vmax.f32 %v2297, 0.0
        %v2302 = vmax.f32 %v2298, 0.0
        %v2303 = vld [vmem:[#allocation6] sm:$0xff]
        %v2304 = vld [vmem:[#allocation6 + $0x8] sm:$0xff]
        %v2305 = vld [vmem:[#allocation6 + $0x10] sm:$0xff]
        %v2306 = vld [vmem:[#allocation6 + $0x18] sm:$0xff]
        %v2307 = vld [vmem:[#allocation6 + $0x20] sm:$0xff]
        %v2308 = vld [vmem:[#allocation6 + $0x28] sm:$0xff]
        %v2309 = vld [vmem:[#allocation6 + $0x30] sm:$0xff]
        %v2310 = vld [vmem:[#allocation6 + $0x38] sm:$0xff]
        %v2311 = vld [vmem:[#allocation6 + $0x40] sm:$0xff]
        %v2312 = vld [vmem:[#allocation6 + $0x48] sm:$0xff]
        %v2313 = vld [vmem:[#allocation6 + $0x50] sm:$0xff]
        %v2314 = vld [vmem:[#allocation6 + $0x58] sm:$0xff]
        %v2315 = vld [vmem:[#allocation6 + $0x60] sm:$0xff]
        %v2316 = vld [vmem:[#allocation6 + $0x68] sm:$0xff]
        %v2317 = vld [vmem:[#allocation6 + $0x70] sm:$0xff]
        %v2318 = vld [vmem:[#allocation6 + $0x78] sm:$0xff]
        %v2319 = vld [vmem:[#allocation6 + $0x80] sm:$0xff]
        %v2320 = vld [vmem:[#allocation6 + $0x88] sm:$0xff]
        %v2321 = vld [vmem:[#allocation6 + $0x90] sm:$0xff]
        %v2322 = vld [vmem:[#allocation6 + $0x98] sm:$0xff]
        %v2323 = vld [vmem:[#allocation6 + $0xa0] sm:$0xff]
        %v2324 = vld [vmem:[#allocation6 + $0xa8] sm:$0xff]
        %v2325 = vld [vmem:[#allocation6 + $0xb0] sm:$0xff]
        %v2326 = vld [vmem:[#allocation6 + $0xb8] sm:$0xff]
        %v2327 = vld [vmem:[#allocation6 + $0xc0] sm:$0xff]
        %v2328 = vld [vmem:[#allocation6 + $0xc8] sm:$0xff]
        %v2329 = vld [vmem:[#allocation6 + $0xd0] sm:$0xff]
        %v2330 = vld [vmem:[#allocation6 + $0xd8] sm:$0xff]
        %v2331 = vld [vmem:[#allocation6 + $0xe0] sm:$0xff]
        %v2332 = vld [vmem:[#allocation6 + $0xe8] sm:$0xff]
        %v2333 = vld [vmem:[#allocation6 + $0xf0] sm:$0xff]
        %v2334 = vld [vmem:[#allocation6 + $0xf8] sm:$0xff]
        %v2335 = vld [vmem:[#allocation6 + $0x100] sm:$0xff]
        %v2336 = vld [vmem:[#allocation6 + $0x108] sm:$0xff]
        %v2337 = vld [vmem:[#allocation6 + $0x110] sm:$0xff]
        %v2338 = vld [vmem:[#allocation6 + $0x118] sm:$0xff]
        %v2339 = vld [vmem:[#allocation6 + $0x120] sm:$0xff]
        %v2340 = vld [vmem:[#allocation6 + $0x128] sm:$0xff]
        %v2341 = vld [vmem:[#allocation6 + $0x130] sm:$0xff]
        %v2342 = vld [vmem:[#allocation6 + $0x138] sm:$0xff]
        %v2343 = vld [vmem:[#allocation6 + $0x140] sm:$0xff]
        %v2344 = vld [vmem:[#allocation6 + $0x148] sm:$0xff]
        %v2345 = vld [vmem:[#allocation6 + $0x150] sm:$0xff]
        %v2346 = vld [vmem:[#allocation6 + $0x158] sm:$0xff]
        %v2347 = vld [vmem:[#allocation6 + $0x160] sm:$0xff]
        %v2348 = vld [vmem:[#allocation6 + $0x168] sm:$0xff]
        %v2349 = vld [vmem:[#allocation6 + $0x170] sm:$0xff]
        %v2350 = vld [vmem:[#allocation6 + $0x178] sm:$0xff]
        %v2351 = vld [vmem:[#allocation6 + $0x180] sm:$0xff]
        %v2352 = vld [vmem:[#allocation6 + $0x188] sm:$0xff]
        %v2353 = vld [vmem:[#allocation6 + $0x190] sm:$0xff]
        %v2354 = vld [vmem:[#allocation6 + $0x198] sm:$0xff]
        %v2355 = vld [vmem:[#allocation6 + $0x1a0] sm:$0xff]
        %v2356 = vld [vmem:[#allocation6 + $0x1a8] sm:$0xff]
        %v2357 = vld [vmem:[#allocation6 + $0x1b0] sm:$0xff]
        %v2358 = vld [vmem:[#allocation6 + $0x1b8] sm:$0xff]
        %v2359 = vld [vmem:[#allocation6 + $0x1c0] sm:$0xff]
        %v2360 = vld [vmem:[#allocation6 + $0x1c8] sm:$0xff]
        %v2361 = vld [vmem:[#allocation6 + $0x1d0] sm:$0xff]
        %v2362 = vld [vmem:[#allocation6 + $0x1d8] sm:$0xff]
        %v2363 = vld [vmem:[#allocation6 + $0x1e0] sm:$0xff]
        %v2364 = vld [vmem:[#allocation6 + $0x1e8] sm:$0xff]
        %v2365 = vld [vmem:[#allocation6 + $0x1f0] sm:$0xff]
        %v2366 = vld [vmem:[#allocation6 + $0x1f8] sm:$0xff]
        %v2367 = vld [vmem:[#allocation6 + $0x200] sm:$0xff]
        %v2368 = vld [vmem:[#allocation6 + $0x208] sm:$0xff]
        %v2369 = vld [vmem:[#allocation6 + $0x210] sm:$0xff]
        %v2370 = vld [vmem:[#allocation6 + $0x218] sm:$0xff]
        %v2371 = vld [vmem:[#allocation6 + $0x220] sm:$0xff]
        %v2372 = vld [vmem:[#allocation6 + $0x228] sm:$0xff]
        %v2373 = vld [vmem:[#allocation6 + $0x230] sm:$0xff]
        %v2374 = vld [vmem:[#allocation6 + $0x238] sm:$0xff]
        %v2375 = vld [vmem:[#allocation6 + $0x240] sm:$0xff]
        %v2376 = vld [vmem:[#allocation6 + $0x248] sm:$0xff]
        %v2377 = vld [vmem:[#allocation6 + $0x250] sm:$0xff]
        %v2378 = vld [vmem:[#allocation6 + $0x258] sm:$0xff]
        %v2379 = vld [vmem:[#allocation6 + $0x260] sm:$0xff]
        %v2380 = vld [vmem:[#allocation6 + $0x268] sm:$0xff]
        %v2381 = vld [vmem:[#allocation6 + $0x270] sm:$0xff]
        %v2382 = vld [vmem:[#allocation6 + $0x278] sm:$0xff]
        %v2383 = vld [vmem:[#allocation6 + $0x280] sm:$0xff]
        %v2384 = vld [vmem:[#allocation6 + $0x288] sm:$0xff]
        %v2385 = vld [vmem:[#allocation6 + $0x290] sm:$0xff]
        %v2386 = vld [vmem:[#allocation6 + $0x298] sm:$0xff]
        %v2387 = vld [vmem:[#allocation6 + $0x2a0] sm:$0xff]
        %v2388 = vld [vmem:[#allocation6 + $0x2a8] sm:$0xff]
        %v2389 = vld [vmem:[#allocation6 + $0x2b0] sm:$0xff]
        %v2390 = vld [vmem:[#allocation6 + $0x2b8] sm:$0xff]
        %v2391 = vld [vmem:[#allocation6 + $0x2c0] sm:$0xff]
        %v2392 = vld [vmem:[#allocation6 + $0x2c8] sm:$0xff]
        %v2393 = vld [vmem:[#allocation6 + $0x2d0] sm:$0xff]
        %v2394 = vld [vmem:[#allocation6 + $0x2d8] sm:$0xff]
        %v2395 = vld [vmem:[#allocation6 + $0x2e0] sm:$0xff]
        %v2396 = vld [vmem:[#allocation6 + $0x2e8] sm:$0xff]
        %v2397 = vld [vmem:[#allocation6 + $0x2f0] sm:$0xff]
        %v2398 = vld [vmem:[#allocation6 + $0x2f8] sm:$0xff]
        %v2399 = vld [vmem:[#allocation6 + $0x300] sm:$0xff]
        %v2400 = vld [vmem:[#allocation6 + $0x308] sm:$0xff]
        %v2401 = vld [vmem:[#allocation6 + $0x310] sm:$0xff]
        %v2402 = vld [vmem:[#allocation6 + $0x318] sm:$0xff]
        %v2403 = vld [vmem:[#allocation6 + $0x320] sm:$0xff]
        %v2404 = vld [vmem:[#allocation6 + $0x328] sm:$0xff]
        %v2405 = vld [vmem:[#allocation6 + $0x330] sm:$0xff]
        %v2406 = vld [vmem:[#allocation6 + $0x338] sm:$0xff]
        %v2407 = vld [vmem:[#allocation6 + $0x340] sm:$0xff]
        %v2408 = vld [vmem:[#allocation6 + $0x348] sm:$0xff]
        %v2409 = vld [vmem:[#allocation6 + $0x350] sm:$0xff]
        %v2410 = vld [vmem:[#allocation6 + $0x358] sm:$0xff]
        %v2411 = vld [vmem:[#allocation6 + $0x360] sm:$0xff]
        %v2412 = vld [vmem:[#allocation6 + $0x368] sm:$0xff]
        %v2413 = vld [vmem:[#allocation6 + $0x370] sm:$0xff]
        %v2414 = vld [vmem:[#allocation6 + $0x378] sm:$0xff]
        %v2415 = vld [vmem:[#allocation6 + $0x380] sm:$0xff]
        %v2416 = vld [vmem:[#allocation6 + $0x388] sm:$0xff]
        %v2417 = vld [vmem:[#allocation6 + $0x390] sm:$0xff]
        %v2418 = vld [vmem:[#allocation6 + $0x398] sm:$0xff]
        %v2419 = vld [vmem:[#allocation6 + $0x3a0] sm:$0xff]
        %v2420 = vld [vmem:[#allocation6 + $0x3a8] sm:$0xff]
        %v2421 = vld [vmem:[#allocation6 + $0x3b0] sm:$0xff]
        %v2422 = vld [vmem:[#allocation6 + $0x3b8] sm:$0xff]
        %v2423 = vld [vmem:[#allocation6 + $0x3c0] sm:$0xff]
        %v2424 = vld [vmem:[#allocation6 + $0x3c8] sm:$0xff]
        %v2425 = vld [vmem:[#allocation6 + $0x3d0] sm:$0xff]
        %v2426 = vld [vmem:[#allocation6 + $0x3d8] sm:$0xff]
        %v2427 = vld [vmem:[#allocation6 + $0x3e0] sm:$0xff]
        %v2428 = vld [vmem:[#allocation6 + $0x3e8] sm:$0xff]
        %v2429 = vld [vmem:[#allocation6 + $0x3f0] sm:$0xff]
        %v2430 = vld [vmem:[#allocation6 + $0x3f8] sm:$0xff]
        %v2431 = vld [vmem:[#allocation6 + $0x400] sm:$0xff]
        %v2432 = vld [vmem:[#allocation6 + $0x408] sm:$0xff]
        %v2433 = vld [vmem:[#allocation6 + $0x410] sm:$0xff]
        %v2434 = vld [vmem:[#allocation6 + $0x418] sm:$0xff]
        %v2435 = vld [vmem:[#allocation6 + $0x420] sm:$0xff]
        %v2436 = vld [vmem:[#allocation6 + $0x428] sm:$0xff]
        %v2437 = vld [vmem:[#allocation6 + $0x430] sm:$0xff]
        %v2438 = vld [vmem:[#allocation6 + $0x438] sm:$0xff]
        %v2439 = vld [vmem:[#allocation6 + $0x440] sm:$0xff]
        %v2440 = vld [vmem:[#allocation6 + $0x448] sm:$0xff]
        %v2441 = vld [vmem:[#allocation6 + $0x450] sm:$0xff]
        %v2442 = vld [vmem:[#allocation6 + $0x458] sm:$0xff]
        %v2443 = vld [vmem:[#allocation6 + $0x460] sm:$0xff]
        %v2444 = vld [vmem:[#allocation6 + $0x468] sm:$0xff]
        %v2445 = vld [vmem:[#allocation6 + $0x470] sm:$0xff]
        %v2446 = vld [vmem:[#allocation6 + $0x478] sm:$0xff]
        %v2447 = vld [vmem:[#allocation6 + $0x480] sm:$0xff]
        %v2448 = vld [vmem:[#allocation6 + $0x488] sm:$0xff]
        %v2449 = vld [vmem:[#allocation6 + $0x490] sm:$0xff]
        %v2450 = vld [vmem:[#allocation6 + $0x498] sm:$0xff]
        %v2451 = vld [vmem:[#allocation6 + $0x4a0] sm:$0xff]
        %v2452 = vld [vmem:[#allocation6 + $0x4a8] sm:$0xff]
        %v2453 = vld [vmem:[#allocation6 + $0x4b0] sm:$0xff]
        %v2454 = vld [vmem:[#allocation6 + $0x4b8] sm:$0xff]
        %v2455 = vld [vmem:[#allocation6 + $0x4c0] sm:$0xff]
        %v2456 = vld [vmem:[#allocation6 + $0x4c8] sm:$0xff]
        %v2457 = vld [vmem:[#allocation6 + $0x4d0] sm:$0xff]
        %v2458 = vld [vmem:[#allocation6 + $0x4d8] sm:$0xff]
        %v2459 = vld [vmem:[#allocation6 + $0x4e0] sm:$0xff]
        %v2460 = vld [vmem:[#allocation6 + $0x4e8] sm:$0xff]
        %v2461 = vld [vmem:[#allocation6 + $0x4f0] sm:$0xff]
        %v2462 = vld [vmem:[#allocation6 + $0x4f8] sm:$0xff]
        %v2463 = vld [vmem:[#allocation6 + $0x500] sm:$0xff]
        %v2464 = vld [vmem:[#allocation6 + $0x508] sm:$0xff]
        %v2465 = vld [vmem:[#allocation6 + $0x510] sm:$0xff]
        %v2466 = vld [vmem:[#allocation6 + $0x518] sm:$0xff]
        %v2467 = vld [vmem:[#allocation6 + $0x520] sm:$0xff]
        %v2468 = vld [vmem:[#allocation6 + $0x528] sm:$0xff]
        %v2469 = vld [vmem:[#allocation6 + $0x530] sm:$0xff]
        %v2470 = vld [vmem:[#allocation6 + $0x538] sm:$0xff]
        %v2471 = vld [vmem:[#allocation6 + $0x540] sm:$0xff]
        %v2472 = vld [vmem:[#allocation6 + $0x548] sm:$0xff]
        %v2473 = vld [vmem:[#allocation6 + $0x550] sm:$0xff]
        %v2474 = vld [vmem:[#allocation6 + $0x558] sm:$0xff]
        %v2475 = vld [vmem:[#allocation6 + $0x560] sm:$0xff]
        %v2476 = vld [vmem:[#allocation6 + $0x568] sm:$0xff]
        %v2477 = vld [vmem:[#allocation6 + $0x570] sm:$0xff]
        %v2478 = vld [vmem:[#allocation6 + $0x578] sm:$0xff]
        %v2479 = vld [vmem:[#allocation6 + $0x580] sm:$0xff]
        %v2480 = vld [vmem:[#allocation6 + $0x588] sm:$0xff]
        %v2481 = vld [vmem:[#allocation6 + $0x590] sm:$0xff]
        %v2482 = vld [vmem:[#allocation6 + $0x598] sm:$0xff]
        %v2483 = vld [vmem:[#allocation6 + $0x5a0] sm:$0xff]
        %v2484 = vld [vmem:[#allocation6 + $0x5a8] sm:$0xff]
        %v2485 = vld [vmem:[#allocation6 + $0x5b0] sm:$0xff]
        %v2486 = vld [vmem:[#allocation6 + $0x5b8] sm:$0xff]
        %v2487 = vld [vmem:[#allocation6 + $0x5c0] sm:$0xff]
        %v2488 = vld [vmem:[#allocation6 + $0x5c8] sm:$0xff]
        %v2489 = vld [vmem:[#allocation6 + $0x5d0] sm:$0xff]
        %v2490 = vld [vmem:[#allocation6 + $0x5d8] sm:$0xff]
        %v2491 = vld [vmem:[#allocation6 + $0x5e0] sm:$0xff]
        %v2492 = vld [vmem:[#allocation6 + $0x5e8] sm:$0xff]
        %v2493 = vld [vmem:[#allocation6 + $0x5f0] sm:$0xff]
        %v2494 = vld [vmem:[#allocation6 + $0x5f8] sm:$0xff]
        %v2495 = vld [vmem:[#allocation6 + $0x600] sm:$0xff]
        %v2496 = vld [vmem:[#allocation6 + $0x608] sm:$0xff]
        %v2497 = vld [vmem:[#allocation6 + $0x610] sm:$0xff]
        %v2498 = vld [vmem:[#allocation6 + $0x618] sm:$0xff]
        %v2499 = vld [vmem:[#allocation6 + $0x620] sm:$0xff]
        %v2500 = vld [vmem:[#allocation6 + $0x628] sm:$0xff]
        %v2501 = vld [vmem:[#allocation6 + $0x630] sm:$0xff]
        %v2502 = vld [vmem:[#allocation6 + $0x638] sm:$0xff]
        %v2503 = vld [vmem:[#allocation6 + $0x640] sm:$0xff]
        %v2504 = vld [vmem:[#allocation6 + $0x648] sm:$0xff]
        %v2505 = vld [vmem:[#allocation6 + $0x650] sm:$0xff]
        %v2506 = vld [vmem:[#allocation6 + $0x658] sm:$0xff]
        %v2507 = vld [vmem:[#allocation6 + $0x660] sm:$0xff]
        %v2508 = vld [vmem:[#allocation6 + $0x668] sm:$0xff]
        %v2509 = vld [vmem:[#allocation6 + $0x670] sm:$0xff]
        %v2510 = vld [vmem:[#allocation6 + $0x678] sm:$0xff]
        %v2511 = vld [vmem:[#allocation6 + $0x680] sm:$0xff]
        %v2512 = vld [vmem:[#allocation6 + $0x688] sm:$0xff]
        %v2513 = vld [vmem:[#allocation6 + $0x690] sm:$0xff]
        %v2514 = vld [vmem:[#allocation6 + $0x698] sm:$0xff]
        %v2515 = vld [vmem:[#allocation6 + $0x6a0] sm:$0xff]
        %v2516 = vld [vmem:[#allocation6 + $0x6a8] sm:$0xff]
        %v2517 = vld [vmem:[#allocation6 + $0x6b0] sm:$0xff]
        %v2518 = vld [vmem:[#allocation6 + $0x6b8] sm:$0xff]
        %v2519 = vld [vmem:[#allocation6 + $0x6c0] sm:$0xff]
        %v2520 = vld [vmem:[#allocation6 + $0x6c8] sm:$0xff]
        %v2521 = vld [vmem:[#allocation6 + $0x6d0] sm:$0xff]
        %v2522 = vld [vmem:[#allocation6 + $0x6d8] sm:$0xff]
        %v2523 = vld [vmem:[#allocation6 + $0x6e0] sm:$0xff]
        %v2524 = vld [vmem:[#allocation6 + $0x6e8] sm:$0xff]
        %v2525 = vld [vmem:[#allocation6 + $0x6f0] sm:$0xff]
        %v2526 = vld [vmem:[#allocation6 + $0x6f8] sm:$0xff]
        %v2527 = vld [vmem:[#allocation6 + $0x700] sm:$0xff]
        %v2528 = vld [vmem:[#allocation6 + $0x708] sm:$0xff]
        %v2529 = vld [vmem:[#allocation6 + $0x710] sm:$0xff]
        %v2530 = vld [vmem:[#allocation6 + $0x718] sm:$0xff]
        %v2531 = vld [vmem:[#allocation6 + $0x720] sm:$0xff]
        %v2532 = vld [vmem:[#allocation6 + $0x728] sm:$0xff]
        %v2533 = vld [vmem:[#allocation6 + $0x730] sm:$0xff]
        %v2534 = vld [vmem:[#allocation6 + $0x738] sm:$0xff]
        %v2535 = vld [vmem:[#allocation6 + $0x740] sm:$0xff]
        %v2536 = vld [vmem:[#allocation6 + $0x748] sm:$0xff]
        %v2537 = vld [vmem:[#allocation6 + $0x750] sm:$0xff]
        %v2538 = vld [vmem:[#allocation6 + $0x758] sm:$0xff]
        %v2539 = vld [vmem:[#allocation6 + $0x760] sm:$0xff]
        %v2540 = vld [vmem:[#allocation6 + $0x768] sm:$0xff]
        %v2541 = vld [vmem:[#allocation6 + $0x770] sm:$0xff]
        %v2542 = vld [vmem:[#allocation6 + $0x778] sm:$0xff]
        %v2543 = vld [vmem:[#allocation6 + $0x780] sm:$0xff]
        %v2544 = vld [vmem:[#allocation6 + $0x788] sm:$0xff]
        %v2545 = vld [vmem:[#allocation6 + $0x790] sm:$0xff]
        %v2546 = vld [vmem:[#allocation6 + $0x798] sm:$0xff]
        %v2547 = vld [vmem:[#allocation6 + $0x7a0] sm:$0xff]
        %v2548 = vld [vmem:[#allocation6 + $0x7a8] sm:$0xff]
        %v2549 = vld [vmem:[#allocation6 + $0x7b0] sm:$0xff]
        %v2550 = vld [vmem:[#allocation6 + $0x7b8] sm:$0xff]
        %v2551 = vld [vmem:[#allocation6 + $0x7c0] sm:$0xff]
        %v2552 = vld [vmem:[#allocation6 + $0x7c8] sm:$0xff]
        %v2553 = vld [vmem:[#allocation6 + $0x7d0] sm:$0xff]
        %v2554 = vld [vmem:[#allocation6 + $0x7d8] sm:$0xff]
        %v2555 = vld [vmem:[#allocation6 + $0x7e0] sm:$0xff]
        %v2556 = vld [vmem:[#allocation6 + $0x7e8] sm:$0xff]
        %v2557 = vld [vmem:[#allocation6 + $0x7f0] sm:$0xff]
        %v2558 = vld [vmem:[#allocation6 + $0x7f8] sm:$0xff]
        %v2559 = vld [vmem:[%s7] sm:$0xf]
        %v2561 = vlaneseq
        %v2562 = vshrl.u32 %v2561, 7
        %v2563 = vsub.s32 0, %v2562
        %v2564 = vrot.slane %v2559, %v2563
        %v2565 = vlaneseq
        %v2566 = vshrl.u32 %v2565, 7
        %v2567 = vsub.s32 1, %v2566
        %v2568 = vrot.slane %v2559, %v2567
        %v2569 = vlaneseq
        %v2570 = vshrl.u32 %v2569, 7
        %v2571 = vsub.s32 2, %v2570
        %v2572 = vrot.slane %v2559, %v2571
        %v2573 = vlaneseq
        %v2574 = vshrl.u32 %v2573, 7
        %v2575 = vsub.s32 3, %v2574
        %v2576 = vrot.slane %v2559, %v2575
        %2581 = vmatprep.subr.mxu0 %v2304
        %2582 = vmatpush1.msra.mxu0 %v2303
        %2583 = vmatprep.subr.mxu0 %v2308
        %2584 = vmatpush1.msra.mxu0 %v2307
        %2585 = vmatprep.subr.mxu0 %v2312
        %2586 = vmatpush1.msra.mxu0 %v2311
        %2587 = vmatprep.subr.mxu0 %v2316
        %2588 = vmatpush1.msra.mxu0 %v2315
        %2589 = vmatprep.subr.mxu0 %v2320
        %2590 = vmatpush1.msra.mxu0 %v2319
        %2591 = vmatprep.subr.mxu0 %v2324
        %2592 = vmatpush1.msra.mxu0 %v2323
        %2593 = vmatprep.subr.mxu0 %v2328
        %2594 = vmatpush1.msra.mxu0 %v2327
        %2595 = vmatprep.subr.mxu0 %v2332
        %2596 = vmatpush1.msra.mxu0 %v2331
        %2597 = vmatprep.subr.mxu0 %v2336
        %2598 = vmatpush1.msra.mxu0 %v2335
        %2599 = vmatprep.subr.mxu0 %v2340
        %2600 = vmatpush1.msra.mxu0 %v2339
        %2601 = vmatprep.subr.mxu0 %v2344
        %2602 = vmatpush1.msra.mxu0 %v2343
        %2603 = vmatprep.subr.mxu0 %v2348
        %2604 = vmatpush1.msra.mxu0 %v2347
        %2605 = vmatprep.subr.mxu0 %v2352
        %2606 = vmatpush1.msra.mxu0 %v2351
        %2607 = vmatprep.subr.mxu0 %v2356
        %2608 = vmatpush1.msra.mxu0 %v2355
        %2609 = vmatprep.subr.mxu0 %v2360
        %2610 = vmatpush1.msra.mxu0 %v2359
        %2611 = vmatprep.subr.mxu0 %v2364
        %2612 = vmatpush1.msra.mxu0 %v2363
        %2613 = vmatprep.subr.mxu0 %v2368
        %2614 = vmatpush1.msra.mxu0 %v2367
        %2615 = vmatprep.subr.mxu0 %v2372
        %2616 = vmatpush1.msra.mxu0 %v2371
        %2617 = vmatprep.subr.mxu0 %v2376
        %2618 = vmatpush1.msra.mxu0 %v2375
        %2619 = vmatprep.subr.mxu0 %v2380
        %2620 = vmatpush1.msra.mxu0 %v2379
        %2621 = vmatprep.subr.mxu0 %v2384
        %2622 = vmatpush1.msra.mxu0 %v2383
        %2623 = vmatprep.subr.mxu0 %v2388
        %2624 = vmatpush1.msra.mxu0 %v2387
        %2625 = vmatprep.subr.mxu0 %v2392
        %2626 = vmatpush1.msra.mxu0 %v2391
        %2627 = vmatprep.subr.mxu0 %v2396
        %2628 = vmatpush1.msra.mxu0 %v2395
        %2629 = vmatprep.subr.mxu0 %v2400
        %2630 = vmatpush1.msra.mxu0 %v2399
        %2631 = vmatprep.subr.mxu0 %v2404
        %2632 = vmatpush1.msra.mxu0 %v2403
        %2633 = vmatprep.subr.mxu0 %v2408
        %2634 = vmatpush1.msra.mxu0 %v2407
        %2635 = vmatprep.subr.mxu0 %v2412
        %2636 = vmatpush1.msra.mxu0 %v2411
        %2637 = vmatprep.subr.mxu0 %v2416
        %2638 = vmatpush1.msra.mxu0 %v2415
        %2639 = vmatprep.subr.mxu0 %v2420
        %2640 = vmatpush1.msra.mxu0 %v2419
        %2641 = vmatprep.subr.mxu0 %v2424
        %2642 = vmatpush1.msra.mxu0 %v2423
        %2643 = vmatprep.subr.mxu0 %v2428
        %2644 = vmatpush1.msra.mxu0 %v2427
        %2645 = vmatprep.mubr.f32.mxu0 %v2300
        %2646 = vmatmul.mubr.f32.gmra.mrb[0].mxu0 %v2299
        %v2647 = vpop.f32.mrb[0].mxu0
        %v2648 = vadd.f32 %v2564, %v2647
        %v2649 = vpop.f32.mrb[0].mxu0
        %v2650 = vadd.f32 %v2568, %v2649
        %2651 = vdwg.mxu0
        %2652 = vmatprep.subr.mxu0 %v2432
        %2653 = vmatpush1.msra.mxu0 %v2431
        %2654 = vmatprep.subr.mxu0 %v2436
        %2655 = vmatpush1.msra.mxu0 %v2435
        %2656 = vmatprep.subr.mxu0 %v2440
        %2657 = vmatpush1.msra.mxu0 %v2439
        %2658 = vmatprep.subr.mxu0 %v2444
        %2659 = vmatpush1.msra.mxu0 %v2443
        %2660 = vmatprep.subr.mxu0 %v2448
        %2661 = vmatpush1.msra.mxu0 %v2447
        %2662 = vmatprep.subr.mxu0 %v2452
        %2663 = vmatpush1.msra.mxu0 %v2451
        %2664 = vmatprep.subr.mxu0 %v2456
        %2665 = vmatpush1.msra.mxu0 %v2455
        %2666 = vmatprep.subr.mxu0 %v2460
        %2667 = vmatpush1.msra.mxu0 %v2459
        %2668 = vmatprep.subr.mxu0 %v2464
        %2669 = vmatpush1.msra.mxu0 %v2463
        %2670 = vmatprep.subr.mxu0 %v2468
        %2671 = vmatpush1.msra.mxu0 %v2467
        %2672 = vmatprep.subr.mxu0 %v2472
        %2673 = vmatpush1.msra.mxu0 %v2471
        %2674 = vmatprep.subr.mxu0 %v2476
        %2675 = vmatpush1.msra.mxu0 %v2475
        %2676 = vmatprep.subr.mxu0 %v2480
        %2677 = vmatpush1.msra.mxu0 %v2479
        %2678 = vmatprep.subr.mxu0 %v2484
        %2679 = vmatpush1.msra.mxu0 %v2483
        %2680 = vmatprep.subr.mxu0 %v2488
        %2681 = vmatpush1.msra.mxu0 %v2487
        %2682 = vmatprep.subr.mxu0 %v2492
        %2683 = vmatpush1.msra.mxu0 %v2491
        %2684 = vmatprep.subr.mxu0 %v2496
        %2685 = vmatpush1.msra.mxu0 %v2495
        %2686 = vmatprep.subr.mxu0 %v2500
        %2687 = vmatpush1.msra.mxu0 %v2499
        %2688 = vmatprep.subr.mxu0 %v2504
        %2689 = vmatpush1.msra.mxu0 %v2503
        %2690 = vmatprep.subr.mxu0 %v2508
        %2691 = vmatpush1.msra.mxu0 %v2507
        %2692 = vmatprep.subr.mxu0 %v2512
        %2693 = vmatpush1.msra.mxu0 %v2511
        %2694 = vmatprep.subr.mxu0 %v2516
        %2695 = vmatpush1.msra.mxu0 %v2515
        %2696 = vmatprep.subr.mxu0 %v2520
        %2697 = vmatpush1.msra.mxu0 %v2519
        %2698 = vmatprep.subr.mxu0 %v2524
        %2699 = vmatpush1.msra.mxu0 %v2523
        %2700 = vmatprep.subr.mxu0 %v2528
        %2701 = vmatpush1.msra.mxu0 %v2527
        %2702 = vmatprep.subr.mxu0 %v2532
        %2703 = vmatpush1.msra.mxu0 %v2531
        %2704 = vmatprep.subr.mxu0 %v2536
        %2705 = vmatpush1.msra.mxu0 %v2535
        %2706 = vmatprep.subr.mxu0 %v2540
        %2707 = vmatpush1.msra.mxu0 %v2539
        %2708 = vmatprep.subr.mxu0 %v2544
        %2709 = vmatpush1.msra.mxu0 %v2543
        %2710 = vmatprep.subr.mxu0 %v2548
        %2711 = vmatpush1.msra.mxu0 %v2547
        %2712 = vmatprep.subr.mxu0 %v2552
        %2713 = vmatpush1.msra.mxu0 %v2551
        %2714 = vmatprep.subr.mxu0 %v2556
        %2715 = vmatpush1.msra.mxu0 %v2555
        %2716 = vmatprep.mubr.f32.mxu0 %v2302
        %2717 = vmatmul.mubr.f32.gmra.mrb[0].mxu0 %v2301
        %v2718 = vpop.f32.mrb[0].mxu0
        %v2719 = vadd.f32 %v2648, %v2718
        %v2720 = vpop.f32.mrb[0].mxu0
        %v2721 = vadd.f32 %v2650, %v2720
        %2722 = vdwg.mxu0
        %2723 = vmatprep.subr.mxu0 %v2306
        %2724 = vmatpush1.msra.mxu0 %v2305
        %2725 = vmatprep.subr.mxu0 %v2310
        %2726 = vmatpush1.msra.mxu0 %v2309
        %2727 = vmatprep.subr.mxu0 %v2314
        %2728 = vmatpush1.msra.mxu0 %v2313
        %2729 = vmatprep.subr.mxu0 %v2318
        %2730 = vmatpush1.msra.mxu0 %v2317
        %2731 = vmatprep.subr.mxu0 %v2322
        %2732 = vmatpush1.msra.mxu0 %v2321
        %2733 = vmatprep.subr.mxu0 %v2326
        %2734 = vmatpush1.msra.mxu0 %v2325
        %2735 = vmatprep.subr.mxu0 %v2330
        %2736 = vmatpush1.msra.mxu0 %v2329
        %2737 = vmatprep.subr.mxu0 %v2334
        %2738 = vmatpush1.msra.mxu0 %v2333
        %2739 = vmatprep.subr.mxu0 %v2338
        %2740 = vmatpush1.msra.mxu0 %v2337
        %2741 = vmatprep.subr.mxu0 %v2342
        %2742 = vmatpush1.msra.mxu0 %v2341
        %2743 = vmatprep.subr.mxu0 %v2346
        %2744 = vmatpush1.msra.mxu0 %v2345
        %2745 = vmatprep.subr.mxu0 %v2350
        %2746 = vmatpush1.msra.mxu0 %v2349
        %2747 = vmatprep.subr.mxu0 %v2354
        %2748 = vmatpush1.msra.mxu0 %v2353
        %2749 = vmatprep.subr.mxu0 %v2358
        %2750 = vmatpush1.msra.mxu0 %v2357
        %2751 = vmatprep.subr.mxu0 %v2362
        %2752 = vmatpush1.msra.mxu0 %v2361
        %2753 = vmatprep.subr.mxu0 %v2366
        %2754 = vmatpush1.msra.mxu0 %v2365
        %2755 = vmatprep.subr.mxu0 %v2370
        %2756 = vmatpush1.msra.mxu0 %v2369
        %2757 = vmatprep.subr.mxu0 %v2374
        %2758 = vmatpush1.msra.mxu0 %v2373
        %2759 = vmatprep.subr.mxu0 %v2378
        %2760 = vmatpush1.msra.mxu0 %v2377
        %2761 = vmatprep.subr.mxu0 %v2382
        %2762 = vmatpush1.msra.mxu0 %v2381
        %2763 = vmatprep.subr.mxu0 %v2386
        %2764 = vmatpush1.msra.mxu0 %v2385
        %2765 = vmatprep.subr.mxu0 %v2390
        %2766 = vmatpush1.msra.mxu0 %v2389
        %2767 = vmatprep.subr.mxu0 %v2394
        %2768 = vmatpush1.msra.mxu0 %v2393
        %2769 = vmatprep.subr.mxu0 %v2398
        %2770 = vmatpush1.msra.mxu0 %v2397
        %2771 = vmatprep.subr.mxu0 %v2402
        %2772 = vmatpush1.msra.mxu0 %v2401
        %2773 = vmatprep.subr.mxu0 %v2406
        %2774 = vmatpush1.msra.mxu0 %v2405
        %2775 = vmatprep.subr.mxu0 %v2410
        %2776 = vmatpush1.msra.mxu0 %v2409
        %2777 = vmatprep.subr.mxu0 %v2414
        %2778 = vmatpush1.msra.mxu0 %v2413
        %2779 = vmatprep.subr.mxu0 %v2418
        %2780 = vmatpush1.msra.mxu0 %v2417
        %2781 = vmatprep.subr.mxu0 %v2422
        %2782 = vmatpush1.msra.mxu0 %v2421
        %2783 = vmatprep.subr.mxu0 %v2426
        %2784 = vmatpush1.msra.mxu0 %v2425
        %2785 = vmatprep.subr.mxu0 %v2430
        %2786 = vmatpush1.msra.mxu0 %v2429
        %2787 = vmatprep.mubr.f32.mxu0 %v2300
        %2788 = vmatmul.mubr.f32.gmra.mrb[0].mxu0 %v2299
        %v2789 = vpop.f32.mrb[0].mxu0
        %v2790 = vadd.f32 %v2572, %v2789
        %v2791 = vpop.f32.mrb[0].mxu0
        %v2792 = vadd.f32 %v2576, %v2791
        %2793 = vdwg.mxu0
        %2794 = vmatprep.subr.mxu0 %v2434
        %2795 = vmatpush1.msra.mxu0 %v2433
        %2796 = vmatprep.subr.mxu0 %v2438
        %2797 = vmatpush1.msra.mxu0 %v2437
        %2798 = vmatprep.subr.mxu0 %v2442
        %2799 = vmatpush1.msra.mxu0 %v2441
        %2800 = vmatprep.subr.mxu0 %v2446
        %2801 = vmatpush1.msra.mxu0 %v2445
        %2802 = vmatprep.subr.mxu0 %v2450
        %2803 = vmatpush1.msra.mxu0 %v2449
        %2804 = vmatprep.subr.mxu0 %v2454
        %2805 = vmatpush1.msra.mxu0 %v2453
        %2806 = vmatprep.subr.mxu0 %v2458
        %2807 = vmatpush1.msra.mxu0 %v2457
        %2808 = vmatprep.subr.mxu0 %v2462
        %2809 = vmatpush1.msra.mxu0 %v2461
        %2810 = vmatprep.subr.mxu0 %v2466
        %2811 = vmatpush1.msra.mxu0 %v2465
        %2812 = vmatprep.subr.mxu0 %v2470
        %2813 = vmatpush1.msra.mxu0 %v2469
        %2814 = vmatprep.subr.mxu0 %v2474
        %2815 = vmatpush1.msra.mxu0 %v2473
        %2816 = vmatprep.subr.mxu0 %v2478
        %2817 = vmatpush1.msra.mxu0 %v2477
        %2818 = vmatprep.subr.mxu0 %v2482
        %2819 = vmatpush1.msra.mxu0 %v2481
        %2820 = vmatprep.subr.mxu0 %v2486
        %2821 = vmatpush1.msra.mxu0 %v2485
        %2822 = vmatprep.subr.mxu0 %v2490
        %2823 = vmatpush1.msra.mxu0 %v2489
        %2824 = vmatprep.subr.mxu0 %v2494
        %2825 = vmatpush1.msra.mxu0 %v2493
        %2826 = vmatprep.subr.mxu0 %v2498
        %2827 = vmatpush1.msra.mxu0 %v2497
        %2828 = vmatprep.subr.mxu0 %v2502
        %2829 = vmatpush1.msra.mxu0 %v2501
        %2830 = vmatprep.subr.mxu0 %v2506
        %2831 = vmatpush1.msra.mxu0 %v2505
        %2832 = vmatprep.subr.mxu0 %v2510
        %2833 = vmatpush1.msra.mxu0 %v2509
        %2834 = vmatprep.subr.mxu0 %v2514
        %2835 = vmatpush1.msra.mxu0 %v2513
        %2836 = vmatprep.subr.mxu0 %v2518
        %2837 = vmatpush1.msra.mxu0 %v2517
        %2838 = vmatprep.subr.mxu0 %v2522
        %2839 = vmatpush1.msra.mxu0 %v2521
        %2840 = vmatprep.subr.mxu0 %v2526
        %2841 = vmatpush1.msra.mxu0 %v2525
        %2842 = vmatprep.subr.mxu0 %v2530
        %2843 = vmatpush1.msra.mxu0 %v2529
        %2844 = vmatprep.subr.mxu0 %v2534
        %2845 = vmatpush1.msra.mxu0 %v2533
        %2846 = vmatprep.subr.mxu0 %v2538
        %2847 = vmatpush1.msra.mxu0 %v2537
        %2848 = vmatprep.subr.mxu0 %v2542
        %2849 = vmatpush1.msra.mxu0 %v2541
        %2850 = vmatprep.subr.mxu0 %v2546
        %2851 = vmatpush1.msra.mxu0 %v2545
        %2852 = vmatprep.subr.mxu0 %v2550
        %2853 = vmatpush1.msra.mxu0 %v2549
        %2854 = vmatprep.subr.mxu0 %v2554
        %2855 = vmatpush1.msra.mxu0 %v2553
        %2856 = vmatprep.subr.mxu0 %v2558
        %2857 = vmatpush1.msra.mxu0 %v2557
        %2858 = vmatprep.mubr.f32.mxu0 %v2302
        %2859 = vmatmul.mubr.f32.gmra.mrb[0].mxu0 %v2301
        %v2860 = vpop.f32.mrb[0].mxu0
        %v2861 = vadd.f32 %v2790, %v2860
        %v2862 = vpop.f32.mrb[0].mxu0
        %v2863 = vadd.f32 %v2792, %v2862
        %2864 = vdwg.mxu0
        %v2865 = vmax.f32 %v2719, 0.0
        %v2866 = vmax.f32 %v2721, 0.0
        %v2867 = vmax.f32 %v2861, 0.0
        %v2868 = vmax.f32 %v2863, 0.0
        %v2869 = vld [vmem:[#allocation8] sm:$0xff]
        %v2870 = vld [vmem:[#allocation8 + $0x8] sm:$0xff]
        %v2871 = vld [vmem:[#allocation8 + $0x10] sm:$0xff]
        %v2872 = vld [vmem:[#allocation8 + $0x18] sm:$0xff]
        %v2873 = vld [vmem:[#allocation8 + $0x20] sm:$0xff]
        %v2874 = vld [vmem:[#allocation8 + $0x28] sm:$0xff]
        %v2875 = vld [vmem:[#allocation8 + $0x30] sm:$0xff]
        %v2876 = vld [vmem:[#allocation8 + $0x38] sm:$0xff]
        %v2877 = vld [vmem:[#allocation8 + $0x40] sm:$0xff]
        %v2878 = vld [vmem:[#allocation8 + $0x48] sm:$0xff]
        %v2879 = vld [vmem:[#allocation8 + $0x50] sm:$0xff]
        %v2880 = vld [vmem:[#allocation8 + $0x58] sm:$0xff]
        %v2881 = vld [vmem:[#allocation8 + $0x60] sm:$0xff]
        %v2882 = vld [vmem:[#allocation8 + $0x68] sm:$0xff]
        %v2883 = vld [vmem:[#allocation8 + $0x70] sm:$0xff]
        %v2884 = vld [vmem:[#allocation8 + $0x78] sm:$0xff]
        %v2885 = vld [vmem:[#allocation8 + $0x80] sm:$0xff]
        %v2886 = vld [vmem:[#allocation8 + $0x88] sm:$0xff]
        %v2887 = vld [vmem:[#allocation8 + $0x90] sm:$0xff]
        %v2888 = vld [vmem:[#allocation8 + $0x98] sm:$0xff]
        %v2889 = vld [vmem:[#allocation8 + $0xa0] sm:$0xff]
        %v2890 = vld [vmem:[#allocation8 + $0xa8] sm:$0xff]
        %v2891 = vld [vmem:[#allocation8 + $0xb0] sm:$0xff]
        %v2892 = vld [vmem:[#allocation8 + $0xb8] sm:$0xff]
        %v2893 = vld [vmem:[#allocation8 + $0xc0] sm:$0xff]
        %v2894 = vld [vmem:[#allocation8 + $0xc8] sm:$0xff]
        %v2895 = vld [vmem:[#allocation8 + $0xd0] sm:$0xff]
        %v2896 = vld [vmem:[#allocation8 + $0xd8] sm:$0xff]
        %v2897 = vld [vmem:[#allocation8 + $0xe0] sm:$0xff]
        %v2898 = vld [vmem:[#allocation8 + $0xe8] sm:$0xff]
        %v2899 = vld [vmem:[#allocation8 + $0xf0] sm:$0xff]
        %v2900 = vld [vmem:[#allocation8 + $0xf8] sm:$0xff]
        %v2901 = vld [vmem:[#allocation8 + $0x100] sm:$0xff]
        %v2902 = vld [vmem:[#allocation8 + $0x108] sm:$0xff]
        %v2903 = vld [vmem:[#allocation8 + $0x110] sm:$0xff]
        %v2904 = vld [vmem:[#allocation8 + $0x118] sm:$0xff]
        %v2905 = vld [vmem:[#allocation8 + $0x120] sm:$0xff]
        %v2906 = vld [vmem:[#allocation8 + $0x128] sm:$0xff]
        %v2907 = vld [vmem:[#allocation8 + $0x130] sm:$0xff]
        %v2908 = vld [vmem:[#allocation8 + $0x138] sm:$0xff]
        %v2909 = vld [vmem:[#allocation8 + $0x140] sm:$0xff]
        %v2910 = vld [vmem:[#allocation8 + $0x148] sm:$0xff]
        %v2911 = vld [vmem:[#allocation8 + $0x150] sm:$0xff]
        %v2912 = vld [vmem:[#allocation8 + $0x158] sm:$0xff]
        %v2913 = vld [vmem:[#allocation8 + $0x160] sm:$0xff]
        %v2914 = vld [vmem:[#allocation8 + $0x168] sm:$0xff]
        %v2915 = vld [vmem:[#allocation8 + $0x170] sm:$0xff]
        %v2916 = vld [vmem:[#allocation8 + $0x178] sm:$0xff]
        %v2917 = vld [vmem:[#allocation8 + $0x180] sm:$0xff]
        %v2918 = vld [vmem:[#allocation8 + $0x188] sm:$0xff]
        %v2919 = vld [vmem:[#allocation8 + $0x190] sm:$0xff]
        %v2920 = vld [vmem:[#allocation8 + $0x198] sm:$0xff]
        %v2921 = vld [vmem:[#allocation8 + $0x1a0] sm:$0xff]
        %v2922 = vld [vmem:[#allocation8 + $0x1a8] sm:$0xff]
        %v2923 = vld [vmem:[#allocation8 + $0x1b0] sm:$0xff]
        %v2924 = vld [vmem:[#allocation8 + $0x1b8] sm:$0xff]
        %v2925 = vld [vmem:[#allocation8 + $0x1c0] sm:$0xff]
        %v2926 = vld [vmem:[#allocation8 + $0x1c8] sm:$0xff]
        %v2927 = vld [vmem:[#allocation8 + $0x1d0] sm:$0xff]
        %v2928 = vld [vmem:[#allocation8 + $0x1d8] sm:$0xff]
        %v2929 = vld [vmem:[#allocation8 + $0x1e0] sm:$0xff]
        %v2930 = vld [vmem:[#allocation8 + $0x1e8] sm:$0xff]
        %v2931 = vld [vmem:[#allocation8 + $0x1f0] sm:$0xff]
        %v2932 = vld [vmem:[#allocation8 + $0x1f8] sm:$0xff]
        %v2933 = vld [vmem:[#allocation8 + $0x200] sm:$0xff]
        %v2934 = vld [vmem:[#allocation8 + $0x208] sm:$0xff]
        %v2935 = vld [vmem:[#allocation8 + $0x210] sm:$0xff]
        %v2936 = vld [vmem:[#allocation8 + $0x218] sm:$0xff]
        %v2937 = vld [vmem:[#allocation8 + $0x220] sm:$0xff]
        %v2938 = vld [vmem:[#allocation8 + $0x228] sm:$0xff]
        %v2939 = vld [vmem:[#allocation8 + $0x230] sm:$0xff]
        %v2940 = vld [vmem:[#allocation8 + $0x238] sm:$0xff]
        %v2941 = vld [vmem:[#allocation8 + $0x240] sm:$0xff]
        %v2942 = vld [vmem:[#allocation8 + $0x248] sm:$0xff]
        %v2943 = vld [vmem:[#allocation8 + $0x250] sm:$0xff]
        %v2944 = vld [vmem:[#allocation8 + $0x258] sm:$0xff]
        %v2945 = vld [vmem:[#allocation8 + $0x260] sm:$0xff]
        %v2946 = vld [vmem:[#allocation8 + $0x268] sm:$0xff]
        %v2947 = vld [vmem:[#allocation8 + $0x270] sm:$0xff]
        %v2948 = vld [vmem:[#allocation8 + $0x278] sm:$0xff]
        %v2949 = vld [vmem:[#allocation8 + $0x280] sm:$0xff]
        %v2950 = vld [vmem:[#allocation8 + $0x288] sm:$0xff]
        %v2951 = vld [vmem:[#allocation8 + $0x290] sm:$0xff]
        %v2952 = vld [vmem:[#allocation8 + $0x298] sm:$0xff]
        %v2953 = vld [vmem:[#allocation8 + $0x2a0] sm:$0xff]
        %v2954 = vld [vmem:[#allocation8 + $0x2a8] sm:$0xff]
        %v2955 = vld [vmem:[#allocation8 + $0x2b0] sm:$0xff]
        %v2956 = vld [vmem:[#allocation8 + $0x2b8] sm:$0xff]
        %v2957 = vld [vmem:[#allocation8 + $0x2c0] sm:$0xff]
        %v2958 = vld [vmem:[#allocation8 + $0x2c8] sm:$0xff]
        %v2959 = vld [vmem:[#allocation8 + $0x2d0] sm:$0xff]
        %v2960 = vld [vmem:[#allocation8 + $0x2d8] sm:$0xff]
        %v2961 = vld [vmem:[#allocation8 + $0x2e0] sm:$0xff]
        %v2962 = vld [vmem:[#allocation8 + $0x2e8] sm:$0xff]
        %v2963 = vld [vmem:[#allocation8 + $0x2f0] sm:$0xff]
        %v2964 = vld [vmem:[#allocation8 + $0x2f8] sm:$0xff]
        %v2965 = vld [vmem:[#allocation8 + $0x300] sm:$0xff]
        %v2966 = vld [vmem:[#allocation8 + $0x308] sm:$0xff]
        %v2967 = vld [vmem:[#allocation8 + $0x310] sm:$0xff]
        %v2968 = vld [vmem:[#allocation8 + $0x318] sm:$0xff]
        %v2969 = vld [vmem:[#allocation8 + $0x320] sm:$0xff]
        %v2970 = vld [vmem:[#allocation8 + $0x328] sm:$0xff]
        %v2971 = vld [vmem:[#allocation8 + $0x330] sm:$0xff]
        %v2972 = vld [vmem:[#allocation8 + $0x338] sm:$0xff]
        %v2973 = vld [vmem:[#allocation8 + $0x340] sm:$0xff]
        %v2974 = vld [vmem:[#allocation8 + $0x348] sm:$0xff]
        %v2975 = vld [vmem:[#allocation8 + $0x350] sm:$0xff]
        %v2976 = vld [vmem:[#allocation8 + $0x358] sm:$0xff]
        %v2977 = vld [vmem:[#allocation8 + $0x360] sm:$0xff]
        %v2978 = vld [vmem:[#allocation8 + $0x368] sm:$0xff]
        %v2979 = vld [vmem:[#allocation8 + $0x370] sm:$0xff]
        %v2980 = vld [vmem:[#allocation8 + $0x378] sm:$0xff]
        %v2981 = vld [vmem:[#allocation8 + $0x380] sm:$0xff]
        %v2982 = vld [vmem:[#allocation8 + $0x388] sm:$0xff]
        %v2983 = vld [vmem:[#allocation8 + $0x390] sm:$0xff]
        %v2984 = vld [vmem:[#allocation8 + $0x398] sm:$0xff]
        %v2985 = vld [vmem:[#allocation8 + $0x3a0] sm:$0xff]
        %v2986 = vld [vmem:[#allocation8 + $0x3a8] sm:$0xff]
        %v2987 = vld [vmem:[#allocation8 + $0x3b0] sm:$0xff]
        %v2988 = vld [vmem:[#allocation8 + $0x3b8] sm:$0xff]
        %v2989 = vld [vmem:[#allocation8 + $0x3c0] sm:$0xff]
        %v2990 = vld [vmem:[#allocation8 + $0x3c8] sm:$0xff]
        %v2991 = vld [vmem:[#allocation8 + $0x3d0] sm:$0xff]
        %v2992 = vld [vmem:[#allocation8 + $0x3d8] sm:$0xff]
        %v2993 = vld [vmem:[#allocation8 + $0x3e0] sm:$0xff]
        %v2994 = vld [vmem:[#allocation8 + $0x3e8] sm:$0xff]
        %v2995 = vld [vmem:[#allocation8 + $0x3f0] sm:$0xff]
        %v2996 = vld [vmem:[#allocation8 + $0x3f8] sm:$0xff]
        %v2997 = vld [vmem:[#allocation8 + $0x400] sm:$0xff]
        %v2998 = vld [vmem:[#allocation8 + $0x408] sm:$0xff]
        %v2999 = vld [vmem:[#allocation8 + $0x410] sm:$0xff]
        %v3000 = vld [vmem:[#allocation8 + $0x418] sm:$0xff]
        %v3001 = vld [vmem:[#allocation8 + $0x420] sm:$0xff]
        %v3002 = vld [vmem:[#allocation8 + $0x428] sm:$0xff]
        %v3003 = vld [vmem:[#allocation8 + $0x430] sm:$0xff]
        %v3004 = vld [vmem:[#allocation8 + $0x438] sm:$0xff]
        %v3005 = vld [vmem:[#allocation8 + $0x440] sm:$0xff]
        %v3006 = vld [vmem:[#allocation8 + $0x448] sm:$0xff]
        %v3007 = vld [vmem:[#allocation8 + $0x450] sm:$0xff]
        %v3008 = vld [vmem:[#allocation8 + $0x458] sm:$0xff]
        %v3009 = vld [vmem:[#allocation8 + $0x460] sm:$0xff]
        %v3010 = vld [vmem:[#allocation8 + $0x468] sm:$0xff]
        %v3011 = vld [vmem:[#allocation8 + $0x470] sm:$0xff]
        %v3012 = vld [vmem:[#allocation8 + $0x478] sm:$0xff]
        %v3013 = vld [vmem:[#allocation8 + $0x480] sm:$0xff]
        %v3014 = vld [vmem:[#allocation8 + $0x488] sm:$0xff]
        %v3015 = vld [vmem:[#allocation8 + $0x490] sm:$0xff]
        %v3016 = vld [vmem:[#allocation8 + $0x498] sm:$0xff]
        %v3017 = vld [vmem:[#allocation8 + $0x4a0] sm:$0xff]
        %v3018 = vld [vmem:[#allocation8 + $0x4a8] sm:$0xff]
        %v3019 = vld [vmem:[#allocation8 + $0x4b0] sm:$0xff]
        %v3020 = vld [vmem:[#allocation8 + $0x4b8] sm:$0xff]
        %v3021 = vld [vmem:[#allocation8 + $0x4c0] sm:$0xff]
        %v3022 = vld [vmem:[#allocation8 + $0x4c8] sm:$0xff]
        %v3023 = vld [vmem:[#allocation8 + $0x4d0] sm:$0xff]
        %v3024 = vld [vmem:[#allocation8 + $0x4d8] sm:$0xff]
        %v3025 = vld [vmem:[#allocation8 + $0x4e0] sm:$0xff]
        %v3026 = vld [vmem:[#allocation8 + $0x4e8] sm:$0xff]
        %v3027 = vld [vmem:[#allocation8 + $0x4f0] sm:$0xff]
        %v3028 = vld [vmem:[#allocation8 + $0x4f8] sm:$0xff]
        %v3029 = vld [vmem:[#allocation8 + $0x500] sm:$0xff]
        %v3030 = vld [vmem:[#allocation8 + $0x508] sm:$0xff]
        %v3031 = vld [vmem:[#allocation8 + $0x510] sm:$0xff]
        %v3032 = vld [vmem:[#allocation8 + $0x518] sm:$0xff]
        %v3033 = vld [vmem:[#allocation8 + $0x520] sm:$0xff]
        %v3034 = vld [vmem:[#allocation8 + $0x528] sm:$0xff]
        %v3035 = vld [vmem:[#allocation8 + $0x530] sm:$0xff]
        %v3036 = vld [vmem:[#allocation8 + $0x538] sm:$0xff]
        %v3037 = vld [vmem:[#allocation8 + $0x540] sm:$0xff]
        %v3038 = vld [vmem:[#allocation8 + $0x548] sm:$0xff]
        %v3039 = vld [vmem:[#allocation8 + $0x550] sm:$0xff]
        %v3040 = vld [vmem:[#allocation8 + $0x558] sm:$0xff]
        %v3041 = vld [vmem:[#allocation8 + $0x560] sm:$0xff]
        %v3042 = vld [vmem:[#allocation8 + $0x568] sm:$0xff]
        %v3043 = vld [vmem:[#allocation8 + $0x570] sm:$0xff]
        %v3044 = vld [vmem:[#allocation8 + $0x578] sm:$0xff]
        %v3045 = vld [vmem:[#allocation8 + $0x580] sm:$0xff]
        %v3046 = vld [vmem:[#allocation8 + $0x588] sm:$0xff]
        %v3047 = vld [vmem:[#allocation8 + $0x590] sm:$0xff]
        %v3048 = vld [vmem:[#allocation8 + $0x598] sm:$0xff]
        %v3049 = vld [vmem:[#allocation8 + $0x5a0] sm:$0xff]
        %v3050 = vld [vmem:[#allocation8 + $0x5a8] sm:$0xff]
        %v3051 = vld [vmem:[#allocation8 + $0x5b0] sm:$0xff]
        %v3052 = vld [vmem:[#allocation8 + $0x5b8] sm:$0xff]
        %v3053 = vld [vmem:[#allocation8 + $0x5c0] sm:$0xff]
        %v3054 = vld [vmem:[#allocation8 + $0x5c8] sm:$0xff]
        %v3055 = vld [vmem:[#allocation8 + $0x5d0] sm:$0xff]
        %v3056 = vld [vmem:[#allocation8 + $0x5d8] sm:$0xff]
        %v3057 = vld [vmem:[#allocation8 + $0x5e0] sm:$0xff]
        %v3058 = vld [vmem:[#allocation8 + $0x5e8] sm:$0xff]
        %v3059 = vld [vmem:[#allocation8 + $0x5f0] sm:$0xff]
        %v3060 = vld [vmem:[#allocation8 + $0x5f8] sm:$0xff]
        %v3061 = vld [vmem:[#allocation8 + $0x600] sm:$0xff]
        %v3062 = vld [vmem:[#allocation8 + $0x608] sm:$0xff]
        %v3063 = vld [vmem:[#allocation8 + $0x610] sm:$0xff]
        %v3064 = vld [vmem:[#allocation8 + $0x618] sm:$0xff]
        %v3065 = vld [vmem:[#allocation8 + $0x620] sm:$0xff]
        %v3066 = vld [vmem:[#allocation8 + $0x628] sm:$0xff]
        %v3067 = vld [vmem:[#allocation8 + $0x630] sm:$0xff]
        %v3068 = vld [vmem:[#allocation8 + $0x638] sm:$0xff]
        %v3069 = vld [vmem:[#allocation8 + $0x640] sm:$0xff]
        %v3070 = vld [vmem:[#allocation8 + $0x648] sm:$0xff]
        %v3071 = vld [vmem:[#allocation8 + $0x650] sm:$0xff]
        %v3072 = vld [vmem:[#allocation8 + $0x658] sm:$0xff]
        %v3073 = vld [vmem:[#allocation8 + $0x660] sm:$0xff]
        %v3074 = vld [vmem:[#allocation8 + $0x668] sm:$0xff]
        %v3075 = vld [vmem:[#allocation8 + $0x670] sm:$0xff]
        %v3076 = vld [vmem:[#allocation8 + $0x678] sm:$0xff]
        %v3077 = vld [vmem:[#allocation8 + $0x680] sm:$0xff]
        %v3078 = vld [vmem:[#allocation8 + $0x688] sm:$0xff]
        %v3079 = vld [vmem:[#allocation8 + $0x690] sm:$0xff]
        %v3080 = vld [vmem:[#allocation8 + $0x698] sm:$0xff]
        %v3081 = vld [vmem:[#allocation8 + $0x6a0] sm:$0xff]
        %v3082 = vld [vmem:[#allocation8 + $0x6a8] sm:$0xff]
        %v3083 = vld [vmem:[#allocation8 + $0x6b0] sm:$0xff]
        %v3084 = vld [vmem:[#allocation8 + $0x6b8] sm:$0xff]
        %v3085 = vld [vmem:[#allocation8 + $0x6c0] sm:$0xff]
        %v3086 = vld [vmem:[#allocation8 + $0x6c8] sm:$0xff]
        %v3087 = vld [vmem:[#allocation8 + $0x6d0] sm:$0xff]
        %v3088 = vld [vmem:[#allocation8 + $0x6d8] sm:$0xff]
        %v3089 = vld [vmem:[#allocation8 + $0x6e0] sm:$0xff]
        %v3090 = vld [vmem:[#allocation8 + $0x6e8] sm:$0xff]
        %v3091 = vld [vmem:[#allocation8 + $0x6f0] sm:$0xff]
        %v3092 = vld [vmem:[#allocation8 + $0x6f8] sm:$0xff]
        %v3093 = vld [vmem:[#allocation8 + $0x700] sm:$0xff]
        %v3094 = vld [vmem:[#allocation8 + $0x708] sm:$0xff]
        %v3095 = vld [vmem:[#allocation8 + $0x710] sm:$0xff]
        %v3096 = vld [vmem:[#allocation8 + $0x718] sm:$0xff]
        %v3097 = vld [vmem:[#allocation8 + $0x720] sm:$0xff]
        %v3098 = vld [vmem:[#allocation8 + $0x728] sm:$0xff]
        %v3099 = vld [vmem:[#allocation8 + $0x730] sm:$0xff]
        %v3100 = vld [vmem:[#allocation8 + $0x738] sm:$0xff]
        %v3101 = vld [vmem:[#allocation8 + $0x740] sm:$0xff]
        %v3102 = vld [vmem:[#allocation8 + $0x748] sm:$0xff]
        %v3103 = vld [vmem:[#allocation8 + $0x750] sm:$0xff]
        %v3104 = vld [vmem:[#allocation8 + $0x758] sm:$0xff]
        %v3105 = vld [vmem:[#allocation8 + $0x760] sm:$0xff]
        %v3106 = vld [vmem:[#allocation8 + $0x768] sm:$0xff]
        %v3107 = vld [vmem:[#allocation8 + $0x770] sm:$0xff]
        %v3108 = vld [vmem:[#allocation8 + $0x778] sm:$0xff]
        %v3109 = vld [vmem:[#allocation8 + $0x780] sm:$0xff]
        %v3110 = vld [vmem:[#allocation8 + $0x788] sm:$0xff]
        %v3111 = vld [vmem:[#allocation8 + $0x790] sm:$0xff]
        %v3112 = vld [vmem:[#allocation8 + $0x798] sm:$0xff]
        %v3113 = vld [vmem:[#allocation8 + $0x7a0] sm:$0xff]
        %v3114 = vld [vmem:[#allocation8 + $0x7a8] sm:$0xff]
        %v3115 = vld [vmem:[#allocation8 + $0x7b0] sm:$0xff]
        %v3116 = vld [vmem:[#allocation8 + $0x7b8] sm:$0xff]
        %v3117 = vld [vmem:[#allocation8 + $0x7c0] sm:$0xff]
        %v3118 = vld [vmem:[#allocation8 + $0x7c8] sm:$0xff]
        %v3119 = vld [vmem:[#allocation8 + $0x7d0] sm:$0xff]
        %v3120 = vld [vmem:[#allocation8 + $0x7d8] sm:$0xff]
        %v3121 = vld [vmem:[#allocation8 + $0x7e0] sm:$0xff]
        %v3122 = vld [vmem:[#allocation8 + $0x7e8] sm:$0xff]
        %v3123 = vld [vmem:[#allocation8 + $0x7f0] sm:$0xff]
        %v3124 = vld [vmem:[#allocation8 + $0x7f8] sm:$0xff]
        %v3125 = vld [vmem:[%s9] sm:$0xf]
        %v3127 = vlaneseq
        %v3128 = vshrl.u32 %v3127, 7
        %v3129 = vsub.s32 0, %v3128
        %v3130 = vrot.slane %v3125, %v3129
        %v3131 = vlaneseq
        %v3132 = vshrl.u32 %v3131, 7
        %v3133 = vsub.s32 1, %v3132
        %v3134 = vrot.slane %v3125, %v3133
        %v3135 = vlaneseq
        %v3136 = vshrl.u32 %v3135, 7
        %v3137 = vsub.s32 2, %v3136
        %v3138 = vrot.slane %v3125, %v3137
        %v3139 = vlaneseq
        %v3140 = vshrl.u32 %v3139, 7
        %v3141 = vsub.s32 3, %v3140
        %v3142 = vrot.slane %v3125, %v3141
        %3147 = vmatprep.subr.mxu0 %v2870
        %3148 = vmatpush1.msra.mxu0 %v2869
        %3149 = vmatprep.subr.mxu0 %v2874
        %3150 = vmatpush1.msra.mxu0 %v2873
        %3151 = vmatprep.subr.mxu0 %v2878
        %3152 = vmatpush1.msra.mxu0 %v2877
        %3153 = vmatprep.subr.mxu0 %v2882
        %3154 = vmatpush1.msra.mxu0 %v2881
        %3155 = vmatprep.subr.mxu0 %v2886
        %3156 = vmatpush1.msra.mxu0 %v2885
        %3157 = vmatprep.subr.mxu0 %v2890
        %3158 = vmatpush1.msra.mxu0 %v2889
        %3159 = vmatprep.subr.mxu0 %v2894
        %3160 = vmatpush1.msra.mxu0 %v2893
        %3161 = vmatprep.subr.mxu0 %v2898
        %3162 = vmatpush1.msra.mxu0 %v2897
        %3163 = vmatprep.subr.mxu0 %v2902
        %3164 = vmatpush1.msra.mxu0 %v2901
        %3165 = vmatprep.subr.mxu0 %v2906
        %3166 = vmatpush1.msra.mxu0 %v2905
        %3167 = vmatprep.subr.mxu0 %v2910
        %3168 = vmatpush1.msra.mxu0 %v2909
        %3169 = vmatprep.subr.mxu0 %v2914
        %3170 = vmatpush1.msra.mxu0 %v2913
        %3171 = vmatprep.subr.mxu0 %v2918
        %3172 = vmatpush1.msra.mxu0 %v2917
        %3173 = vmatprep.subr.mxu0 %v2922
        %3174 = vmatpush1.msra.mxu0 %v2921
        %3175 = vmatprep.subr.mxu0 %v2926
        %3176 = vmatpush1.msra.mxu0 %v2925
        %3177 = vmatprep.subr.mxu0 %v2930
        %3178 = vmatpush1.msra.mxu0 %v2929
        %3179 = vmatprep.subr.mxu0 %v2934
        %3180 = vmatpush1.msra.mxu0 %v2933
        %3181 = vmatprep.subr.mxu0 %v2938
        %3182 = vmatpush1.msra.mxu0 %v2937
        %3183 = vmatprep.subr.mxu0 %v2942
        %3184 = vmatpush1.msra.mxu0 %v2941
        %3185 = vmatprep.subr.mxu0 %v2946
        %3186 = vmatpush1.msra.mxu0 %v2945
        %3187 = vmatprep.subr.mxu0 %v2950
        %3188 = vmatpush1.msra.mxu0 %v2949
        %3189 = vmatprep.subr.mxu0 %v2954
        %3190 = vmatpush1.msra.mxu0 %v2953
        %3191 = vmatprep.subr.mxu0 %v2958
        %3192 = vmatpush1.msra.mxu0 %v2957
        %3193 = vmatprep.subr.mxu0 %v2962
        %3194 = vmatpush1.msra.mxu0 %v2961
        %3195 = vmatprep.subr.mxu0 %v2966
        %3196 = vmatpush1.msra.mxu0 %v2965
        %3197 = vmatprep.subr.mxu0 %v2970
        %3198 = vmatpush1.msra.mxu0 %v2969
        %3199 = vmatprep.subr.mxu0 %v2974
        %3200 = vmatpush1.msra.mxu0 %v2973
        %3201 = vmatprep.subr.mxu0 %v2978
        %3202 = vmatpush1.msra.mxu0 %v2977
        %3203 = vmatprep.subr.mxu0 %v2982
        %3204 = vmatpush1.msra.mxu0 %v2981
        %3205 = vmatprep.subr.mxu0 %v2986
        %3206 = vmatpush1.msra.mxu0 %v2985
        %3207 = vmatprep.subr.mxu0 %v2990
        %3208 = vmatpush1.msra.mxu0 %v2989
        %3209 = vmatprep.subr.mxu0 %v2994
        %3210 = vmatpush1.msra.mxu0 %v2993
        %3211 = vmatprep.mubr.f32.mxu0 %v2866
        %3212 = vmatmul.mubr.f32.gmra.mrb[0].mxu0 %v2865
        %v3213 = vpop.f32.mrb[0].mxu0
        %v3214 = vadd.f32 %v3130, %v3213
        %v3215 = vpop.f32.mrb[0].mxu0
        %v3216 = vadd.f32 %v3134, %v3215
        %3217 = vdwg.mxu0
        %3218 = vmatprep.subr.mxu0 %v2998
        %3219 = vmatpush1.msra.mxu0 %v2997
        %3220 = vmatprep.subr.mxu0 %v3002
        %3221 = vmatpush1.msra.mxu0 %v3001
        %3222 = vmatprep.subr.mxu0 %v3006
        %3223 = vmatpush1.msra.mxu0 %v3005
        %3224 = vmatprep.subr.mxu0 %v3010
        %3225 = vmatpush1.msra.mxu0 %v3009
        %3226 = vmatprep.subr.mxu0 %v3014
        %3227 = vmatpush1.msra.mxu0 %v3013
        %3228 = vmatprep.subr.mxu0 %v3018
        %3229 = vmatpush1.msra.mxu0 %v3017
        %3230 = vmatprep.subr.mxu0 %v3022
        %3231 = vmatpush1.msra.mxu0 %v3021
        %3232 = vmatprep.subr.mxu0 %v3026
        %3233 = vmatpush1.msra.mxu0 %v3025
        %3234 = vmatprep.subr.mxu0 %v3030
        %3235 = vmatpush1.msra.mxu0 %v3029
        %3236 = vmatprep.subr.mxu0 %v3034
        %3237 = vmatpush1.msra.mxu0 %v3033
        %3238 = vmatprep.subr.mxu0 %v3038
        %3239 = vmatpush1.msra.mxu0 %v3037
        %3240 = vmatprep.subr.mxu0 %v3042
        %3241 = vmatpush1.msra.mxu0 %v3041
        %3242 = vmatprep.subr.mxu0 %v3046
        %3243 = vmatpush1.msra.mxu0 %v3045
        %3244 = vmatprep.subr.mxu0 %v3050
        %3245 = vmatpush1.msra.mxu0 %v3049
        %3246 = vmatprep.subr.mxu0 %v3054
        %3247 = vmatpush1.msra.mxu0 %v3053
        %3248 = vmatprep.subr.mxu0 %v3058
        %3249 = vmatpush1.msra.mxu0 %v3057
        %3250 = vmatprep.subr.mxu0 %v3062
        %3251 = vmatpush1.msra.mxu0 %v3061
        %3252 = vmatprep.subr.mxu0 %v3066
        %3253 = vmatpush1.msra.mxu0 %v3065
        %3254 = vmatprep.subr.mxu0 %v3070
        %3255 = vmatpush1.msra.mxu0 %v3069
        %3256 = vmatprep.subr.mxu0 %v3074
        %3257 = vmatpush1.msra.mxu0 %v3073
        %3258 = vmatprep.subr.mxu0 %v3078
        %3259 = vmatpush1.msra.mxu0 %v3077
        %3260 = vmatprep.subr.mxu0 %v3082
        %3261 = vmatpush1.msra.mxu0 %v3081
        %3262 = vmatprep.subr.mxu0 %v3086
        %3263 = vmatpush1.msra.mxu0 %v3085
        %3264 = vmatprep.subr.mxu0 %v3090
        %3265 = vmatpush1.msra.mxu0 %v3089
        %3266 = vmatprep.subr.mxu0 %v3094
        %3267 = vmatpush1.msra.mxu0 %v3093
        %3268 = vmatprep.subr.mxu0 %v3098
        %3269 = vmatpush1.msra.mxu0 %v3097
        %3270 = vmatprep.subr.mxu0 %v3102
        %3271 = vmatpush1.msra.mxu0 %v3101
        %3272 = vmatprep.subr.mxu0 %v3106
        %3273 = vmatpush1.msra.mxu0 %v3105
        %3274 = vmatprep.subr.mxu0 %v3110
        %3275 = vmatpush1.msra.mxu0 %v3109
        %3276 = vmatprep.subr.mxu0 %v3114
        %3277 = vmatpush1.msra.mxu0 %v3113
        %3278 = vmatprep.subr.mxu0 %v3118
        %3279 = vmatpush1.msra.mxu0 %v3117
        %3280 = vmatprep.subr.mxu0 %v3122
        %3281 = vmatpush1.msra.mxu0 %v3121
        %3282 = vmatprep.mubr.f32.mxu0 %v2868
        %3283 = vmatmul.mubr.f32.gmra.mrb[0].mxu0 %v2867
        %v3284 = vpop.f32.mrb[0].mxu0
        %v3285 = vadd.f32 %v3214, %v3284
        %v3286 = vpop.f32.mrb[0].mxu0
        %v3287 = vadd.f32 %v3216, %v3286
        %3288 = vdwg.mxu0
        %3289 = vmatprep.subr.mxu0 %v2872
        %3290 = vmatpush1.msra.mxu0 %v2871
        %3291 = vmatprep.subr.mxu0 %v2876
        %3292 = vmatpush1.msra.mxu0 %v2875
        %3293 = vmatprep.subr.mxu0 %v2880
        %3294 = vmatpush1.msra.mxu0 %v2879
        %3295 = vmatprep.subr.mxu0 %v2884
        %3296 = vmatpush1.msra.mxu0 %v2883
        %3297 = vmatprep.subr.mxu0 %v2888
        %3298 = vmatpush1.msra.mxu0 %v2887
        %3299 = vmatprep.subr.mxu0 %v2892
        %3300 = vmatpush1.msra.mxu0 %v2891
        %3301 = vmatprep.subr.mxu0 %v2896
        %3302 = vmatpush1.msra.mxu0 %v2895
        %3303 = vmatprep.subr.mxu0 %v2900
        %3304 = vmatpush1.msra.mxu0 %v2899
        %3305 = vmatprep.subr.mxu0 %v2904
        %3306 = vmatpush1.msra.mxu0 %v2903
        %3307 = vmatprep.subr.mxu0 %v2908
        %3308 = vmatpush1.msra.mxu0 %v2907
        %3309 = vmatprep.subr.mxu0 %v2912
        %3310 = vmatpush1.msra.mxu0 %v2911
        %3311 = vmatprep.subr.mxu0 %v2916
        %3312 = vmatpush1.msra.mxu0 %v2915
        %3313 = vmatprep.subr.mxu0 %v2920
        %3314 = vmatpush1.msra.mxu0 %v2919
        %3315 = vmatprep.subr.mxu0 %v2924
        %3316 = vmatpush1.msra.mxu0 %v2923
        %3317 = vmatprep.subr.mxu0 %v2928
        %3318 = vmatpush1.msra.mxu0 %v2927
        %3319 = vmatprep.subr.mxu0 %v2932
        %3320 = vmatpush1.msra.mxu0 %v2931
        %3321 = vmatprep.subr.mxu0 %v2936
        %3322 = vmatpush1.msra.mxu0 %v2935
        %3323 = vmatprep.subr.mxu0 %v2940
        %3324 = vmatpush1.msra.mxu0 %v2939
        %3325 = vmatprep.subr.mxu0 %v2944
        %3326 = vmatpush1.msra.mxu0 %v2943
        %3327 = vmatprep.subr.mxu0 %v2948
        %3328 = vmatpush1.msra.mxu0 %v2947
        %3329 = vmatprep.subr.mxu0 %v2952
        %3330 = vmatpush1.msra.mxu0 %v2951
        %3331 = vmatprep.subr.mxu0 %v2956
        %3332 = vmatpush1.msra.mxu0 %v2955
        %3333 = vmatprep.subr.mxu0 %v2960
        %3334 = vmatpush1.msra.mxu0 %v2959
        %3335 = vmatprep.subr.mxu0 %v2964
        %3336 = vmatpush1.msra.mxu0 %v2963
        %3337 = vmatprep.subr.mxu0 %v2968
        %3338 = vmatpush1.msra.mxu0 %v2967
        %3339 = vmatprep.subr.mxu0 %v2972
        %3340 = vmatpush1.msra.mxu0 %v2971
        %3341 = vmatprep.subr.mxu0 %v2976
        %3342 = vmatpush1.msra.mxu0 %v2975
        %3343 = vmatprep.subr.mxu0 %v2980
        %3344 = vmatpush1.msra.mxu0 %v2979
        %3345 = vmatprep.subr.mxu0 %v2984
        %3346 = vmatpush1.msra.mxu0 %v2983
        %3347 = vmatprep.subr.mxu0 %v2988
        %3348 = vmatpush1.msra.mxu0 %v2987
        %3349 = vmatprep.subr.mxu0 %v2992
        %3350 = vmatpush1.msra.mxu0 %v2991
        %3351 = vmatprep.subr.mxu0 %v2996
        %3352 = vmatpush1.msra.mxu0 %v2995
        %3353 = vmatprep.mubr.f32.mxu0 %v2866
        %3354 = vmatmul.mubr.f32.gmra.mrb[0].mxu0 %v2865
        %v3355 = vpop.f32.mrb[0].mxu0
        %v3356 = vadd.f32 %v3138, %v3355
        %v3357 = vpop.f32.mrb[0].mxu0
        %v3358 = vadd.f32 %v3142, %v3357
        %3359 = vdwg.mxu0
        %3360 = vmatprep.subr.mxu0 %v3000
        %3361 = vmatpush1.msra.mxu0 %v2999
        %3362 = vmatprep.subr.mxu0 %v3004
        %3363 = vmatpush1.msra.mxu0 %v3003
        %3364 = vmatprep.subr.mxu0 %v3008
        %3365 = vmatpush1.msra.mxu0 %v3007
        %3366 = vmatprep.subr.mxu0 %v3012
        %3367 = vmatpush1.msra.mxu0 %v3011
        %3368 = vmatprep.subr.mxu0 %v3016
        %3369 = vmatpush1.msra.mxu0 %v3015
        %3370 = vmatprep.subr.mxu0 %v3020
        %3371 = vmatpush1.msra.mxu0 %v3019
        %3372 = vmatprep.subr.mxu0 %v3024
        %3373 = vmatpush1.msra.mxu0 %v3023
        %3374 = vmatprep.subr.mxu0 %v3028
        %3375 = vmatpush1.msra.mxu0 %v3027
        %3376 = vmatprep.subr.mxu0 %v3032
        %3377 = vmatpush1.msra.mxu0 %v3031
        %3378 = vmatprep.subr.mxu0 %v3036
        %3379 = vmatpush1.msra.mxu0 %v3035
        %3380 = vmatprep.subr.mxu0 %v3040
        %3381 = vmatpush1.msra.mxu0 %v3039
        %3382 = vmatprep.subr.mxu0 %v3044
        %3383 = vmatpush1.msra.mxu0 %v3043
        %3384 = vmatprep.subr.mxu0 %v3048
        %3385 = vmatpush1.msra.mxu0 %v3047
        %3386 = vmatprep.subr.mxu0 %v3052
        %3387 = vmatpush1.msra.mxu0 %v3051
        %3388 = vmatprep.subr.mxu0 %v3056
        %3389 = vmatpush1.msra.mxu0 %v3055
        %3390 = vmatprep.subr.mxu0 %v3060
        %3391 = vmatpush1.msra.mxu0 %v3059
        %3392 = vmatprep.subr.mxu0 %v3064
        %3393 = vmatpush1.msra.mxu0 %v3063
        %3394 = vmatprep.subr.mxu0 %v3068
        %3395 = vmatpush1.msra.mxu0 %v3067
        %3396 = vmatprep.subr.mxu0 %v3072
        %3397 = vmatpush1.msra.mxu0 %v3071
        %3398 = vmatprep.subr.mxu0 %v3076
        %3399 = vmatpush1.msra.mxu0 %v3075
        %3400 = vmatprep.subr.mxu0 %v3080
        %3401 = vmatpush1.msra.mxu0 %v3079
        %3402 = vmatprep.subr.mxu0 %v3084
        %3403 = vmatpush1.msra.mxu0 %v3083
        %3404 = vmatprep.subr.mxu0 %v3088
        %3405 = vmatpush1.msra.mxu0 %v3087
        %3406 = vmatprep.subr.mxu0 %v3092
        %3407 = vmatpush1.msra.mxu0 %v3091
        %3408 = vmatprep.subr.mxu0 %v3096
        %3409 = vmatpush1.msra.mxu0 %v3095
        %3410 = vmatprep.subr.mxu0 %v3100
        %3411 = vmatpush1.msra.mxu0 %v3099
        %3412 = vmatprep.subr.mxu0 %v3104
        %3413 = vmatpush1.msra.mxu0 %v3103
        %3414 = vmatprep.subr.mxu0 %v3108
        %3415 = vmatpush1.msra.mxu0 %v3107
        %3416 = vmatprep.subr.mxu0 %v3112
        %3417 = vmatpush1.msra.mxu0 %v3111
        %3418 = vmatprep.subr.mxu0 %v3116
        %3419 = vmatpush1.msra.mxu0 %v3115
        %3420 = vmatprep.subr.mxu0 %v3120
        %3421 = vmatpush1.msra.mxu0 %v3119
        %3422 = vmatprep.subr.mxu0 %v3124
        %3423 = vmatpush1.msra.mxu0 %v3123
        %3424 = vmatprep.mubr.f32.mxu0 %v2868
        %3425 = vmatmul.mubr.f32.gmra.mrb[0].mxu0 %v2867
        %v3426 = vpop.f32.mrb[0].mxu0
        %v3427 = vadd.f32 %v3356, %v3426
        %v3428 = vpop.f32.mrb[0].mxu0
        %v3429 = vadd.f32 %v3358, %v3428
        %3430 = vdwg.mxu0
        %v3431 = vmax.f32 %v3285, 0.0
        %v3432 = vmax.f32 %v3287, 0.0
        %v3433 = vmax.f32 %v3427, 0.0
        %v3434 = vmax.f32 %v3429, 0.0
        %v3435 = vmul.f32 %v3431, %v2083
        %v3436 = vmul.f32 %v3432, %v2087
        %v3437 = vmul.f32 %v3433, %v2091
        %v3438 = vmul.f32 %v3434, %v2095
        %v3439 = vadd.f32 %v3435, %v3436
        %v3440 = vadd.f32 %v3439, %v3437
        %v3441 = vadd.f32 %v3440, %v3438
        %3442 = vadd.xlane.f32.xlu0 %v3441
        %v3443 = vpop.xlane.xlu0 %3442
        %v3445 = vlaneseq
        %v3446 = vshrl.u32 %v3445, 7
        %v3447 = vsub.s32 0, %v3446
        %v3448 = vrot.slane %v737, %v3447
        %v3450 = vadd.f32 %v3443, %v3448
        %vm3451 = vcmask 7168
        %v3452 = vsel %vm3451, %v3450, -inf
        %3453 = vmax.xlane.f32.xlu0 %v3452
        %v3454 = vpop.xlane.xlu0 %3453
        %v3455 = vrot.slane %v3454, 4
        %v3456 = vmax.f32 %v3454, %v3455
        %v3457 = vrot.slane %v3456, 2
        %v3458 = vmax.f32 %v3456, %v3457
        %v3459 = vrot.slane %v3458, 1
        %v3460 = vmax.f32 %v3458, %v3459
        %s3461 = vtos %v3460
        %v3462 = vstv %s3461
        %v3463 = vld [vmem:[#allocation3] sm:$0x1]
        %v3464 = vmax.f32 %v3463, %v3462
        %v3465 = vld [vmem:[#allocation4] sm:$0x1]
        %v3466 = vsub.f32 %v3463, %v3464
        %v3467 = vmul.f32 %v3466, 1.442695
        %v3468 = vpow.pop %v3467
        %v3469 = vmul.f32 %v3465, %v3468
        %v3471 = vlaneseq
        %v3472 = vshrl.u32 %v3471, 7
        %v3473 = vsub.s32 0, %v3472
        %v3474 = vrot.slane %v3464, %v3473
        %v3476 = vsub.f32 %v3450, %v3474
        %v3477 = vmul.f32 %v3476, 1.442695
        %v3478 = vpow.pop %v3477
        %v3479 = vsel %vm3451, %v3478, 0.0
        %3480 = vadd.xlane.f32.xlu0 %v3479
        %v3481 = vpop.xlane.xlu0 %3480
        %v3482 = vrot.slane %v3481, 4
        %v3483 = vadd.f32 %v3481, %v3482
        %v3484 = vrot.slane %v3483, 2
        %v3485 = vadd.f32 %v3483, %v3484
        %v3486 = vrot.slane %v3485, 1
        %v3487 = vadd.f32 %v3485, %v3486
        %s3488 = vtos %v3487
        %v3489 = vstv %s3488
        %v3490 = vadd.f32 %v3469, %v3489
        %3491 = vst.msk [vmem:[#allocation4] sm:$0x1] %vm2117, %v3490
        %3492 = vst.msk [vmem:[#allocation3] sm:$0x1] %vm2117, %v3464
        // Predicated region
        $region81: #{tpu_custom_call.1} parent=67 // pred_check
          %p3493 = pneg %p577
        $region82: #{tpu_custom_call.1} parent=67 // pred_check_branch
          %3495 = sbr.rel (%p3493) target = $region84
        $region83: #{tpu_custom_call.1} parent=67 // pred_region
          %v3496 = vld [vmem:[#allocation2] sm:$0x1]
          %3497 = vst.msk [vmem:[%s570] sm:$0x1] %vm2117, %v3496
          %v3498 = vld [vmem:[#allocation3] sm:$0x1]
          %3499 = vst.msk [vmem:[%s573] sm:$0x1] %vm2117, %v3498
          %v3500 = vld [vmem:[#allocation4] sm:$0x1]
          %3501 = vst.msk [vmem:[%s576] sm:$0x1] %vm2117, %v3500
        $region84: #{tpu_custom_call.1} parent=67 // pred_fallthru
          _
        %p3502 = scmp.lt.s32.totalorder %s34, 1
        %s3503 = scalar_select %p3502, %s34, 1
        %s3504 = scalar_lea.vmem %s12, %s3503
        %p3505 = scmp.lt.s32.totalorder %s34, 1
        %s3506 = scalar_select %p3505, %s34, 1
        %s3507 = scalar_lea.vmem %s13, %s3506
        %p3508 = scmp.lt.s32.totalorder %s34, 1
        %s3509 = scalar_select %p3508, %s34, 1
        %s3510 = scalar_lea.vmem %s14, %s3509
        // Predicated region
        $region85: #{tpu_custom_call.1} parent=67 // pred_check
          %p3511 = pneg %p333
        $region86: #{tpu_custom_call.1} parent=67 // pred_check_branch
          %3513 = sbr.rel (%p3511) target = $region88
        $region87: #{tpu_custom_call.1} parent=67 // pred_region
          _
        $region88: #{tpu_custom_call.1} parent=67 // pred_fallthru
          _
        // Predicated region
        $region89: #{tpu_custom_call.1} parent=67 // pred_check
          %p3514 = pneg %p359
        $region90: #{tpu_custom_call.1} parent=67 // pred_check_branch
          %3516 = sbr.rel (%p3514) target = $region92
        $region91: #{tpu_custom_call.1} parent=67 // pred_region
          _
        $region92: #{tpu_custom_call.1} parent=67 // pred_fallthru
          _
        // Predicated region
        $region93: #{tpu_custom_call.1} parent=67 // pred_check
          %p3517 = pneg %p385
        $region94: #{tpu_custom_call.1} parent=67 // pred_check_branch
          %3519 = sbr.rel (%p3517) target = $region96
        $region95: #{tpu_custom_call.1} parent=67 // pred_region
          _
        $region96: #{tpu_custom_call.1} parent=67 // pred_fallthru
          _
      $region68: #{tpu_custom_call.1} parent=5 // pred_fallthru
        _
      %p3520 = scmp.le.s32.totalorder 2, %s25
      // Predicated region
      $region97: #{tpu_custom_call.1} parent=5 // pred_check
        %p3521 = pneg %p3520
      $region98: #{tpu_custom_call.1} parent=5 // pred_check_branch
        %3523 = sbr.rel (%p3521) target = $region100
      $region99: #{tpu_custom_call.1} parent=5 // pred_region
        %s3524 = ssub.s32 %s25, 2
        // Predicated region
        $region101: #{tpu_custom_call.1} parent=99 // pred_check
          %p3525 = pneg %p339
        $region102: #{tpu_custom_call.1} parent=99 // pred_check_branch
          %3527 = sbr.rel (%p3525) target = $region104
        $region103: #{tpu_custom_call.1} parent=99 // pred_region
          %p3528 = scmp.lt.s32.totalorder %s36, 1
          %s3529 = scalar_select %p3528, %s36, 1
          %s3530 = scalar_lea.vmem %s12, %s3529
        $region104: #{tpu_custom_call.1} parent=99 // pred_fallthru
          _
        // Predicated region
        $region105: #{tpu_custom_call.1} parent=99 // pred_check
          %p3531 = pneg %p365
        $region106: #{tpu_custom_call.1} parent=99 // pred_check_branch
          %3533 = sbr.rel (%p3531) target = $region108
        $region107: #{tpu_custom_call.1} parent=99 // pred_region
          %p3534 = scmp.lt.s32.totalorder %s36, 1
          %s3535 = scalar_select %p3534, %s36, 1
          %s3536 = scalar_lea.vmem %s13, %s3535
        $region108: #{tpu_custom_call.1} parent=99 // pred_fallthru
          _
        // Predicated region
        $region109: #{tpu_custom_call.1} parent=99 // pred_check
          %p3537 = pneg %p391
        $region110: #{tpu_custom_call.1} parent=99 // pred_check_branch
          %3539 = sbr.rel (%p3537) target = $region112
        $region111: #{tpu_custom_call.1} parent=99 // pred_region
          %p3540 = scmp.lt.s32.totalorder %s36, 1
          %s3541 = scalar_select %p3540, %s36, 1
          %s3542 = scalar_lea.vmem %s14, %s3541
        $region112: #{tpu_custom_call.1} parent=99 // pred_fallthru
          _
      $region100: #{tpu_custom_call.1} parent=5 // pred_fallthru
        _
    $region6: #{tpu_custom_call.1} parent=1 // loop_footer
      %s29 = sadd.s32 1, %s25
    $region7: #{tpu_custom_call.1} parent=1 // loop_footer_branch
      %24 = sbr.rel target = $region3
    $region8: #{tpu_custom_call.1} parent=1 // loop_exit
      _
    %3543 = vsyncpa [#allocation7], 1
    %s3544 = scalar_lea.sflag [#allocation7], 1
    %3545 = vsyncpa %s3544, 1
    %3546 = vsyncpa [#allocation9], 1

</llo_original>
